<compile_context>
chip_gen: v5e
topology: v5e:2x2
jax: 0.10.0
libtpu: 0.0.40
codegen_flags: <defaults>
</compile_context>

<pallas_src>
import functools

import jax
import jax.numpy as jnp
from jax.experimental import pallas as pl
from jax.experimental.pallas import tpu as pltpu

# -----------------------------------------------------------------------------
# Model hyper-parameters (consistent with the PyTorch module's forward).
# -----------------------------------------------------------------------------
CHANNELS = 4
LATENT_DIM = 32
IMG_SIZE = 16
BATCH = 2
K = 4          # conv kernel size
STRIDE = 2
PAD = 1

_COMPILER_PARAMS = pltpu.CompilerParams(dimension_semantics=("arbitrary",))


# -----------------------------------------------------------------------------
# Pallas kernels
# -----------------------------------------------------------------------------
def _linear_kernel(a_ref, w_ref, b_ref, o_ref, *, act):
    """o = act(a @ w + b). a:(M,K) w:(K,N) b:(1,N) o:(M,N). MXU matmul + VPU/EUP."""
    acc = jnp.dot(a_ref[...], w_ref[...], preferred_element_type=jnp.float32)
    acc = acc + b_ref[...]
    if act == "relu":
        acc = jnp.maximum(acc, 0.0)
    elif act == "sigmoid":
        acc = jax.nn.sigmoid(acc)
    o_ref[...] = acc.astype(o_ref.dtype)


def pallas_linear(a, w, b2d, act="none"):
    """act(a @ w + b) as a single-block, VMEM-resident Pallas call."""
    m, kd = a.shape
    n = w.shape[1]
    cost = pl.CostEstimate(
        flops=int(2 * m * kd * n),
        transcendentals=int(m * n) if act == "sigmoid" else 0,
        bytes_accessed=int(4 * (m * kd + kd * n + n + m * n)),
    )
    return pl.pallas_call(
        functools.partial(_linear_kernel, act=act),
        out_shape=jax.ShapeDtypeStruct((m, n), jnp.float32),
        grid=(1,),
        in_specs=[
            pl.BlockSpec((m, kd), lambda i: (0, 0)),
            pl.BlockSpec((kd, n), lambda i: (0, 0)),
            pl.BlockSpec((1, n), lambda i: (0, 0)),
        ],
        out_specs=pl.BlockSpec((m, n), lambda i: (0, 0)),
        compiler_params=_COMPILER_PARAMS,
        cost_estimate=cost,
    )(a, w, b2d)


def _fused_middle_kernel(cols3_ref, eps_ref,
                         w3_ref, b3_ref, w4_ref, b4_ref,
                         wmu_ref, bmu_ref, wlv_ref, blv_ref,
                         wdec_ref, bdec_ref, wt1_ref, bt1_ref,
                         mu_ref, logvar_ref, t1_ref):
    """conv3 -> conv4 -> fc_mu/fc_logvar -> reparameterize -> dec_fc -> convT1.

    cols3 rows are ordered (h, w, n) so each of the 4 spatial positions of the
    2x2 conv3 output is a contiguous BATCH-row block (plain static ref slices).
    conv4 has a 1x1 output whose border taps hit zero padding, so only the
    center 2x2 of its kernel contributes -> a per-position 128x256 matmul.
    convT1 acts on a 1x1 input, so it is a 256 -> 4*128 matmul whose output
    channel order is (oh, ow, co).
    """
    f32 = jnp.float32
    cin4 = 128  # conv4 input channels (= conv3 output channels)

    acc4 = b4_ref[...]                                        # (1, 256), broadcasts
    for hw in range(4):                                       # (h, w) of conv3 output
        cols = cols3_ref[pl.ds(hw * BATCH, BATCH), :]         # (B, 16*64)
        h3 = jnp.dot(cols, w3_ref[...], preferred_element_type=f32) + b3_ref[...]
        h3 = jnp.maximum(h3, 0.0)                             # (B, 128)
        acc4 = acc4 + jnp.dot(h3, w4_ref[pl.ds(hw * cin4, cin4), :],
                              preferred_element_type=f32)
    h4 = jnp.maximum(acc4, 0.0)                               # (B, 256)

    mu = jnp.dot(h4, wmu_ref[...], preferred_element_type=f32) + bmu_ref[...]
    logvar = jnp.dot(h4, wlv_ref[...], preferred_element_type=f32) + blv_ref[...]
    # reparameterize: z = mu + eps * exp(0.5 * logvar)
    z = mu + eps_ref[...] * jnp.exp(0.5 * logvar)

    d = jnp.dot(z, wdec_ref[...], preferred_element_type=f32) + bdec_ref[...]
    d = jnp.maximum(d, 0.0)                                   # (B, 256)
    t1 = jnp.dot(d, wt1_ref[...], preferred_element_type=f32) + bt1_ref[...]
    t1 = jnp.maximum(t1, 0.0)                                 # (B, 512) = convT1 out

    mu_ref[...] = mu
    logvar_ref[...] = logvar
    t1_ref[...] = t1


def fused_middle(cols3, eps, p):
    args = (cols3, eps,
            p["w3m"], p["b3m"], p["w4c"], p["b4m"],
            p["wmum"], p["bmum"], p["wlvm"], p["blvm"],
            p["wdecm"], p["bdecm"], p["wt1m"], p["bt1m"])
    in_specs = [pl.BlockSpec(a.shape, lambda i: (0, 0)) for a in args]
    out_shape = (
        jax.ShapeDtypeStruct((BATCH, LATENT_DIM), jnp.float32),
        jax.ShapeDtypeStruct((BATCH, LATENT_DIM), jnp.float32),
        jax.ShapeDtypeStruct((BATCH, 4 * 128), jnp.float32),
    )
    out_specs = tuple(pl.BlockSpec(s.shape, lambda i: (0, 0)) for s in out_shape)
    flops = 2 * (8 * 1024 * 128 + 4 * BATCH * 128 * 256
                 + 2 * BATCH * 256 * LATENT_DIM
                 + BATCH * LATENT_DIM * 256 + BATCH * 256 * 512)
    out_elems = 2 * BATCH * LATENT_DIM + BATCH * 512
    bytes_acc = 4 * (sum(int(a.size) for a in args) + out_elems)
    cost = pl.CostEstimate(flops=int(flops),
                           transcendentals=int(BATCH * LATENT_DIM),
                           bytes_accessed=int(bytes_acc))
    return pl.pallas_call(
        _fused_middle_kernel,
        out_shape=out_shape,
        grid=(1,),
        in_specs=in_specs,
        out_specs=out_specs,
        compiler_params=_COMPILER_PARAMS,
        cost_estimate=cost,
    )(*args)


# -----------------------------------------------------------------------------
# Plain-JAX wrapper glue (NHWC, minimal): im2col via space-to-depth, sub-pixel
# interleave for the transposed convs.
# -----------------------------------------------------------------------------
def im2col_s2d(x):
    """x: (N,H,W,C) -> (N, H/2, W/2, 16*C) im2col for Conv2d(k=4, s=2, p=1).

    A k=4/s=2/p=1 conv equals a k=2/s=1 conv over 2x2 blocks of the padded
    input. Result channel order is (dh, dw, ph, pw, c) with kernel tap
    (kh, kw) = (2*dh + ph, 2*dw + pw)  -- matches conv_w_mat()."""
    n, h, w, c = x.shape
    ho, wo = h // 2, w // 2
    xp = jnp.pad(x, ((0, 0), (1, 1), (1, 1), (0, 0)))                 # (n, h+2, w+2, c)
    x2 = xp.reshape(n, ho + 1, 2, wo + 1, 2, c)
    x2 = jnp.transpose(x2, (0, 1, 3, 2, 4, 5)).reshape(n, ho + 1, wo + 1, 4 * c)
    taps = [x2[:, dh:dh + ho, dw:dw + wo, :] for dh in (0, 1) for dw in (0, 1)]
    return jnp.concatenate(taps, axis=-1)                             # (n, ho, wo, 16c)


def conv2d(x, w_mat, b2d, act):
    """PyTorch Conv2d(k=4, s=2, p=1) in NHWC via im2col + Pallas matmul."""
    n, h, w, _ = x.shape
    ho, wo = h // 2, w // 2
    cout = w_mat.shape[1]
    cols = im2col_s2d(x).reshape(n * ho * wo, w_mat.shape[0])
    y = pallas_linear(cols, w_mat, b2d, act)                          # (n*ho*wo, cout)
    return y.reshape(n, ho, wo, cout)


def conv_transpose2d(x, w_all, b_all, act):
    """PyTorch ConvTranspose2d(k=4, s=2, p=1) in NHWC via sub-pixel decomposition.

    All 4 output parities (rh, rw) are computed with ONE k=2/s=1 conv over the
    padded input: cols[(s,t)] @ w_all, where w_all's column block (rh, rw) holds
    the kernel taps kh = {3,1} (rh=0) / {2,0} (rh=1) (same for kw). The parity
    blocks are then interleaved back to full spatial resolution."""
    n, h, w, cin = x.shape
    cout = w_all.shape[1] // 4
    xp = jnp.pad(x, ((0, 0), (1, 1), (1, 1), (0, 0)))                 # (n, h+2, w+2, cin)
    taps = [xp[:, dh:dh + h + 1, dw:dw + w + 1, :] for dh in (0, 1) for dw in (0, 1)]
    cols = jnp.concatenate(taps, axis=-1)                             # (n, h+1, w+1, 4cin)
    y = pallas_linear(cols.reshape(n * (h + 1) * (w + 1), 4 * cin), w_all, b_all, act)
    y = y.reshape(n, h + 1, w + 1, 4, cout)
    # parity (rh, rw) output at block (a, b) uses window start (a+rh, b+rw)
    subs = [y[:, rh:rh + h, rw:rw + w, 2 * rh + rw, :] for rh in (0, 1) for rw in (0, 1)]
    s = jnp.stack(subs, axis=0).reshape(2, 2, n, h, w, cout)          # (rh, rw, n, h, w, c)
    return jnp.transpose(s, (2, 3, 0, 4, 1, 5)).reshape(n, 2 * h, 2 * w, cout)


# -----------------------------------------------------------------------------
# One-time weight packing: PyTorch layouts -> matmul-ready matrices.
# -----------------------------------------------------------------------------
def conv_w_mat(w):
    """Conv2d weight (Cout, Cin, 4, 4) -> (16*Cin, Cout), rows (dh, dw, ph, pw, ci)."""
    cout, cin = w.shape[0], w.shape[1]
    w6 = w.reshape(cout, cin, 2, 2, 2, 2)          # (co, ci, dh, ph, dw, pw)
    w6 = jnp.transpose(w6, (2, 4, 3, 5, 1, 0))     # (dh, dw, ph, pw, ci, co)
    return w6.reshape(16 * cin, cout)


def conv4_center_w_mat(w):
    """Conv2d weight (Cout, Cin, 4, 4) -> (4*Cin, Cout) using only the center 2x2
    taps (conv4's 1x1 output only sees them; border taps hit zero padding)."""
    cout, cin = w.shape[0], w.shape[1]
    wc = w[:, :, 1:3, 1:3]                         # (co, ci, h, w)
    wc = jnp.transpose(wc, (2, 3, 1, 0))           # (h, w, ci, co)
    return wc.reshape(4 * cin, cout)


def convT1_center_w_mat(w):
    """ConvTranspose2d weight (Cin, Cout, 4, 4) -> (Cin, 4*Cout) for a 1x1 input;
    output column order is (oh, ow, co) with kernel tap (oh+1, ow+1)."""
    cin, cout = w.shape[0], w.shape[1]
    wc = w[:, :, 1:3, 1:3]                         # (ci, co, oh, ow)
    wc = jnp.transpose(wc, (0, 2, 3, 1))           # (ci, oh, ow, co)
    return wc.reshape(cin, 4 * cout)


def convT_w_mat(w):
    """ConvTranspose2d weight (Cin, Cout, 4, 4) -> (4*Cin, 4*Cout).

    Rows: (dh, dw, ci); column block (rh, rw) uses kernel taps
    kh = kmap[rh][dh], kw = kmap[rw][dw] with kmap = [[3,1],[2,0]]."""
    kmap = ((3, 1), (2, 0))
    col_blocks = []
    for rh in (0, 1):
        for rw in (0, 1):
            row_blocks = []
            for dh in (0, 1):
                for dw in (0, 1):
                    row_blocks.append(w[:, :, kmap[rh][dh], kmap[rw][dw]])  # (Cin, Cout)
            col_blocks.append(jnp.concatenate(row_blocks, axis=0))          # (4Cin, Cout)
    return jnp.concatenate(col_blocks, axis=1)                              # (4Cin, 4Cout)


def prepare_params(p):
    b2d = lambda b: b.reshape(1, -1)
    t4 = lambda b: jnp.tile(b, 4).reshape(1, -1)
    return {
        "w1m": conv_w_mat(p["enc_conv1_w"]), "b1m": b2d(p["enc_conv1_b"]),
        "w2m": conv_w_mat(p["enc_conv2_w"]), "b2m": b2d(p["enc_conv2_b"]),
        "w3m": conv_w_mat(p["enc_conv3_w"]), "b3m": b2d(p["enc_conv3_b"]),
        "w4c": conv4_center_w_mat(p["enc_conv4_w"]), "b4m": b2d(p["enc_conv4_b"]),
        "wmum": p["enc_fc_mu_w"], "bmum": b2d(p["enc_fc_mu_b"]),
        "wlvm": p["enc_fc_lv_w"], "blvm": b2d(p["enc_fc_lv_b"]),
        "wdecm": p["dec_fc_w"], "bdecm": b2d(p["dec_fc_b"]),
        "wt1m": convT1_center_w_mat(p["dec_convT1_w"]), "bt1m": t4(p["dec_convT1_b"]),
        "wt2m": convT_w_mat(p["dec_convT2_w"]), "bt2m": t4(p["dec_convT2_b"]),
        "wt3m": convT_w_mat(p["dec_convT3_w"]), "bt3m": t4(p["dec_convT3_b"]),
        "wt4m": convT_w_mat(p["dec_convT4_w"]), "bt4m": t4(p["dec_convT4_b"]),
    }


# -----------------------------------------------------------------------------
# Deterministic parameter init (synthetic weights, PyTorch-layout shapes).
# -----------------------------------------------------------------------------
def init_params(key):
    conv_out = 256 * (IMG_SIZE // 16) * (IMG_SIZE // 16)
    shapes = {
        "enc_conv1_w": (32, CHANNELS, K, K),   "enc_conv1_b": (32,),
        "enc_conv2_w": (64, 32, K, K),          "enc_conv2_b": (64,),
        "enc_conv3_w": (128, 64, K, K),         "enc_conv3_b": (128,),
        "enc_conv4_w": (256, 128, K, K),        "enc_conv4_b": (256,),
        "enc_fc_mu_w": (conv_out, LATENT_DIM),  "enc_fc_mu_b": (LATENT_DIM,),
        "enc_fc_lv_w": (conv_out, LATENT_DIM),  "enc_fc_lv_b": (LATENT_DIM,),
        "dec_fc_w": (LATENT_DIM, conv_out),     "dec_fc_b": (conv_out,),
        # ConvTranspose2d weights are (in_channels, out_channels, k, k)
        "dec_convT1_w": (256, 128, K, K),       "dec_convT1_b": (128,),
        "dec_convT2_w": (128, 64, K, K),        "dec_convT2_b": (64,),
        "dec_convT3_w": (64, 32, K, K),         "dec_convT3_b": (32,),
        "dec_convT4_w": (32, CHANNELS, K, K),   "dec_convT4_b": (CHANNELS,),
    }
    params = {}
    keys = jax.random.split(key, len(shapes))
    for (name, shape), k_ in zip(shapes.items(), keys):
        params[name] = (0.05 * jax.random.normal(k_, shape)).astype(jnp.float32)
    return params


# -----------------------------------------------------------------------------
# ConvVAE forward (reconstruction, mu, logvar)
# -----------------------------------------------------------------------------
def conv_vae_forward(prep, x_nchw, eps):
    x = jnp.transpose(x_nchw, (0, 2, 3, 1))                       # NHWC (boundary only)

    # ---- encode ----
    h1 = conv2d(x, prep["w1m"], prep["b1m"], "relu")              # (B, 8, 8, 32)
    h2 = conv2d(h1, prep["w2m"], prep["b2m"], "relu")             # (B, 4, 4, 64)
    # conv3 im2col, rows ordered (h, w, n) for the fused kernel's static slices
    c3 = im2col_s2d(h2)                                           # (B, 2, 2, 1024)
    c3 = jnp.transpose(c3, (1, 2, 0, 3)).reshape(2 * 2 * BATCH, 16 * 64)

    # ---- conv3 + conv4 + fc heads + reparameterize + dec_fc + convT1 (fused) ----
    mu, logvar, t1 = fused_middle(c3, eps, prep)

    # ---- decode ----
    d1 = t1.reshape(BATCH, 2, 2, 128)                             # convT1 out, NHWC
    d2 = conv_transpose2d(d1, prep["wt2m"], prep["bt2m"], "relu")        # (B, 4, 4, 64)
    d3 = conv_transpose2d(d2, prep["wt3m"], prep["bt3m"], "relu")        # (B, 8, 8, 32)
    recon = conv_transpose2d(d3, prep["wt4m"], prep["bt4m"], "sigmoid")  # (B,16,16,4)

    return jnp.transpose(recon, (0, 3, 1, 2)), mu, logvar         # back to NCHW


if __name__ == "__main__":
    key = jax.random.PRNGKey(0)
    k_param, k_x, k_eps = jax.random.split(key, 3)
    raw_params = init_params(k_param)
    prep = prepare_params(raw_params)   # one-time weight packing (matmul-ready layouts)

    x = jax.random.normal(k_x, (BATCH, CHANNELS, IMG_SIZE, IMG_SIZE), dtype=jnp.float32)
    # TODO(synk): torch.randn_like in reparameterize -> eps supplied externally
    # (deterministic); could instead use pltpu.prng_seed/prng_random_bits in-kernel.
    eps = jax.random.normal(k_eps, (BATCH, LATENT_DIM), dtype=jnp.float32)

    fwd = jax.jit(conv_vae_forward)
    recon, mu, logvar = fwd(prep, x, eps)
    jax.block_until_ready((recon, mu, logvar))

    assert recon.shape == (BATCH, CHANNELS, IMG_SIZE, IMG_SIZE)
    assert mu.shape == (BATCH, LATENT_DIM) and logvar.shape == (BATCH, LATENT_DIM)
    assert bool(jnp.all(jnp.isfinite(recon)))
    print("KERNEL_OK")
</pallas_src>

<mosaic_0001>
module attributes {stable_mosaic.version = 11 : i64} {
  func.func @_linear_kernel(%arg0: i32, %arg1: memref<128x64xf32, #tpu.memory_space<vmem>>, %arg2: memref<64x32xf32, #tpu.memory_space<vmem>>, %arg3: memref<1x32xf32, #tpu.memory_space<vmem>>, %arg4: memref<128x32xf32, #tpu.memory_space<vmem>>) attributes {dimension_semantics = [#tpu.dimension_semantics<arbitrary>], iteration_bounds = array<i64: 1>, scalar_prefetch = 0 : i64, scratch_operands = 0 : i64, tpu.core_type = #tpu.core_type<tc>, window_params = [{pipeline_mode = #tpu.pipeline_mode<synchronous>, transform_indices = @transform_0, window_bounds = array<i64: 128, 64>}, {pipeline_mode = #tpu.pipeline_mode<synchronous>, transform_indices = @transform_1, window_bounds = array<i64: 64, 32>}, {pipeline_mode = #tpu.pipeline_mode<synchronous>, transform_indices = @transform_2, window_bounds = array<i64: 1, 32>}, {pipeline_mode = #tpu.pipeline_mode<synchronous>, transform_indices = @transform_3, window_bounds = array<i64: 128, 32>}]} {
    %c0 = arith.constant 0 : index
    %c0_0 = arith.constant 0 : index
    %0 = vector.load %arg1[%c0, %c0_0] : memref<128x64xf32, #tpu.memory_space<vmem>>, vector<128x64xf32>
    %c0_1 = arith.constant 0 : index
    %c0_2 = arith.constant 0 : index
    %1 = vector.load %arg2[%c0_1, %c0_2] : memref<64x32xf32, #tpu.memory_space<vmem>>, vector<64x32xf32>
    %cst = arith.constant dense<0.000000e+00> : vector<128x32xf32>
    %2 = tpu.matmul %0, %1, %cst {dimension_numbers = #tpu.dot_dimension_numbers<[1], [0], [0], [1], [0, 0, 1, 1], [], []>} : vector<128x64xf32>, vector<64x32xf32>, vector<128x32xf32> -> vector<128x32xf32>
    %c0_3 = arith.constant 0 : index
    %c0_4 = arith.constant 0 : index
    %3 = vector.load %arg3[%c0_3, %c0_4] : memref<1x32xf32, #tpu.memory_space<vmem>>, vector<1x32xf32>
    %4 = vector.broadcast %3 : vector<1x32xf32> to vector<128x32xf32>
    %5 = arith.addf %2, %4 : vector<128x32xf32>
    %cst_5 = arith.constant 0.000000e+00 : f32
    %6 = vector.broadcast %cst_5 : f32 to vector<128x32xf32>
    %7 = arith.maximumf %5, %6 : vector<128x32xf32>
    %c0_6 = arith.constant 0 : index
    %c0_7 = arith.constant 0 : index
    %8 = vector.load %arg4[%c0_6, %c0_7] : memref<128x32xf32, #tpu.memory_space<vmem>>, vector<128x32xf32>
    tpu.vector_store %arg4[%c0_6, %c0_7], %7 {strides = array<i32>} : memref<128x32xf32, #tpu.memory_space<vmem>>, vector<128x32xf32>,
    return
  }
  func.func @transform_0(%arg0: i32) -> (i32, i32) {
    %c0_i32 = arith.constant 0 : i32
    %c0_i32_0 = arith.constant 0 : i32
    %c0_i32_1 = arith.constant 0 : i32
    return %c0_i32, %c0_i32_0 : i32, i32
  }
  func.func @transform_1(%arg0: i32) -> (i32, i32) {
    %c0_i32 = arith.constant 0 : i32
    %c0_i32_0 = arith.constant 0 : i32
    %c0_i32_1 = arith.constant 0 : i32
    return %c0_i32, %c0_i32_0 : i32, i32
  }
  func.func @transform_2(%arg0: i32) -> (i32, i32) {
    %c0_i32 = arith.constant 0 : i32
    %c0_i32_0 = arith.constant 0 : i32
    %c0_i32_1 = arith.constant 0 : i32
    return %c0_i32, %c0_i32_0 : i32, i32
  }
  func.func @transform_3(%arg0: i32) -> (i32, i32) {
    %c0_i32 = arith.constant 0 : i32
    %c0_i32_0 = arith.constant 0 : i32
    %c0_i32_1 = arith.constant 0 : i32
    return %c0_i32, %c0_i32_0 : i32, i32
  }
}

module attributes {stable_mosaic.version = 11 : i64} {
  func.func @_linear_kernel(%arg0: i32, %arg1: memref<32x512xf32, #tpu.memory_space<vmem>>, %arg2: memref<512x64xf32, #tpu.memory_space<vmem>>, %arg3: memref<1x64xf32, #tpu.memory_space<vmem>>, %arg4: memref<32x64xf32, #tpu.memory_space<vmem>>) attributes {dimension_semantics = [#tpu.dimension_semantics<arbitrary>], iteration_bounds = array<i64: 1>, scalar_prefetch = 0 : i64, scratch_operands = 0 : i64, tpu.core_type = #tpu.core_type<tc>, window_params = [{pipeline_mode = #tpu.pipeline_mode<synchronous>, transform_indices = @transform_0, window_bounds = array<i64: 32, 512>}, {pipeline_mode = #tpu.pipeline_mode<synchronous>, transform_indices = @transform_1, window_bounds = array<i64: 512, 64>}, {pipeline_mode = #tpu.pipeline_mode<synchronous>, transform_indices = @transform_2, window_bounds = array<i64: 1, 64>}, {pipeline_mode = #tpu.pipeline_mode<synchronous>, transform_indices = @transform_3, window_bounds = array<i64: 32, 64>}]} {
    %c0 = arith.constant 0 : index
    %c0_0 = arith.constant 0 : index
    %0 = vector.load %arg1[%c0, %c0_0] : memref<32x512xf32, #tpu.memory_space<vmem>>, vector<32x512xf32>
    %c0_1 = arith.constant 0 : index
    %c0_2 = arith.constant 0 : index
    %1 = vector.load %arg2[%c0_1, %c0_2] : memref<512x64xf32, #tpu.memory_space<vmem>>, vector<512x64xf32>
    %cst = arith.constant dense<0.000000e+00> : vector<32x64xf32>
    %2 = tpu.matmul %0, %1, %cst {dimension_numbers = #tpu.dot_dimension_numbers<[1], [0], [0], [1], [0, 0, 1, 1], [], []>} : vector<32x512xf32>, vector<512x64xf32>, vector<32x64xf32> -> vector<32x64xf32>
    %c0_3 = arith.constant 0 : index
    %c0_4 = arith.constant 0 : index
    %3 = vector.load %arg3[%c0_3, %c0_4] : memref<1x64xf32, #tpu.memory_space<vmem>>, vector<1x64xf32>
    %4 = vector.broadcast %3 : vector<1x64xf32> to vector<32x64xf32>
    %5 = arith.addf %2, %4 : vector<32x64xf32>
    %cst_5 = arith.constant 0.000000e+00 : f32
    %6 = vector.broadcast %cst_5 : f32 to vector<32x64xf32>
    %7 = arith.maximumf %5, %6 : vector<32x64xf32>
    %c0_6 = arith.constant 0 : index
    %c0_7 = arith.constant 0 : index
    %8 = vector.load %arg4[%c0_6, %c0_7] : memref<32x64xf32, #tpu.memory_space<vmem>>, vector<32x64xf32>
    tpu.vector_store %arg4[%c0_6, %c0_7], %7 {strides = array<i32>} : memref<32x64xf32, #tpu.memory_space<vmem>>, vector<32x64xf32>,
    return
  }
  func.func @transform_0(%arg0: i32) -> (i32, i32) {
    %c0_i32 = arith.constant 0 : i32
    %c0_i32_0 = arith.constant 0 : i32
    %c0_i32_1 = arith.constant 0 : i32
    return %c0_i32, %c0_i32_0 : i32, i32
  }
  func.func @transform_1(%arg0: i32) -> (i32, i32) {
    %c0_i32 = arith.constant 0 : i32
    %c0_i32_0 = arith.constant 0 : i32
    %c0_i32_1 = arith.constant 0 : i32
    return %c0_i32, %c0_i32_0 : i32, i32
  }
  func.func @transform_2(%arg0: i32) -> (i32, i32) {
    %c0_i32 = arith.constant 0 : i32
    %c0_i32_0 = arith.constant 0 : i32
    %c0_i32_1 = arith.constant 0 : i32
    return %c0_i32, %c0_i32_0 : i32, i32
  }
  func.func @transform_3(%arg0: i32) -> (i32, i32) {
    %c0_i32 = arith.constant 0 : i32
    %c0_i32_0 = arith.constant 0 : i32
    %c0_i32_1 = arith.constant 0 : i32
    return %c0_i32, %c0_i32_0 : i32, i32
  }
}

module attributes {stable_mosaic.version = 11 : i64} {
  func.func @_fused_middle_kernel(%arg0: i32, %arg1: memref<8x1024xf32, #tpu.memory_space<vmem>>, %arg2: memref<2x32xf32, #tpu.memory_space<vmem>>, %arg3: memref<1024x128xf32, #tpu.memory_space<vmem>>, %arg4: memref<1x128xf32, #tpu.memory_space<vmem>>, %arg5: memref<512x256xf32, #tpu.memory_space<vmem>>, %arg6: memref<1x256xf32, #tpu.memory_space<vmem>>, %arg7: memref<256x32xf32, #tpu.memory_space<vmem>>, %arg8: memref<1x32xf32, #tpu.memory_space<vmem>>, %arg9: memref<256x32xf32, #tpu.memory_space<vmem>>, %arg10: memref<1x32xf32, #tpu.memory_space<vmem>>, %arg11: memref<32x256xf32, #tpu.memory_space<vmem>>, %arg12: memref<1x256xf32, #tpu.memory_space<vmem>>, %arg13: memref<256x512xf32, #tpu.memory_space<vmem>>, %arg14: memref<1x512xf32, #tpu.memory_space<vmem>>, %arg15: memref<2x32xf32, #tpu.memory_space<vmem>>, %arg16: memref<2x32xf32, #tpu.memory_space<vmem>>, %arg17: memref<2x512xf32, #tpu.memory_space<vmem>>) attributes {dimension_semantics = [#tpu.dimension_semantics<arbitrary>], iteration_bounds = array<i64: 1>, scalar_prefetch = 0 : i64, scratch_operands = 0 : i64, tpu.core_type = #tpu.core_type<tc>, window_params = [{pipeline_mode = #tpu.pipeline_mode<synchronous>, transform_indices = @transform_0, window_bounds = array<i64: 8, 1024>}, {pipeline_mode = #tpu.pipeline_mode<synchronous>, transform_indices = @transform_1, window_bounds = array<i64: 2, 32>}, {pipeline_mode = #tpu.pipeline_mode<synchronous>, transform_indices = @transform_2, window_bounds = array<i64: 1024, 128>}, {pipeline_mode = #tpu.pipeline_mode<synchronous>, transform_indices = @transform_3, window_bounds = array<i64: 1, 128>}, {pipeline_mode = #tpu.pipeline_mode<synchronous>, transform_indices = @transform_4, window_bounds = array<i64: 512, 256>}, {pipeline_mode = #tpu.pipeline_mode<synchronous>, transform_indices = @transform_5, window_bounds = array<i64: 1, 256>}, {pipeline_mode = #tpu.pipeline_mode<synchronous>, transform_indices = @transform_6, window_bounds = array<i64: 256, 32>}, {pipeline_mode = #tpu.pipeline_mode<synchronous>, transform_indices = @transform_7, window_bounds = array<i64: 1, 32>}, {pipeline_mode = #tpu.pipeline_mode<synchronous>, transform_indices = @transform_8, window_bounds = array<i64: 256, 32>}, {pipeline_mode = #tpu.pipeline_mode<synchronous>, transform_indices = @transform_9, window_bounds = array<i64: 1, 32>}, {pipeline_mode = #tpu.pipeline_mode<synchronous>, transform_indices = @transform_10, window_bounds = array<i64: 32, 256>}, {pipeline_mode = #tpu.pipeline_mode<synchronous>, transform_indices = @transform_11, window_bounds = array<i64: 1, 256>}, {pipeline_mode = #tpu.pipeline_mode<synchronous>, transform_indices = @transform_12, window_bounds = array<i64: 256, 512>}, {pipeline_mode = #tpu.pipeline_mode<synchronous>, transform_indices = @transform_13, window_bounds = array<i64: 1, 512>}, {pipeline_mode = #tpu.pipeline_mode<synchronous>, transform_indices = @transform_14, window_bounds = array<i64: 2, 32>}, {pipeline_mode = #tpu.pipeline_mode<synchronous>, transform_indices = @transform_15, window_bounds = array<i64: 2, 32>}, {pipeline_mode = #tpu.pipeline_mode<synchronous>, transform_indices = @transform_16, window_bounds = array<i64: 2, 512>}]} {
    %c0 = arith.constant 0 : index
    %c0_0 = arith.constant 0 : index
    %0 = vector.load %arg6[%c0, %c0_0] : memref<1x256xf32, #tpu.memory_space<vmem>>, vector<1x256xf32>
    %c0_1 = arith.constant 0 : index
    %c0_2 = arith.constant 0 : index
    %1 = vector.load %arg1[%c0_1, %c0_2] : memref<8x1024xf32, #tpu.memory_space<vmem>>, vector<2x1024xf32>
    %c0_3 = arith.constant 0 : index
    %c0_4 = arith.constant 0 : index
    %2 = vector.load %arg3[%c0_3, %c0_4] : memref<1024x128xf32, #tpu.memory_space<vmem>>, vector<1024x128xf32>
    %cst = arith.constant dense<0.000000e+00> : vector<2x128xf32>
    %3 = tpu.matmul %1, %2, %cst {dimension_numbers = #tpu.dot_dimension_numbers<[1], [0], [0], [1], [0, 0, 1, 1], [], []>} : vector<2x1024xf32>, vector<1024x128xf32>, vector<2x128xf32> -> vector<2x128xf32>
    %c0_5 = arith.constant 0 : index
    %c0_6 = arith.constant 0 : index
    %4 = vector.load %arg4[%c0_5, %c0_6] : memref<1x128xf32, #tpu.memory_space<vmem>>, vector<1x128xf32>
    %5 = vector.broadcast %4 : vector<1x128xf32> to vector<2x128xf32>
    %6 = arith.addf %3, %5 : vector<2x128xf32>
    %cst_7 = arith.constant 0.000000e+00 : f32
    %7 = vector.broadcast %cst_7 : f32 to vector<2x128xf32>
    %8 = arith.maximumf %6, %7 : vector<2x128xf32>
    %c0_8 = arith.constant 0 : index
    %c0_9 = arith.constant 0 : index
    %9 = vector.load %arg5[%c0_8, %c0_9] : memref<512x256xf32, #tpu.memory_space<vmem>>, vector<128x256xf32>
    %cst_10 = arith.constant dense<0.000000e+00> : vector<2x256xf32>
    %10 = tpu.matmul %8, %9, %cst_10 {dimension_numbers = #tpu.dot_dimension_numbers<[1], [0], [0], [1], [0, 0, 1, 1], [], []>} : vector<2x128xf32>, vector<128x256xf32>, vector<2x256xf32> -> vector<2x256xf32>
    %11 = vector.broadcast %0 : vector<1x256xf32> to vector<2x256xf32>
    %12 = arith.addf %11, %10 : vector<2x256xf32>
    %c2 = arith.constant 2 : index
    %c0_11 = arith.constant 0 : index
    %13 = vector.load %arg1[%c2, %c0_11] : memref<8x1024xf32, #tpu.memory_space<vmem>>, vector<2x1024xf32>
    %c0_12 = arith.constant 0 : index
    %c0_13 = arith.constant 0 : index
    %14 = vector.load %arg3[%c0_12, %c0_13] : memref<1024x128xf32, #tpu.memory_space<vmem>>, vector<1024x128xf32>
    %cst_14 = arith.constant dense<0.000000e+00> : vector<2x128xf32>
    %15 = tpu.matmul %13, %14, %cst_14 {dimension_numbers = #tpu.dot_dimension_numbers<[1], [0], [0], [1], [0, 0, 1, 1], [], []>} : vector<2x1024xf32>, vector<1024x128xf32>, vector<2x128xf32> -> vector<2x128xf32>
    %c0_15 = arith.constant 0 : index
    %c0_16 = arith.constant 0 : index
    %16 = vector.load %arg4[%c0_15, %c0_16] : memref<1x128xf32, #tpu.memory_space<vmem>>, vector<1x128xf32>
    %17 = vector.broadcast %16 : vector<1x128xf32> to vector<2x128xf32>
    %18 = arith.addf %15, %17 : vector<2x128xf32>
    %cst_17 = arith.constant 0.000000e+00 : f32
    %19 = vector.broadcast %cst_17 : f32 to vector<2x128xf32>
    %20 = arith.maximumf %18, %19 : vector<2x128xf32>
    %c128 = arith.constant 128 : index
    %c0_18 = arith.constant 0 : index
    %21 = vector.load %arg5[%c128, %c0_18] : memref<512x256xf32, #tpu.memory_space<vmem>>, vector<128x256xf32>
    %cst_19 = arith.constant dense<0.000000e+00> : vector<2x256xf32>
    %22 = tpu.matmul %20, %21, %cst_19 {dimension_numbers = #tpu.dot_dimension_numbers<[1], [0], [0], [1], [0, 0, 1, 1], [], []>} : vector<2x128xf32>, vector<128x256xf32>, vector<2x256xf32> -> vector<2x256xf32>
    %23 = arith.addf %12, %22 : vector<2x256xf32>
    %c4 = arith.constant 4 : index
    %c0_20 = arith.constant 0 : index
    %24 = vector.load %arg1[%c4, %c0_20] : memref<8x1024xf32, #tpu.memory_space<vmem>>, vector<2x1024xf32>
    %c0_21 = arith.constant 0 : index
    %c0_22 = arith.constant 0 : index
    %25 = vector.load %arg3[%c0_21, %c0_22] : memref<1024x128xf32, #tpu.memory_space<vmem>>, vector<1024x128xf32>
    %cst_23 = arith.constant dense<0.000000e+00> : vector<2x128xf32>
    %26 = tpu.matmul %24, %25, %cst_23 {dimension_numbers = #tpu.dot_dimension_numbers<[1], [0], [0], [1], [0, 0, 1, 1], [], []>} : vector<2x1024xf32>, vector<1024x128xf32>, vector<2x128xf32> -> vector<2x128xf32>
    %c0_24 = arith.constant 0 : index
    %c0_25 = arith.constant 0 : index
    %27 = vector.load %arg4[%c0_24, %c0_25] : memref<1x128xf32, #tpu.memory_space<vmem>>, vector<1x128xf32>
    %28 = vector.broadcast %27 : vector<1x128xf32> to vector<2x128xf32>
    %29 = arith.addf %26, %28 : vector<2x128xf32>
    %cst_26 = arith.constant 0.000000e+00 : f32
    %30 = vector.broadcast %cst_26 : f32 to vector<2x128xf32>
    %31 = arith.maximumf %29, %30 : vector<2x128xf32>
    %c256 = arith.constant 256 : index
    %c0_27 = arith.constant 0 : index
    %32 = vector.load %arg5[%c256, %c0_27] : memref<512x256xf32, #tpu.memory_space<vmem>>, vector<128x256xf32>
    %cst_28 = arith.constant dense<0.000000e+00> : vector<2x256xf32>
    %33 = tpu.matmul %31, %32, %cst_28 {dimension_numbers = #tpu.dot_dimension_numbers<[1], [0], [0], [1], [0, 0, 1, 1], [], []>} : vector<2x128xf32>, vector<128x256xf32>, vector<2x256xf32> -> vector<2x256xf32>
    %34 = arith.addf %23, %33 : vector<2x256xf32>
    %c6 = arith.constant 6 : index
    %c0_29 = arith.constant 0 : index
    %35 = vector.load %arg1[%c6, %c0_29] : memref<8x1024xf32, #tpu.memory_space<vmem>>, vector<2x1024xf32>
    %c0_30 = arith.constant 0 : index
    %c0_31 = arith.constant 0 : index
    %36 = vector.load %arg3[%c0_30, %c0_31] : memref<1024x128xf32, #tpu.memory_space<vmem>>, vector<1024x128xf32>
    %cst_32 = arith.constant dense<0.000000e+00> : vector<2x128xf32>
    %37 = tpu.matmul %35, %36, %cst_32 {dimension_numbers = #tpu.dot_dimension_numbers<[1], [0], [0], [1], [0, 0, 1, 1], [], []>} : vector<2x1024xf32>, vector<1024x128xf32>, vector<2x128xf32> -> vector<2x128xf32>
    %c0_33 = arith.constant 0 : index
    %c0_34 = arith.constant 0 : index
    %38 = vector.load %arg4[%c0_33, %c0_34] : memref<1x128xf32, #tpu.memory_space<vmem>>, vector<1x128xf32>
    %39 = vector.broadcast %38 : vector<1x128xf32> to vector<2x128xf32>
    %40 = arith.addf %37, %39 : vector<2x128xf32>
    %cst_35 = arith.constant 0.000000e+00 : f32
    %41 = vector.broadcast %cst_35 : f32 to vector<2x128xf32>
    %42 = arith.maximumf %40, %41 : vector<2x128xf32>
    %c384 = arith.constant 384 : index
    %c0_36 = arith.constant 0 : index
    %43 = vector.load %arg5[%c384, %c0_36] : memref<512x256xf32, #tpu.memory_space<vmem>>, vector<128x256xf32>
    %cst_37 = arith.constant dense<0.000000e+00> : vector<2x256xf32>
    %44 = tpu.matmul %42, %43, %cst_37 {dimension_numbers = #tpu.dot_dimension_numbers<[1], [0], [0], [1], [0, 0, 1, 1], [], []>} : vector<2x128xf32>, vector<128x256xf32>, vector<2x256xf32> -> vector<2x256xf32>
    %45 = arith.addf %34, %44 : vector<2x256xf32>
    %cst_38 = arith.constant 0.000000e+00 : f32
    %46 = vector.broadcast %cst_38 : f32 to vector<2x256xf32>
    %47 = arith.maximumf %45, %46 : vector<2x256xf32>
    %c0_39 = arith.constant 0 : index
    %c0_40 = arith.constant 0 : index
    %48 = vector.load %arg7[%c0_39, %c0_40] : memref<256x32xf32, #tpu.memory_space<vmem>>, vector<256x32xf32>
    %cst_41 = arith.constant dense<0.000000e+00> : vector<2x32xf32>
    %49 = tpu.matmul %47, %48, %cst_41 {dimension_numbers = #tpu.dot_dimension_numbers<[1], [0], [0], [1], [0, 0, 1, 1], [], []>} : vector<2x256xf32>, vector<256x32xf32>, vector<2x32xf32> -> vector<2x32xf32>
    %c0_42 = arith.constant 0 : index
    %c0_43 = arith.constant 0 : index
    %50 = vector.load %arg8[%c0_42, %c0_43] : memref<1x32xf32, #tpu.memory_space<vmem>>, vector<1x32xf32>
    %51 = vector.broadcast %50 : vector<1x32xf32> to vector<2x32xf32>
    %52 = arith.addf %49, %51 : vector<2x32xf32>
    %c0_44 = arith.constant 0 : index
    %c0_45 = arith.constant 0 : index
    %53 = vector.load %arg9[%c0_44, %c0_45] : memref<256x32xf32, #tpu.memory_space<vmem>>, vector<256x32xf32>
    %cst_46 = arith.constant dense<0.000000e+00> : vector<2x32xf32>
    %54 = tpu.matmul %47, %53, %cst_46 {dimension_numbers = #tpu.dot_dimension_numbers<[1], [0], [0], [1], [0, 0, 1, 1], [], []>} : vector<2x256xf32>, vector<256x32xf32>, vector<2x32xf32> -> vector<2x32xf32>
    %c0_47 = arith.constant 0 : index
    %c0_48 = arith.constant 0 : index
    %55 = vector.load %arg10[%c0_47, %c0_48] : memref<1x32xf32, #tpu.memory_space<vmem>>, vector<1x32xf32>
    %56 = vector.broadcast %55 : vector<1x32xf32> to vector<2x32xf32>
    %57 = arith.addf %54, %56 : vector<2x32xf32>
    %c0_49 = arith.constant 0 : index
    %c0_50 = arith.constant 0 : index
    %58 = vector.load %arg2[%c0_49, %c0_50] : memref<2x32xf32, #tpu.memory_space<vmem>>, vector<2x32xf32>
    %cst_51 = arith.constant 5.000000e-01 : f32
    %59 = vector.broadcast %cst_51 : f32 to vector<2x32xf32>
    %60 = arith.mulf %59, %57 : vector<2x32xf32>
    %61 = math.exp %60 : vector<2x32xf32>
    %62 = arith.mulf %58, %61 : vector<2x32xf32>
    %63 = arith.addf %52, %62 : vector<2x32xf32>
    %c0_52 = arith.constant 0 : index
    %c0_53 = arith.constant 0 : index
    %64 = vector.load %arg11[%c0_52, %c0_53] : memref<32x256xf32, #tpu.memory_space<vmem>>, vector<32x256xf32>
    %cst_54 = arith.constant dense<0.000000e+00> : vector<2x256xf32>
    %65 = tpu.matmul %63, %64, %cst_54 {dimension_numbers = #tpu.dot_dimension_numbers<[1], [0], [0], [1], [0, 0, 1, 1], [], []>} : vector<2x32xf32>, vector<32x256xf32>, vector<2x256xf32> -> vector<2x256xf32>
    %c0_55 = arith.constant 0 : index
    %c0_56 = arith.constant 0 : index
    %66 = vector.load %arg12[%c0_55, %c0_56] : memref<1x256xf32, #tpu.memory_space<vmem>>, vector<1x256xf32>
    %67 = vector.broadcast %66 : vector<1x256xf32> to vector<2x256xf32>
    %68 = arith.addf %65, %67 : vector<2x256xf32>
    %cst_57 = arith.constant 0.000000e+00 : f32
    %69 = vector.broadcast %cst_57 : f32 to vector<2x256xf32>
    %70 = arith.maximumf %68, %69 : vector<2x256xf32>
    %c0_58 = arith.constant 0 : index
    %c0_59 = arith.constant 0 : index
    %71 = vector.load %arg13[%c0_58, %c0_59] : memref<256x512xf32, #tpu.memory_space<vmem>>, vector<256x512xf32>
    %cst_60 = arith.constant dense<0.000000e+00> : vector<2x512xf32>
    %72 = tpu.matmul %70, %71, %cst_60 {dimension_numbers = #tpu.dot_dimension_numbers<[1], [0], [0], [1], [0, 0, 1, 1], [], []>} : vector<2x256xf32>, vector<256x512xf32>, vector<2x512xf32> -> vector<2x512xf32>
    %c0_61 = arith.constant 0 : index
    %c0_62 = arith.constant 0 : index
    %73 = vector.load %arg14[%c0_61, %c0_62] : memref<1x512xf32, #tpu.memory_space<vmem>>, vector<1x512xf32>
    %74 = vector.broadcast %73 : vector<1x512xf32> to vector<2x512xf32>
    %75 = arith.addf %72, %74 : vector<2x512xf32>
    %cst_63 = arith.constant 0.000000e+00 : f32
    %76 = vector.broadcast %cst_63 : f32 to vector<2x512xf32>
    %77 = arith.maximumf %75, %76 : vector<2x512xf32>
    %c0_64 = arith.constant 0 : index
    %c0_65 = arith.constant 0 : index
    %78 = vector.load %arg15[%c0_64, %c0_65] : memref<2x32xf32, #tpu.memory_space<vmem>>, vector<2x32xf32>
    tpu.vector_store %arg15[%c0_64, %c0_65], %52 {strides = array<i32>} : memref<2x32xf32, #tpu.memory_space<vmem>>, vector<2x32xf32>,
    %c0_66 = arith.constant 0 : index
    %c0_67 = arith.constant 0 : index
    %79 = vector.load %arg16[%c0_66, %c0_67] : memref<2x32xf32, #tpu.memory_space<vmem>>, vector<2x32xf32>
    tpu.vector_store %arg16[%c0_66, %c0_67], %57 {strides = array<i32>} : memref<2x32xf32, #tpu.memory_space<vmem>>, vector<2x32xf32>,
    %c0_68 = arith.constant 0 : index
    %c0_69 = arith.constant 0 : index
    %80 = vector.load %arg17[%c0_68, %c0_69] : memref<2x512xf32, #tpu.memory_space<vmem>>, vector<2x512xf32>
    tpu.vector_store %arg17[%c0_68, %c0_69], %77 {strides = array<i32>} : memref<2x512xf32, #tpu.memory_space<vmem>>, vector<2x512xf32>,
    return
  }
  func.func @transform_0(%arg0: i32) -> (i32, i32) {
    %c0_i32 = arith.constant 0 : i32
    %c0_i32_0 = arith.constant 0 : i32
    %c0_i32_1 = arith.constant 0 : i32
    return %c0_i32, %c0_i32_0 : i32, i32
  }
  func.func @transform_1(%arg0: i32) -> (i32, i32) {
    %c0_i32 = arith.constant 0 : i32
    %c0_i32_0 = arith.constant 0 : i32
    %c0_i32_1 = arith.constant 0 : i32
    return %c0_i32, %c0_i32_0 : i32, i32
  }
  func.func @transform_2(%arg0: i32) -> (i32, i32) {
    %c0_i32 = arith.constant 0 : i32
    %c0_i32_0 = arith.constant 0 : i32
    %c0_i32_1 = arith.constant 0 : i32
    return %c0_i32, %c0_i32_0 : i32, i32
  }
  func.func @transform_3(%arg0: i32) -> (i32, i32) {
    %c0_i32 = arith.constant 0 : i32
    %c0_i32_0 = arith.constant 0 : i32
    %c0_i32_1 = arith.constant 0 : i32
    return %c0_i32, %c0_i32_0 : i32, i32
  }
  func.func @transform_4(%arg0: i32) -> (i32, i32) {
    %c0_i32 = arith.constant 0 : i32
    %c0_i32_0 = arith.constant 0 : i32
    %c0_i32_1 = arith.constant 0 : i32
    return %c0_i32, %c0_i32_0 : i32, i32
  }
  func.func @transform_5(%arg0: i32) -> (i32, i32) {
    %c0_i32 = arith.constant 0 : i32
    %c0_i32_0 = arith.constant 0 : i32
    %c0_i32_1 = arith.constant 0 : i32
    return %c0_i32, %c0_i32_0 : i32, i32
  }
  func.func @transform_6(%arg0: i32) -> (i32, i32) {
    %c0_i32 = arith.constant 0 : i32
    %c0_i32_0 = arith.constant 0 : i32
    %c0_i32_1 = arith.constant 0 : i32
    return %c0_i32, %c0_i32_0 : i32, i32
  }
  func.func @transform_7(%arg0: i32) -> (i32, i32) {
    %c0_i32 = arith.constant 0 : i32
    %c0_i32_0 = arith.constant 0 : i32
    %c0_i32_1 = arith.constant 0 : i32
    return %c0_i32, %c0_i32_0 : i32, i32
  }
  func.func @transform_8(%arg0: i32) -> (i32, i32) {
    %c0_i32 = arith.constant 0 : i32
    %c0_i32_0 = arith.constant 0 : i32
    %c0_i32_1 = arith.constant 0 : i32
    return %c0_i32, %c0_i32_0 : i32, i32
  }
  func.func @transform_9(%arg0: i32) -> (i32, i32) {
    %c0_i32 = arith.constant 0 : i32
    %c0_i32_0 = arith.constant 0 : i32
    %c0_i32_1 = arith.constant 0 : i32
    return %c0_i32, %c0_i32_0 : i32, i32
  }
  func.func @transform_10(%arg0: i32) -> (i32, i32) {
    %c0_i32 = arith.constant 0 : i32
    %c0_i32_0 = arith.constant 0 : i32
    %c0_i32_1 = arith.constant 0 : i32
    return %c0_i32, %c0_i32_0 : i32, i32
  }
  func.func @transform_11(%arg0: i32) -> (i32, i32) {
    %c0_i32 = arith.constant 0 : i32
    %c0_i32_0 = arith.constant 0 : i32
    %c0_i32_1 = arith.constant 0 : i32
    return %c0_i32, %c0_i32_0 : i32, i32
  }
  func.func @transform_12(%arg0: i32) -> (i32, i32) {
    %c0_i32 = arith.constant 0 : i32
    %c0_i32_0 = arith.constant 0 : i32
    %c0_i32_1 = arith.constant 0 : i32
    return %c0_i32, %c0_i32_0 : i32, i32
  }
  func.func @transform_13(%arg0: i32) -> (i32, i32) {
    %c0_i32 = arith.constant 0 : i32
    %c0_i32_0 = arith.constant 0 : i32
    %c0_i32_1 = arith.constant 0 : i32
    return %c0_i32, %c0_i32_0 : i32, i32
  }
  func.func @transform_14(%arg0: i32) -> (i32, i32) {
    %c0_i32 = arith.constant 0 : i32
    %c0_i32_0 = arith.constant 0 : i32
    %c0_i32_1 = arith.constant 0 : i32
    return %c0_i32, %c0_i32_0 : i32, i32
  }
  func.func @transform_15(%arg0: i32) -> (i32, i32) {
    %c0_i32 = arith.constant 0 : i32
    %c0_i32_0 = arith.constant 0 : i32
    %c0_i32_1 = arith.constant 0 : i32
    return %c0_i32, %c0_i32_0 : i32, i32
  }
  func.func @transform_16(%arg0: i32) -> (i32, i32) {
    %c0_i32 = arith.constant 0 : i32
    %c0_i32_0 = arith.constant 0 : i32
    %c0_i32_1 = arith.constant 0 : i32
    return %c0_i32, %c0_i32_0 : i32, i32
  }
}

module attributes {stable_mosaic.version = 11 : i64} {
  func.func @_linear_kernel(%arg0: i32, %arg1: memref<18x512xf32, #tpu.memory_space<vmem>>, %arg2: memref<512x256xf32, #tpu.memory_space<vmem>>, %arg3: memref<1x256xf32, #tpu.memory_space<vmem>>, %arg4: memref<18x256xf32, #tpu.memory_space<vmem>>) attributes {dimension_semantics = [#tpu.dimension_semantics<arbitrary>], iteration_bounds = array<i64: 1>, scalar_prefetch = 0 : i64, scratch_operands = 0 : i64, tpu.core_type = #tpu.core_type<tc>, window_params = [{pipeline_mode = #tpu.pipeline_mode<synchronous>, transform_indices = @transform_0, window_bounds = array<i64: 18, 512>}, {pipeline_mode = #tpu.pipeline_mode<synchronous>, transform_indices = @transform_1, window_bounds = array<i64: 512, 256>}, {pipeline_mode = #tpu.pipeline_mode<synchronous>, transform_indices = @transform_2, window_bounds = array<i64: 1, 256>}, {pipeline_mode = #tpu.pipeline_mode<synchronous>, transform_indices = @transform_3, window_bounds = array<i64: 18, 256>}]} {
    %c0 = arith.constant 0 : index
    %c0_0 = arith.constant 0 : index
    %0 = vector.load %arg1[%c0, %c0_0] : memref<18x512xf32, #tpu.memory_space<vmem>>, vector<18x512xf32>
    %c0_1 = arith.constant 0 : index
    %c0_2 = arith.constant 0 : index
    %1 = vector.load %arg2[%c0_1, %c0_2] : memref<512x256xf32, #tpu.memory_space<vmem>>, vector<512x256xf32>
    %cst = arith.constant dense<0.000000e+00> : vector<18x256xf32>
    %2 = tpu.matmul %0, %1, %cst {dimension_numbers = #tpu.dot_dimension_numbers<[1], [0], [0], [1], [0, 0, 1, 1], [], []>} : vector<18x512xf32>, vector<512x256xf32>, vector<18x256xf32> -> vector<18x256xf32>
    %c0_3 = arith.constant 0 : index
    %c0_4 = arith.constant 0 : index
    %3 = vector.load %arg3[%c0_3, %c0_4] : memref<1x256xf32, #tpu.memory_space<vmem>>, vector<1x256xf32>
    %4 = vector.broadcast %3 : vector<1x256xf32> to vector<18x256xf32>
    %5 = arith.addf %2, %4 : vector<18x256xf32>
    %cst_5 = arith.constant 0.000000e+00 : f32
    %6 = vector.broadcast %cst_5 : f32 to vector<18x256xf32>
    %7 = arith.maximumf %5, %6 : vector<18x256xf32>
    %c0_6 = arith.constant 0 : index
    %c0_7 = arith.constant 0 : index
    %8 = vector.load %arg4[%c0_6, %c0_7] : memref<18x256xf32, #tpu.memory_space<vmem>>, vector<18x256xf32>
    tpu.vector_store %arg4[%c0_6, %c0_7], %7 {strides = array<i32>} : memref<18x256xf32, #tpu.memory_space<vmem>>, vector<18x256xf32>,
    return
  }
  func.func @transform_0(%arg0: i32) -> (i32, i32) {
    %c0_i32 = arith.constant 0 : i32
    %c0_i32_0 = arith.constant 0 : i32
    %c0_i32_1 = arith.constant 0 : i32
    return %c0_i32, %c0_i32_0 : i32, i32
  }
  func.func @transform_1(%arg0: i32) -> (i32, i32) {
    %c0_i32 = arith.constant 0 : i32
    %c0_i32_0 = arith.constant 0 : i32
    %c0_i32_1 = arith.constant 0 : i32
    return %c0_i32, %c0_i32_0 : i32, i32
  }
  func.func @transform_2(%arg0: i32) -> (i32, i32) {
    %c0_i32 = arith.constant 0 : i32
    %c0_i32_0 = arith.constant 0 : i32
    %c0_i32_1 = arith.constant 0 : i32
    return %c0_i32, %c0_i32_0 : i32, i32
  }
  func.func @transform_3(%arg0: i32) -> (i32, i32) {
    %c0_i32 = arith.constant 0 : i32
    %c0_i32_0 = arith.constant 0 : i32
    %c0_i32_1 = arith.constant 0 : i32
    return %c0_i32, %c0_i32_0 : i32, i32
  }
}

module attributes {stable_mosaic.version = 11 : i64} {
  func.func @_linear_kernel(%arg0: i32, %arg1: memref<50x256xf32, #tpu.memory_space<vmem>>, %arg2: memref<256x128xf32, #tpu.memory_space<vmem>>, %arg3: memref<1x128xf32, #tpu.memory_space<vmem>>, %arg4: memref<50x128xf32, #tpu.memory_space<vmem>>) attributes {dimension_semantics = [#tpu.dimension_semantics<arbitrary>], iteration_bounds = array<i64: 1>, scalar_prefetch = 0 : i64, scratch_operands = 0 : i64, tpu.core_type = #tpu.core_type<tc>, window_params = [{pipeline_mode = #tpu.pipeline_mode<synchronous>, transform_indices = @transform_0, window_bounds = array<i64: 50, 256>}, {pipeline_mode = #tpu.pipeline_mode<synchronous>, transform_indices = @transform_1, window_bounds = array<i64: 256, 128>}, {pipeline_mode = #tpu.pipeline_mode<synchronous>, transform_indices = @transform_2, window_bounds = array<i64: 1, 128>}, {pipeline_mode = #tpu.pipeline_mode<synchronous>, transform_indices = @transform_3, window_bounds = array<i64: 50, 128>}]} {
    %c0 = arith.constant 0 : index
    %c0_0 = arith.constant 0 : index
    %0 = vector.load %arg1[%c0, %c0_0] : memref<50x256xf32, #tpu.memory_space<vmem>>, vector<50x256xf32>
    %c0_1 = arith.constant 0 : index
    %c0_2 = arith.constant 0 : index
    %1 = vector.load %arg2[%c0_1, %c0_2] : memref<256x128xf32, #tpu.memory_space<vmem>>, vector<256x128xf32>
    %cst = arith.constant dense<0.000000e+00> : vector<50x128xf32>
    %2 = tpu.matmul %0, %1, %cst {dimension_numbers = #tpu.dot_dimension_numbers<[1], [0], [0], [1], [0, 0, 1, 1], [], []>} : vector<50x256xf32>, vector<256x128xf32>, vector<50x128xf32> -> vector<50x128xf32>
    %c0_3 = arith.constant 0 : index
    %c0_4 = arith.constant 0 : index
    %3 = vector.load %arg3[%c0_3, %c0_4] : memref<1x128xf32, #tpu.memory_space<vmem>>, vector<1x128xf32>
    %4 = vector.broadcast %3 : vector<1x128xf32> to vector<50x128xf32>
    %5 = arith.addf %2, %4 : vector<50x128xf32>
    %cst_5 = arith.constant 0.000000e+00 : f32
    %6 = vector.broadcast %cst_5 : f32 to vector<50x128xf32>
    %7 = arith.maximumf %5, %6 : vector<50x128xf32>
    %c0_6 = arith.constant 0 : index
    %c0_7 = arith.constant 0 : index
    %8 = vector.load %arg4[%c0_6, %c0_7] : memref<50x128xf32, #tpu.memory_space<vmem>>, vector<50x128xf32>
    tpu.vector_store %arg4[%c0_6, %c0_7], %7 {strides = array<i32>} : memref<50x128xf32, #tpu.memory_space<vmem>>, vector<50x128xf32>,
    return
  }
  func.func @transform_0(%arg0: i32) -> (i32, i32) {
    %c0_i32 = arith.constant 0 : i32
    %c0_i32_0 = arith.constant 0 : i32
    %c0_i32_1 = arith.constant 0 : i32
    return %c0_i32, %c0_i32_0 : i32, i32
  }
  func.func @transform_1(%arg0: i32) -> (i32, i32) {
    %c0_i32 = arith.constant 0 : i32
    %c0_i32_0 = arith.constant 0 : i32
    %c0_i32_1 = arith.constant 0 : i32
    return %c0_i32, %c0_i32_0 : i32, i32
  }
  func.func @transform_2(%arg0: i32) -> (i32, i32) {
    %c0_i32 = arith.constant 0 : i32
    %c0_i32_0 = arith.constant 0 : i32
    %c0_i32_1 = arith.constant 0 : i32
    return %c0_i32, %c0_i32_0 : i32, i32
  }
  func.func @transform_3(%arg0: i32) -> (i32, i32) {
    %c0_i32 = arith.constant 0 : i32
    %c0_i32_0 = arith.constant 0 : i32
    %c0_i32_1 = arith.constant 0 : i32
    return %c0_i32, %c0_i32_0 : i32, i32
  }
}

module attributes {stable_mosaic.version = 11 : i64} {
  func.func @_linear_kernel(%arg0: i32, %arg1: memref<162x128xf32, #tpu.memory_space<vmem>>, %arg2: memref<128x16xf32, #tpu.memory_space<vmem>>, %arg3: memref<1x16xf32, #tpu.memory_space<vmem>>, %arg4: memref<162x16xf32, #tpu.memory_space<vmem>>) attributes {dimension_semantics = [#tpu.dimension_semantics<arbitrary>], iteration_bounds = array<i64: 1>, scalar_prefetch = 0 : i64, scratch_operands = 0 : i64, tpu.core_type = #tpu.core_type<tc>, window_params = [{pipeline_mode = #tpu.pipeline_mode<synchronous>, transform_indices = @transform_0, window_bounds = array<i64: 162, 128>}, {pipeline_mode = #tpu.pipeline_mode<synchronous>, transform_indices = @transform_1, window_bounds = array<i64: 128, 16>}, {pipeline_mode = #tpu.pipeline_mode<synchronous>, transform_indices = @transform_2, window_bounds = array<i64: 1, 16>}, {pipeline_mode = #tpu.pipeline_mode<synchronous>, transform_indices = @transform_3, window_bounds = array<i64: 162, 16>}]} {
    %c0 = arith.constant 0 : index
    %c0_0 = arith.constant 0 : index
    %0 = vector.load %arg1[%c0, %c0_0] : memref<162x128xf32, #tpu.memory_space<vmem>>, vector<162x128xf32>
    %c0_1 = arith.constant 0 : index
    %c0_2 = arith.constant 0 : index
    %1 = vector.load %arg2[%c0_1, %c0_2] : memref<128x16xf32, #tpu.memory_space<vmem>>, vector<128x16xf32>
    %cst = arith.constant dense<0.000000e+00> : vector<162x16xf32>
    %2 = tpu.matmul %0, %1, %cst {dimension_numbers = #tpu.dot_dimension_numbers<[1], [0], [0], [1], [0, 0, 1, 1], [], []>} : vector<162x128xf32>, vector<128x16xf32>, vector<162x16xf32> -> vector<162x16xf32>
    %c0_3 = arith.constant 0 : index
    %c0_4 = arith.constant 0 : index
    %3 = vector.load %arg3[%c0_3, %c0_4] : memref<1x16xf32, #tpu.memory_space<vmem>>, vector<1x16xf32>
    %4 = vector.broadcast %3 : vector<1x16xf32> to vector<162x16xf32>
    %5 = arith.addf %2, %4 : vector<162x16xf32>
    %6 = arith.negf %5 : vector<162x16xf32>
    %7 = math.exp %6 : vector<162x16xf32>
    %cst_5 = arith.constant 1.000000e+00 : f32
    %8 = vector.broadcast %cst_5 : f32 to vector<162x16xf32>
    %9 = arith.addf %8, %7 : vector<162x16xf32>
    %10 = arith.divf %8, %9 : vector<162x16xf32>
    %c0_6 = arith.constant 0 : index
    %c0_7 = arith.constant 0 : index
    %11 = vector.load %arg4[%c0_6, %c0_7] : memref<162x16xf32, #tpu.memory_space<vmem>>, vector<162x16xf32>
    tpu.vector_store %arg4[%c0_6, %c0_7], %10 {strides = array<i32>} : memref<162x16xf32, #tpu.memory_space<vmem>>, vector<162x16xf32>,
    return
  }
  func.func @transform_0(%arg0: i32) -> (i32, i32) {
    %c0_i32 = arith.constant 0 : i32
    %c0_i32_0 = arith.constant 0 : i32
    %c0_i32_1 = arith.constant 0 : i32
    return %c0_i32, %c0_i32_0 : i32, i32
  }
  func.func @transform_1(%arg0: i32) -> (i32, i32) {
    %c0_i32 = arith.constant 0 : i32
    %c0_i32_0 = arith.constant 0 : i32
    %c0_i32_1 = arith.constant 0 : i32
    return %c0_i32, %c0_i32_0 : i32, i32
  }
  func.func @transform_2(%arg0: i32) -> (i32, i32) {
    %c0_i32 = arith.constant 0 : i32
    %c0_i32_0 = arith.constant 0 : i32
    %c0_i32_1 = arith.constant 0 : i32
    return %c0_i32, %c0_i32_0 : i32, i32
  }
  func.func @transform_3(%arg0: i32) -> (i32, i32) {
    %c0_i32 = arith.constant 0 : i32
    %c0_i32_0 = arith.constant 0 : i32
    %c0_i32_1 = arith.constant 0 : i32
    return %c0_i32, %c0_i32_0 : i32, i32
  }
}

</mosaic_0001>

<llo_original>
// kernel: conv_vae_forward.6
$region0: #{conv_vae_forward.6}
  #allocation0 [shape = 'u32[]', space=smem, size = 0x4, offset = 0x4, fixed_abs, tag = 'smem constant byte address 0x4 - core index']
  #allocation1 [shape = 'u32[72,128]{1,0:T(1,128)}', space=vmem, size = 0x9000, scoped, tag = 'internal scratch']
  %s0 = inlined_call_operand.vmem [shape: f32[128,64], index: 0, kind: input, shape index: {}]
  %s1 = inlined_call_operand.vmem [shape: f32[64,32], index: 1, kind: input, shape index: {}]
  %s2 = inlined_call_operand.vmem [shape: f32[1,32], index: 2, kind: input, shape index: {}]
  %s3 = inlined_call_operand.vmem [shape: f32[128,32], index: 3, kind: output, shape index: {}]
  %s4 = sld [smem:[#allocation0]]
  $region22: #{conv_vae_forward.6} parent=0
    _
  %s6 = ssub.s32 1, %s4
  %s7 = scalar_select 0, %s6, %s4
  // Predicated region
  $region2: #{conv_vae_forward.6} parent=0 // pred_check
    _
  $region3: #{conv_vae_forward.6} parent=0 // pred_check_branch
    %9 = sbr.rel (0) target = $region5
  $region4: #{conv_vae_forward.6} parent=0 // pred_region
    _
  $region5: #{conv_vae_forward.6} parent=0 // pred_fallthru
    _
  // Predicated region
  $region6: #{conv_vae_forward.6} parent=0 // pred_check
    _
  $region7: #{conv_vae_forward.6} parent=0 // pred_check_branch
    %11 = sbr.rel (0) target = $region9
  $region8: #{conv_vae_forward.6} parent=0 // pred_region
    _
  $region9: #{conv_vae_forward.6} parent=0 // pred_fallthru
    _
  // Predicated region
  $region10: #{conv_vae_forward.6} parent=0 // pred_check
    _
  $region11: #{conv_vae_forward.6} parent=0 // pred_check_branch
    %13 = sbr.rel (0) target = $region13
  $region12: #{conv_vae_forward.6} parent=0 // pred_region
    _
  $region13: #{conv_vae_forward.6} parent=0 // pred_fallthru
    _
  %v14 = vld [vmem:[%s0] sm:$0xff]
  %v15 = vld [vmem:[%s0 + $0x8] sm:$0xff]
  %v16 = vld [vmem:[%s0 + $0x10] sm:$0xff]
  %v17 = vld [vmem:[%s0 + $0x18] sm:$0xff]
  %v18 = vld [vmem:[%s0 + $0x20] sm:$0xff]
  %v19 = vld [vmem:[%s0 + $0x28] sm:$0xff]
  %v20 = vld [vmem:[%s0 + $0x30] sm:$0xff]
  %v21 = vld [vmem:[%s0 + $0x38] sm:$0xff]
  %v22 = vld [vmem:[%s0 + $0x40] sm:$0xff]
  %v23 = vld [vmem:[%s0 + $0x48] sm:$0xff]
  %v24 = vld [vmem:[%s0 + $0x50] sm:$0xff]
  %v25 = vld [vmem:[%s0 + $0x58] sm:$0xff]
  %v26 = vld [vmem:[%s0 + $0x60] sm:$0xff]
  %v27 = vld [vmem:[%s0 + $0x68] sm:$0xff]
  %v28 = vld [vmem:[%s0 + $0x70] sm:$0xff]
  %v29 = vld [vmem:[%s0 + $0x78] sm:$0xff]
  %v30 = vld [vmem:[%s1] sm:$0xff]
  %v31 = vld [vmem:[%s1 + $0x8] sm:$0xff]
  %v32 = vld [vmem:[%s1 + $0x10] sm:$0xff]
  %v33 = vld [vmem:[%s1 + $0x18] sm:$0xff]
  %v34 = vld [vmem:[%s1 + $0x20] sm:$0xff]
  %v35 = vld [vmem:[%s1 + $0x28] sm:$0xff]
  %v36 = vld [vmem:[%s1 + $0x30] sm:$0xff]
  %v37 = vld [vmem:[%s1 + $0x38] sm:$0xff]
  %v38 = vld [vmem:[%s2] sm:$0x1]
  %v40 = vperm.slane %v38, 0
  %vm42 = vcmask 523264
  %v44 = vsel %vm42, %v14, 0
  %v47 = vsel %vm42, %v15, 0
  %v50 = vsel %vm42, %v16, 0
  %v53 = vsel %vm42, %v17, 0
  %v56 = vsel %vm42, %v18, 0
  %v59 = vsel %vm42, %v19, 0
  %v62 = vsel %vm42, %v20, 0
  %v65 = vsel %vm42, %v21, 0
  %v68 = vsel %vm42, %v22, 0
  %v71 = vsel %vm42, %v23, 0
  %v74 = vsel %vm42, %v24, 0
  %v77 = vsel %vm42, %v25, 0
  %v80 = vsel %vm42, %v26, 0
  %v83 = vsel %vm42, %v27, 0
  %v86 = vsel %vm42, %v28, 0
  %v89 = vsel %vm42, %v29, 0
  %91 = vmatpush.msra.mxu0 0.0
  %92 = vmatpush.msra.mxu0 0.0
  %93 = vmatpush.msra.mxu0 0.0
  %94 = vmatpush.msra.mxu0 0.0
  %95 = vmatpush.msra.mxu0 0.0
  %96 = vmatpush.msra.mxu0 0.0
  %97 = vmatpush.msra.mxu0 0.0
  %98 = vmatpush.msra.mxu0 0.0
  %99 = vmatpush.msra.mxu0 %v37
  %100 = vmatpush.msra.mxu0 %v36
  %101 = vmatpush.msra.mxu0 %v35
  %102 = vmatpush.msra.mxu0 %v34
  %103 = vmatpush.msra.mxu0 %v33
  %104 = vmatpush.msra.mxu0 %v32
  %105 = vmatpush.msra.mxu0 %v31
  %106 = vmatpush.msra.mxu0 %v30
  %107 = vmatmul.f32.gmra.mxu0 %v44
  %v108 = vpop.f32.mrf.mxu0
  %v109 = vadd.f32 %v40, %v108
  %110 = vmatmul.f32.gmra.mxu0 %v47
  %v111 = vpop.f32.mrf.mxu0
  %v112 = vadd.f32 %v40, %v111
  %113 = vmatmul.f32.gmra.mxu0 %v50
  %v114 = vpop.f32.mrf.mxu0
  %v115 = vadd.f32 %v40, %v114
  %116 = vmatmul.f32.gmra.mxu0 %v53
  %v117 = vpop.f32.mrf.mxu0
  %v118 = vadd.f32 %v40, %v117
  %119 = vmatmul.f32.gmra.mxu0 %v56
  %v120 = vpop.f32.mrf.mxu0
  %v121 = vadd.f32 %v40, %v120
  %122 = vmatmul.f32.gmra.mxu0 %v59
  %v123 = vpop.f32.mrf.mxu0
  %v124 = vadd.f32 %v40, %v123
  %125 = vmatmul.f32.gmra.mxu0 %v62
  %v126 = vpop.f32.mrf.mxu0
  %v127 = vadd.f32 %v40, %v126
  %128 = vmatmul.f32.gmra.mxu0 %v65
  %v129 = vpop.f32.mrf.mxu0
  %v130 = vadd.f32 %v40, %v129
  %131 = vmatmul.f32.gmra.mxu0 %v68
  %v132 = vpop.f32.mrf.mxu0
  %v133 = vadd.f32 %v40, %v132
  %134 = vmatmul.f32.gmra.mxu0 %v71
  %v135 = vpop.f32.mrf.mxu0
  %v136 = vadd.f32 %v40, %v135
  %137 = vmatmul.f32.gmra.mxu0 %v74
  %v138 = vpop.f32.mrf.mxu0
  %v139 = vadd.f32 %v40, %v138
  %140 = vmatmul.f32.gmra.mxu0 %v77
  %v141 = vpop.f32.mrf.mxu0
  %v142 = vadd.f32 %v40, %v141
  %143 = vmatmul.f32.gmra.mxu0 %v80
  %v144 = vpop.f32.mrf.mxu0
  %v145 = vadd.f32 %v40, %v144
  %146 = vmatmul.f32.gmra.mxu0 %v83
  %v147 = vpop.f32.mrf.mxu0
  %v148 = vadd.f32 %v40, %v147
  %149 = vmatmul.f32.gmra.mxu0 %v86
  %v150 = vpop.f32.mrf.mxu0
  %v151 = vadd.f32 %v40, %v150
  %152 = vmatmul.f32.gmra.mxu0 %v89
  %v153 = vpop.f32.mrf.mxu0
  %v154 = vadd.f32 %v40, %v153
  %155 = vdwg.mxu0
  %v156 = vmax.f32 %v109, 0.0
  %v157 = vmax.f32 %v112, 0.0
  %v158 = vmax.f32 %v115, 0.0
  %v159 = vmax.f32 %v118, 0.0
  %v160 = vmax.f32 %v121, 0.0
  %v161 = vmax.f32 %v124, 0.0
  %v162 = vmax.f32 %v127, 0.0
  %v163 = vmax.f32 %v130, 0.0
  %v164 = vmax.f32 %v133, 0.0
  %v165 = vmax.f32 %v136, 0.0
  %v166 = vmax.f32 %v139, 0.0
  %v167 = vmax.f32 %v142, 0.0
  %v168 = vmax.f32 %v145, 0.0
  %v169 = vmax.f32 %v148, 0.0
  %v170 = vmax.f32 %v151, 0.0
  %v171 = vmax.f32 %v154, 0.0
  %vm172 = vcmask 261120
  %173 = vst.msk [vmem:[%s3] sm:$0xff] %vm172, %v156
  %174 = vst.msk [vmem:[%s3 + $0x8] sm:$0xff] %vm172, %v157
  %175 = vst.msk [vmem:[%s3 + $0x10] sm:$0xff] %vm172, %v158
  %176 = vst.msk [vmem:[%s3 + $0x18] sm:$0xff] %vm172, %v159
  %177 = vst.msk [vmem:[%s3 + $0x20] sm:$0xff] %vm172, %v160
  %178 = vst.msk [vmem:[%s3 + $0x28] sm:$0xff] %vm172, %v161
  %179 = vst.msk [vmem:[%s3 + $0x30] sm:$0xff] %vm172, %v162
  %180 = vst.msk [vmem:[%s3 + $0x38] sm:$0xff] %vm172, %v163
  %181 = vst.msk [vmem:[%s3 + $0x40] sm:$0xff] %vm172, %v164
  %182 = vst.msk [vmem:[%s3 + $0x48] sm:$0xff] %vm172, %v165
  %183 = vst.msk [vmem:[%s3 + $0x50] sm:$0xff] %vm172, %v166
  %184 = vst.msk [vmem:[%s3 + $0x58] sm:$0xff] %vm172, %v167
  %185 = vst.msk [vmem:[%s3 + $0x60] sm:$0xff] %vm172, %v168
  %186 = vst.msk [vmem:[%s3 + $0x68] sm:$0xff] %vm172, %v169
  %187 = vst.msk [vmem:[%s3 + $0x70] sm:$0xff] %vm172, %v170
  %188 = vst.msk [vmem:[%s3 + $0x78] sm:$0xff] %vm172, %v171
  // Predicated region
  $region14: #{conv_vae_forward.6} parent=0 // pred_check
    _
  $region15: #{conv_vae_forward.6} parent=0 // pred_check_branch
    %190 = sbr.rel (0) target = $region17
  $region16: #{conv_vae_forward.6} parent=0 // pred_region
    _
  $region17: #{conv_vae_forward.6} parent=0 // pred_fallthru
    _
  // Predicated region
  $region18: #{conv_vae_forward.6} parent=0 // pred_check
    _
  $region19: #{conv_vae_forward.6} parent=0 // pred_check_branch
    %192 = sbr.rel (0) target = $region21
  $region20: #{conv_vae_forward.6} parent=0 // pred_region
    _
  $region21: #{conv_vae_forward.6} parent=0 // pred_fallthru
    _

// kernel: conv_vae_forward.7
$region0: #{conv_vae_forward.7}
  #allocation0 [shape = 'u32[]', space=smem, size = 0x4, offset = 0x4, fixed_abs, tag = 'smem constant byte address 0x4 - core index']
  #allocation1 [shape = 'u32[72,128]{1,0:T(1,128)}', space=vmem, size = 0x9000, scoped, tag = 'internal scratch']
  %s0 = inlined_call_operand.vmem [shape: f32[32,512], index: 0, kind: input, shape index: {}]
  %s1 = inlined_call_operand.vmem [shape: f32[512,64], index: 1, kind: input, shape index: {}]
  %s2 = inlined_call_operand.vmem [shape: f32[1,64], index: 2, kind: input, shape index: {}]
  %s3 = inlined_call_operand.vmem [shape: f32[32,64], index: 3, kind: output, shape index: {}]
  %s4 = sld [smem:[#allocation0]]
  $region22: #{conv_vae_forward.7} parent=0
    _
  %s6 = ssub.s32 1, %s4
  %s7 = scalar_select 0, %s6, %s4
  // Predicated region
  $region2: #{conv_vae_forward.7} parent=0 // pred_check
    _
  $region3: #{conv_vae_forward.7} parent=0 // pred_check_branch
    %9 = sbr.rel (0) target = $region5
  $region4: #{conv_vae_forward.7} parent=0 // pred_region
    _
  $region5: #{conv_vae_forward.7} parent=0 // pred_fallthru
    _
  // Predicated region
  $region6: #{conv_vae_forward.7} parent=0 // pred_check
    _
  $region7: #{conv_vae_forward.7} parent=0 // pred_check_branch
    %11 = sbr.rel (0) target = $region9
  $region8: #{conv_vae_forward.7} parent=0 // pred_region
    _
  $region9: #{conv_vae_forward.7} parent=0 // pred_fallthru
    _
  // Predicated region
  $region10: #{conv_vae_forward.7} parent=0 // pred_check
    _
  $region11: #{conv_vae_forward.7} parent=0 // pred_check_branch
    %13 = sbr.rel (0) target = $region13
  $region12: #{conv_vae_forward.7} parent=0 // pred_region
    _
  $region13: #{conv_vae_forward.7} parent=0 // pred_fallthru
    _
  %v14 = vld [vmem:[%s0] sm:$0xff]
  %v15 = vld [vmem:[%s0 + $0x8] sm:$0xff]
  %v16 = vld [vmem:[%s0 + $0x10] sm:$0xff]
  %v17 = vld [vmem:[%s0 + $0x18] sm:$0xff]
  %v18 = vld [vmem:[%s0 + $0x20] sm:$0xff]
  %v19 = vld [vmem:[%s0 + $0x28] sm:$0xff]
  %v20 = vld [vmem:[%s0 + $0x30] sm:$0xff]
  %v21 = vld [vmem:[%s0 + $0x38] sm:$0xff]
  %v22 = vld [vmem:[%s0 + $0x40] sm:$0xff]
  %v23 = vld [vmem:[%s0 + $0x48] sm:$0xff]
  %v24 = vld [vmem:[%s0 + $0x50] sm:$0xff]
  %v25 = vld [vmem:[%s0 + $0x58] sm:$0xff]
  %v26 = vld [vmem:[%s0 + $0x60] sm:$0xff]
  %v27 = vld [vmem:[%s0 + $0x68] sm:$0xff]
  %v28 = vld [vmem:[%s0 + $0x70] sm:$0xff]
  %v29 = vld [vmem:[%s0 + $0x78] sm:$0xff]
  %v30 = vld [vmem:[%s1] sm:$0xff]
  %v31 = vld [vmem:[%s1 + $0x8] sm:$0xff]
  %v32 = vld [vmem:[%s1 + $0x10] sm:$0xff]
  %v33 = vld [vmem:[%s1 + $0x18] sm:$0xff]
  %v34 = vld [vmem:[%s1 + $0x20] sm:$0xff]
  %v35 = vld [vmem:[%s1 + $0x28] sm:$0xff]
  %v36 = vld [vmem:[%s1 + $0x30] sm:$0xff]
  %v37 = vld [vmem:[%s1 + $0x38] sm:$0xff]
  %v38 = vld [vmem:[%s1 + $0x40] sm:$0xff]
  %v39 = vld [vmem:[%s1 + $0x48] sm:$0xff]
  %v40 = vld [vmem:[%s1 + $0x50] sm:$0xff]
  %v41 = vld [vmem:[%s1 + $0x58] sm:$0xff]
  %v42 = vld [vmem:[%s1 + $0x60] sm:$0xff]
  %v43 = vld [vmem:[%s1 + $0x68] sm:$0xff]
  %v44 = vld [vmem:[%s1 + $0x70] sm:$0xff]
  %v45 = vld [vmem:[%s1 + $0x78] sm:$0xff]
  %v46 = vld [vmem:[%s1 + $0x80] sm:$0xff]
  %v47 = vld [vmem:[%s1 + $0x88] sm:$0xff]
  %v48 = vld [vmem:[%s1 + $0x90] sm:$0xff]
  %v49 = vld [vmem:[%s1 + $0x98] sm:$0xff]
  %v50 = vld [vmem:[%s1 + $0xa0] sm:$0xff]
  %v51 = vld [vmem:[%s1 + $0xa8] sm:$0xff]
  %v52 = vld [vmem:[%s1 + $0xb0] sm:$0xff]
  %v53 = vld [vmem:[%s1 + $0xb8] sm:$0xff]
  %v54 = vld [vmem:[%s1 + $0xc0] sm:$0xff]
  %v55 = vld [vmem:[%s1 + $0xc8] sm:$0xff]
  %v56 = vld [vmem:[%s1 + $0xd0] sm:$0xff]
  %v57 = vld [vmem:[%s1 + $0xd8] sm:$0xff]
  %v58 = vld [vmem:[%s1 + $0xe0] sm:$0xff]
  %v59 = vld [vmem:[%s1 + $0xe8] sm:$0xff]
  %v60 = vld [vmem:[%s1 + $0xf0] sm:$0xff]
  %v61 = vld [vmem:[%s1 + $0xf8] sm:$0xff]
  %v62 = vld [vmem:[%s1 + $0x100] sm:$0xff]
  %v63 = vld [vmem:[%s1 + $0x108] sm:$0xff]
  %v64 = vld [vmem:[%s1 + $0x110] sm:$0xff]
  %v65 = vld [vmem:[%s1 + $0x118] sm:$0xff]
  %v66 = vld [vmem:[%s1 + $0x120] sm:$0xff]
  %v67 = vld [vmem:[%s1 + $0x128] sm:$0xff]
  %v68 = vld [vmem:[%s1 + $0x130] sm:$0xff]
  %v69 = vld [vmem:[%s1 + $0x138] sm:$0xff]
  %v70 = vld [vmem:[%s1 + $0x140] sm:$0xff]
  %v71 = vld [vmem:[%s1 + $0x148] sm:$0xff]
  %v72 = vld [vmem:[%s1 + $0x150] sm:$0xff]
  %v73 = vld [vmem:[%s1 + $0x158] sm:$0xff]
  %v74 = vld [vmem:[%s1 + $0x160] sm:$0xff]
  %v75 = vld [vmem:[%s1 + $0x168] sm:$0xff]
  %v76 = vld [vmem:[%s1 + $0x170] sm:$0xff]
  %v77 = vld [vmem:[%s1 + $0x178] sm:$0xff]
  %v78 = vld [vmem:[%s1 + $0x180] sm:$0xff]
  %v79 = vld [vmem:[%s1 + $0x188] sm:$0xff]
  %v80 = vld [vmem:[%s1 + $0x190] sm:$0xff]
  %v81 = vld [vmem:[%s1 + $0x198] sm:$0xff]
  %v82 = vld [vmem:[%s1 + $0x1a0] sm:$0xff]
  %v83 = vld [vmem:[%s1 + $0x1a8] sm:$0xff]
  %v84 = vld [vmem:[%s1 + $0x1b0] sm:$0xff]
  %v85 = vld [vmem:[%s1 + $0x1b8] sm:$0xff]
  %v86 = vld [vmem:[%s1 + $0x1c0] sm:$0xff]
  %v87 = vld [vmem:[%s1 + $0x1c8] sm:$0xff]
  %v88 = vld [vmem:[%s1 + $0x1d0] sm:$0xff]
  %v89 = vld [vmem:[%s1 + $0x1d8] sm:$0xff]
  %v90 = vld [vmem:[%s1 + $0x1e0] sm:$0xff]
  %v91 = vld [vmem:[%s1 + $0x1e8] sm:$0xff]
  %v92 = vld [vmem:[%s1 + $0x1f0] sm:$0xff]
  %v93 = vld [vmem:[%s1 + $0x1f8] sm:$0xff]
  %v94 = vld [vmem:[%s2] sm:$0x1]
  %v96 = vperm.slane %v94, 0
  %98 = vmatpush.msra.mxu0 %v45
  %99 = vmatpush.msra.mxu0 %v44
  %100 = vmatpush.msra.mxu0 %v43
  %101 = vmatpush.msra.mxu0 %v42
  %102 = vmatpush.msra.mxu0 %v41
  %103 = vmatpush.msra.mxu0 %v40
  %104 = vmatpush.msra.mxu0 %v39
  %105 = vmatpush.msra.mxu0 %v38
  %106 = vmatpush.msra.mxu0 %v37
  %107 = vmatpush.msra.mxu0 %v36
  %108 = vmatpush.msra.mxu0 %v35
  %109 = vmatpush.msra.mxu0 %v34
  %110 = vmatpush.msra.mxu0 %v33
  %111 = vmatpush.msra.mxu0 %v32
  %112 = vmatpush.msra.mxu0 %v31
  %113 = vmatpush.msra.mxu0 %v30
  %114 = vmatmul.f32.gmra.mxu0 %v14
  %v115 = vpop.f32.mrf.mxu0
  %v116 = vadd.f32 %v96, %v115
  %117 = vmatmul.f32.gmra.mxu0 %v18
  %v118 = vpop.f32.mrf.mxu0
  %v119 = vadd.f32 %v96, %v118
  %120 = vmatmul.f32.gmra.mxu0 %v22
  %v121 = vpop.f32.mrf.mxu0
  %v122 = vadd.f32 %v96, %v121
  %123 = vmatmul.f32.gmra.mxu0 %v26
  %v124 = vpop.f32.mrf.mxu0
  %v125 = vadd.f32 %v96, %v124
  %126 = vdwg.mxu0
  %127 = vmatpush.msra.mxu0 %v61
  %128 = vmatpush.msra.mxu0 %v60
  %129 = vmatpush.msra.mxu0 %v59
  %130 = vmatpush.msra.mxu0 %v58
  %131 = vmatpush.msra.mxu0 %v57
  %132 = vmatpush.msra.mxu0 %v56
  %133 = vmatpush.msra.mxu0 %v55
  %134 = vmatpush.msra.mxu0 %v54
  %135 = vmatpush.msra.mxu0 %v53
  %136 = vmatpush.msra.mxu0 %v52
  %137 = vmatpush.msra.mxu0 %v51
  %138 = vmatpush.msra.mxu0 %v50
  %139 = vmatpush.msra.mxu0 %v49
  %140 = vmatpush.msra.mxu0 %v48
  %141 = vmatpush.msra.mxu0 %v47
  %142 = vmatpush.msra.mxu0 %v46
  %143 = vmatmul.f32.gmra.mxu0 %v15
  %v144 = vpop.f32.mrf.mxu0
  %v145 = vadd.f32 %v116, %v144
  %146 = vmatmul.f32.gmra.mxu0 %v19
  %v147 = vpop.f32.mrf.mxu0
  %v148 = vadd.f32 %v119, %v147
  %149 = vmatmul.f32.gmra.mxu0 %v23
  %v150 = vpop.f32.mrf.mxu0
  %v151 = vadd.f32 %v122, %v150
  %152 = vmatmul.f32.gmra.mxu0 %v27
  %v153 = vpop.f32.mrf.mxu0
  %v154 = vadd.f32 %v125, %v153
  %155 = vdwg.mxu0
  %156 = vmatpush.msra.mxu0 %v77
  %157 = vmatpush.msra.mxu0 %v76
  %158 = vmatpush.msra.mxu0 %v75
  %159 = vmatpush.msra.mxu0 %v74
  %160 = vmatpush.msra.mxu0 %v73
  %161 = vmatpush.msra.mxu0 %v72
  %162 = vmatpush.msra.mxu0 %v71
  %163 = vmatpush.msra.mxu0 %v70
  %164 = vmatpush.msra.mxu0 %v69
  %165 = vmatpush.msra.mxu0 %v68
  %166 = vmatpush.msra.mxu0 %v67
  %167 = vmatpush.msra.mxu0 %v66
  %168 = vmatpush.msra.mxu0 %v65
  %169 = vmatpush.msra.mxu0 %v64
  %170 = vmatpush.msra.mxu0 %v63
  %171 = vmatpush.msra.mxu0 %v62
  %172 = vmatmul.f32.gmra.mxu0 %v16
  %v173 = vpop.f32.mrf.mxu0
  %v174 = vadd.f32 %v145, %v173
  %175 = vmatmul.f32.gmra.mxu0 %v20
  %v176 = vpop.f32.mrf.mxu0
  %v177 = vadd.f32 %v148, %v176
  %178 = vmatmul.f32.gmra.mxu0 %v24
  %v179 = vpop.f32.mrf.mxu0
  %v180 = vadd.f32 %v151, %v179
  %181 = vmatmul.f32.gmra.mxu0 %v28
  %v182 = vpop.f32.mrf.mxu0
  %v183 = vadd.f32 %v154, %v182
  %184 = vdwg.mxu0
  %185 = vmatpush.msra.mxu0 %v93
  %186 = vmatpush.msra.mxu0 %v92
  %187 = vmatpush.msra.mxu0 %v91
  %188 = vmatpush.msra.mxu0 %v90
  %189 = vmatpush.msra.mxu0 %v89
  %190 = vmatpush.msra.mxu0 %v88
  %191 = vmatpush.msra.mxu0 %v87
  %192 = vmatpush.msra.mxu0 %v86
  %193 = vmatpush.msra.mxu0 %v85
  %194 = vmatpush.msra.mxu0 %v84
  %195 = vmatpush.msra.mxu0 %v83
  %196 = vmatpush.msra.mxu0 %v82
  %197 = vmatpush.msra.mxu0 %v81
  %198 = vmatpush.msra.mxu0 %v80
  %199 = vmatpush.msra.mxu0 %v79
  %200 = vmatpush.msra.mxu0 %v78
  %201 = vmatmul.f32.gmra.mxu0 %v17
  %v202 = vpop.f32.mrf.mxu0
  %v203 = vadd.f32 %v174, %v202
  %204 = vmatmul.f32.gmra.mxu0 %v21
  %v205 = vpop.f32.mrf.mxu0
  %v206 = vadd.f32 %v177, %v205
  %207 = vmatmul.f32.gmra.mxu0 %v25
  %v208 = vpop.f32.mrf.mxu0
  %v209 = vadd.f32 %v180, %v208
  %210 = vmatmul.f32.gmra.mxu0 %v29
  %v211 = vpop.f32.mrf.mxu0
  %v212 = vadd.f32 %v183, %v211
  %213 = vdwg.mxu0
  %v214 = vmax.f32 %v203, 0.0
  %v215 = vmax.f32 %v206, 0.0
  %v216 = vmax.f32 %v209, 0.0
  %v217 = vmax.f32 %v212, 0.0
  %vm218 = vcmask 523264
  %219 = vst.msk [vmem:[%s3] sm:$0xff] %vm218, %v214
  %220 = vst.msk [vmem:[%s3 + $0x8] sm:$0xff] %vm218, %v215
  %221 = vst.msk [vmem:[%s3 + $0x10] sm:$0xff] %vm218, %v216
  %222 = vst.msk [vmem:[%s3 + $0x18] sm:$0xff] %vm218, %v217
  // Predicated region
  $region14: #{conv_vae_forward.7} parent=0 // pred_check
    _
  $region15: #{conv_vae_forward.7} parent=0 // pred_check_branch
    %224 = sbr.rel (0) target = $region17
  $region16: #{conv_vae_forward.7} parent=0 // pred_region
    _
  $region17: #{conv_vae_forward.7} parent=0 // pred_fallthru
    _
  // Predicated region
  $region18: #{conv_vae_forward.7} parent=0 // pred_check
    _
  $region19: #{conv_vae_forward.7} parent=0 // pred_check_branch
    %226 = sbr.rel (0) target = $region21
  $region20: #{conv_vae_forward.7} parent=0 // pred_region
    _
  $region21: #{conv_vae_forward.7} parent=0 // pred_fallthru
    _

// kernel: conv_vae_forward.9
$region0: #{conv_vae_forward.9}
  #allocation0 [shape = 'u32[]', space=smem, size = 0x4, offset = 0x4, fixed_abs, tag = 'smem constant byte address 0x4 - core index']
  #allocation1 [shape = 'u32[72,128]{1,0:T(1,128)}', space=vmem, size = 0x9000, scoped, tag = 'internal scratch']
  %s0 = inlined_call_operand.vmem [shape: f32[18,512], index: 0, kind: input, shape index: {}]
  %s1 = inlined_call_operand.vmem [shape: f32[512,256], index: 1, kind: input, shape index: {}]
  %s2 = inlined_call_operand.vmem [shape: f32[1,256], index: 2, kind: input, shape index: {}]
  %s3 = inlined_call_operand.vmem [shape: f32[18,256], index: 3, kind: output, shape index: {}]
  %s4 = sld [smem:[#allocation0]]
  $region22: #{conv_vae_forward.9} parent=0
    _
  %s6 = ssub.s32 1, %s4
  %s7 = scalar_select 0, %s6, %s4
  // Predicated region
  $region2: #{conv_vae_forward.9} parent=0 // pred_check
    _
  $region3: #{conv_vae_forward.9} parent=0 // pred_check_branch
    %9 = sbr.rel (0) target = $region5
  $region4: #{conv_vae_forward.9} parent=0 // pred_region
    _
  $region5: #{conv_vae_forward.9} parent=0 // pred_fallthru
    _
  // Predicated region
  $region6: #{conv_vae_forward.9} parent=0 // pred_check
    _
  $region7: #{conv_vae_forward.9} parent=0 // pred_check_branch
    %11 = sbr.rel (0) target = $region9
  $region8: #{conv_vae_forward.9} parent=0 // pred_region
    _
  $region9: #{conv_vae_forward.9} parent=0 // pred_fallthru
    _
  // Predicated region
  $region10: #{conv_vae_forward.9} parent=0 // pred_check
    _
  $region11: #{conv_vae_forward.9} parent=0 // pred_check_branch
    %13 = sbr.rel (0) target = $region13
  $region12: #{conv_vae_forward.9} parent=0 // pred_region
    _
  $region13: #{conv_vae_forward.9} parent=0 // pred_fallthru
    _
  %v14 = vld [vmem:[%s0] sm:$0xff]
  %v15 = vld [vmem:[%s0 + $0x8] sm:$0xff]
  %v16 = vld [vmem:[%s0 + $0x10] sm:$0xff]
  %v17 = vld [vmem:[%s0 + $0x18] sm:$0xff]
  %v18 = vld [vmem:[%s0 + $0x20] sm:$0xff]
  %v19 = vld [vmem:[%s0 + $0x28] sm:$0xff]
  %v20 = vld [vmem:[%s0 + $0x30] sm:$0xff]
  %v21 = vld [vmem:[%s0 + $0x38] sm:$0xff]
  %v22 = vld [vmem:[%s0 + $0x40] sm:$0x3]
  %v23 = vld [vmem:[%s0 + $0x48] sm:$0x3]
  %v24 = vld [vmem:[%s0 + $0x50] sm:$0x3]
  %v25 = vld [vmem:[%s0 + $0x58] sm:$0x3]
  %v26 = vld [vmem:[%s1] sm:$0xff]
  %v27 = vld [vmem:[%s1 + $0x8] sm:$0xff]
  %v28 = vld [vmem:[%s1 + $0x10] sm:$0xff]
  %v29 = vld [vmem:[%s1 + $0x18] sm:$0xff]
  %v30 = vld [vmem:[%s1 + $0x20] sm:$0xff]
  %v31 = vld [vmem:[%s1 + $0x28] sm:$0xff]
  %v32 = vld [vmem:[%s1 + $0x30] sm:$0xff]
  %v33 = vld [vmem:[%s1 + $0x38] sm:$0xff]
  %v34 = vld [vmem:[%s1 + $0x40] sm:$0xff]
  %v35 = vld [vmem:[%s1 + $0x48] sm:$0xff]
  %v36 = vld [vmem:[%s1 + $0x50] sm:$0xff]
  %v37 = vld [vmem:[%s1 + $0x58] sm:$0xff]
  %v38 = vld [vmem:[%s1 + $0x60] sm:$0xff]
  %v39 = vld [vmem:[%s1 + $0x68] sm:$0xff]
  %v40 = vld [vmem:[%s1 + $0x70] sm:$0xff]
  %v41 = vld [vmem:[%s1 + $0x78] sm:$0xff]
  %v42 = vld [vmem:[%s1 + $0x80] sm:$0xff]
  %v43 = vld [vmem:[%s1 + $0x88] sm:$0xff]
  %v44 = vld [vmem:[%s1 + $0x90] sm:$0xff]
  %v45 = vld [vmem:[%s1 + $0x98] sm:$0xff]
  %v46 = vld [vmem:[%s1 + $0xa0] sm:$0xff]
  %v47 = vld [vmem:[%s1 + $0xa8] sm:$0xff]
  %v48 = vld [vmem:[%s1 + $0xb0] sm:$0xff]
  %v49 = vld [vmem:[%s1 + $0xb8] sm:$0xff]
  %v50 = vld [vmem:[%s1 + $0xc0] sm:$0xff]
  %v51 = vld [vmem:[%s1 + $0xc8] sm:$0xff]
  %v52 = vld [vmem:[%s1 + $0xd0] sm:$0xff]
  %v53 = vld [vmem:[%s1 + $0xd8] sm:$0xff]
  %v54 = vld [vmem:[%s1 + $0xe0] sm:$0xff]
  %v55 = vld [vmem:[%s1 + $0xe8] sm:$0xff]
  %v56 = vld [vmem:[%s1 + $0xf0] sm:$0xff]
  %v57 = vld [vmem:[%s1 + $0xf8] sm:$0xff]
  %v58 = vld [vmem:[%s1 + $0x100] sm:$0xff]
  %v59 = vld [vmem:[%s1 + $0x108] sm:$0xff]
  %v60 = vld [vmem:[%s1 + $0x110] sm:$0xff]
  %v61 = vld [vmem:[%s1 + $0x118] sm:$0xff]
  %v62 = vld [vmem:[%s1 + $0x120] sm:$0xff]
  %v63 = vld [vmem:[%s1 + $0x128] sm:$0xff]
  %v64 = vld [vmem:[%s1 + $0x130] sm:$0xff]
  %v65 = vld [vmem:[%s1 + $0x138] sm:$0xff]
  %v66 = vld [vmem:[%s1 + $0x140] sm:$0xff]
  %v67 = vld [vmem:[%s1 + $0x148] sm:$0xff]
  %v68 = vld [vmem:[%s1 + $0x150] sm:$0xff]
  %v69 = vld [vmem:[%s1 + $0x158] sm:$0xff]
  %v70 = vld [vmem:[%s1 + $0x160] sm:$0xff]
  %v71 = vld [vmem:[%s1 + $0x168] sm:$0xff]
  %v72 = vld [vmem:[%s1 + $0x170] sm:$0xff]
  %v73 = vld [vmem:[%s1 + $0x178] sm:$0xff]
  %v74 = vld [vmem:[%s1 + $0x180] sm:$0xff]
  %v75 = vld [vmem:[%s1 + $0x188] sm:$0xff]
  %v76 = vld [vmem:[%s1 + $0x190] sm:$0xff]
  %v77 = vld [vmem:[%s1 + $0x198] sm:$0xff]
  %v78 = vld [vmem:[%s1 + $0x1a0] sm:$0xff]
  %v79 = vld [vmem:[%s1 + $0x1a8] sm:$0xff]
  %v80 = vld [vmem:[%s1 + $0x1b0] sm:$0xff]
  %v81 = vld [vmem:[%s1 + $0x1b8] sm:$0xff]
  %v82 = vld [vmem:[%s1 + $0x1c0] sm:$0xff]
  %v83 = vld [vmem:[%s1 + $0x1c8] sm:$0xff]
  %v84 = vld [vmem:[%s1 + $0x1d0] sm:$0xff]
  %v85 = vld [vmem:[%s1 + $0x1d8] sm:$0xff]
  %v86 = vld [vmem:[%s1 + $0x1e0] sm:$0xff]
  %v87 = vld [vmem:[%s1 + $0x1e8] sm:$0xff]
  %v88 = vld [vmem:[%s1 + $0x1f0] sm:$0xff]
  %v89 = vld [vmem:[%s1 + $0x1f8] sm:$0xff]
  %v90 = vld [vmem:[%s1 + $0x200] sm:$0xff]
  %v91 = vld [vmem:[%s1 + $0x208] sm:$0xff]
  %v92 = vld [vmem:[%s1 + $0x210] sm:$0xff]
  %v93 = vld [vmem:[%s1 + $0x218] sm:$0xff]
  %v94 = vld [vmem:[%s1 + $0x220] sm:$0xff]
  %v95 = vld [vmem:[%s1 + $0x228] sm:$0xff]
  %v96 = vld [vmem:[%s1 + $0x230] sm:$0xff]
  %v97 = vld [vmem:[%s1 + $0x238] sm:$0xff]
  %v98 = vld [vmem:[%s1 + $0x240] sm:$0xff]
  %v99 = vld [vmem:[%s1 + $0x248] sm:$0xff]
  %v100 = vld [vmem:[%s1 + $0x250] sm:$0xff]
  %v101 = vld [vmem:[%s1 + $0x258] sm:$0xff]
  %v102 = vld [vmem:[%s1 + $0x260] sm:$0xff]
  %v103 = vld [vmem:[%s1 + $0x268] sm:$0xff]
  %v104 = vld [vmem:[%s1 + $0x270] sm:$0xff]
  %v105 = vld [vmem:[%s1 + $0x278] sm:$0xff]
  %v106 = vld [vmem:[%s1 + $0x280] sm:$0xff]
  %v107 = vld [vmem:[%s1 + $0x288] sm:$0xff]
  %v108 = vld [vmem:[%s1 + $0x290] sm:$0xff]
  %v109 = vld [vmem:[%s1 + $0x298] sm:$0xff]
  %v110 = vld [vmem:[%s1 + $0x2a0] sm:$0xff]
  %v111 = vld [vmem:[%s1 + $0x2a8] sm:$0xff]
  %v112 = vld [vmem:[%s1 + $0x2b0] sm:$0xff]
  %v113 = vld [vmem:[%s1 + $0x2b8] sm:$0xff]
  %v114 = vld [vmem:[%s1 + $0x2c0] sm:$0xff]
  %v115 = vld [vmem:[%s1 + $0x2c8] sm:$0xff]
  %v116 = vld [vmem:[%s1 + $0x2d0] sm:$0xff]
  %v117 = vld [vmem:[%s1 + $0x2d8] sm:$0xff]
  %v118 = vld [vmem:[%s1 + $0x2e0] sm:$0xff]
  %v119 = vld [vmem:[%s1 + $0x2e8] sm:$0xff]
  %v120 = vld [vmem:[%s1 + $0x2f0] sm:$0xff]
  %v121 = vld [vmem:[%s1 + $0x2f8] sm:$0xff]
  %v122 = vld [vmem:[%s1 + $0x300] sm:$0xff]
  %v123 = vld [vmem:[%s1 + $0x308] sm:$0xff]
  %v124 = vld [vmem:[%s1 + $0x310] sm:$0xff]
  %v125 = vld [vmem:[%s1 + $0x318] sm:$0xff]
  %v126 = vld [vmem:[%s1 + $0x320] sm:$0xff]
  %v127 = vld [vmem:[%s1 + $0x328] sm:$0xff]
  %v128 = vld [vmem:[%s1 + $0x330] sm:$0xff]
  %v129 = vld [vmem:[%s1 + $0x338] sm:$0xff]
  %v130 = vld [vmem:[%s1 + $0x340] sm:$0xff]
  %v131 = vld [vmem:[%s1 + $0x348] sm:$0xff]
  %v132 = vld [vmem:[%s1 + $0x350] sm:$0xff]
  %v133 = vld [vmem:[%s1 + $0x358] sm:$0xff]
  %v134 = vld [vmem:[%s1 + $0x360] sm:$0xff]
  %v135 = vld [vmem:[%s1 + $0x368] sm:$0xff]
  %v136 = vld [vmem:[%s1 + $0x370] sm:$0xff]
  %v137 = vld [vmem:[%s1 + $0x378] sm:$0xff]
  %v138 = vld [vmem:[%s1 + $0x380] sm:$0xff]
  %v139 = vld [vmem:[%s1 + $0x388] sm:$0xff]
  %v140 = vld [vmem:[%s1 + $0x390] sm:$0xff]
  %v141 = vld [vmem:[%s1 + $0x398] sm:$0xff]
  %v142 = vld [vmem:[%s1 + $0x3a0] sm:$0xff]
  %v143 = vld [vmem:[%s1 + $0x3a8] sm:$0xff]
  %v144 = vld [vmem:[%s1 + $0x3b0] sm:$0xff]
  %v145 = vld [vmem:[%s1 + $0x3b8] sm:$0xff]
  %v146 = vld [vmem:[%s1 + $0x3c0] sm:$0xff]
  %v147 = vld [vmem:[%s1 + $0x3c8] sm:$0xff]
  %v148 = vld [vmem:[%s1 + $0x3d0] sm:$0xff]
  %v149 = vld [vmem:[%s1 + $0x3d8] sm:$0xff]
  %v150 = vld [vmem:[%s1 + $0x3e0] sm:$0xff]
  %v151 = vld [vmem:[%s1 + $0x3e8] sm:$0xff]
  %v152 = vld [vmem:[%s1 + $0x3f0] sm:$0xff]
  %v153 = vld [vmem:[%s1 + $0x3f8] sm:$0xff]
  %v154 = vld [vmem:[%s2] sm:$0x3]
  %v156 = vperm.slane %v154, 0
  %v157 = vperm.slane %v154, 1
  %160 = vmatpush.msra.mxu0 %v56
  %161 = vmatpush.msra.mxu0 %v54
  %162 = vmatpush.msra.mxu0 %v52
  %163 = vmatpush.msra.mxu0 %v50
  %164 = vmatpush.msra.mxu0 %v48
  %165 = vmatpush.msra.mxu0 %v46
  %166 = vmatpush.msra.mxu0 %v44
  %167 = vmatpush.msra.mxu0 %v42
  %168 = vmatpush.msra.mxu0 %v40
  %169 = vmatpush.msra.mxu0 %v38
  %170 = vmatpush.msra.mxu0 %v36
  %171 = vmatpush.msra.mxu0 %v34
  %172 = vmatpush.msra.mxu0 %v32
  %173 = vmatpush.msra.mxu0 %v30
  %174 = vmatpush.msra.mxu0 %v28
  %175 = vmatpush.msra.mxu0 %v26
  %176 = vmatmul.f32.gmra.mxu0 %v14
  %v177 = vpop.f32.mrf.mxu0
  %v178 = vadd.f32 %v156, %v177
  %179 = vmatmul.f32.gmra.mxu0 %v18
  %v180 = vpop.f32.mrf.mxu0
  %v181 = vadd.f32 %v156, %v180
  %182 = vmatmul.f32.gmra.mxu0 %v22
  %v183 = vpop.f32.mrf.mxu0
  %v184 = vadd.f32 %v156, %v183
  %185 = vdwg.mxu0
  %186 = vmatpush.msra.mxu0 %v88
  %187 = vmatpush.msra.mxu0 %v86
  %188 = vmatpush.msra.mxu0 %v84
  %189 = vmatpush.msra.mxu0 %v82
  %190 = vmatpush.msra.mxu0 %v80
  %191 = vmatpush.msra.mxu0 %v78
  %192 = vmatpush.msra.mxu0 %v76
  %193 = vmatpush.msra.mxu0 %v74
  %194 = vmatpush.msra.mxu0 %v72
  %195 = vmatpush.msra.mxu0 %v70
  %196 = vmatpush.msra.mxu0 %v68
  %197 = vmatpush.msra.mxu0 %v66
  %198 = vmatpush.msra.mxu0 %v64
  %199 = vmatpush.msra.mxu0 %v62
  %200 = vmatpush.msra.mxu0 %v60
  %201 = vmatpush.msra.mxu0 %v58
  %202 = vmatmul.f32.gmra.mxu0 %v15
  %v203 = vpop.f32.mrf.mxu0
  %v204 = vadd.f32 %v178, %v203
  %205 = vmatmul.f32.gmra.mxu0 %v19
  %v206 = vpop.f32.mrf.mxu0
  %v207 = vadd.f32 %v181, %v206
  %208 = vmatmul.f32.gmra.mxu0 %v23
  %v209 = vpop.f32.mrf.mxu0
  %v210 = vadd.f32 %v184, %v209
  %211 = vdwg.mxu0
  %212 = vmatpush.msra.mxu0 %v120
  %213 = vmatpush.msra.mxu0 %v118
  %214 = vmatpush.msra.mxu0 %v116
  %215 = vmatpush.msra.mxu0 %v114
  %216 = vmatpush.msra.mxu0 %v112
  %217 = vmatpush.msra.mxu0 %v110
  %218 = vmatpush.msra.mxu0 %v108
  %219 = vmatpush.msra.mxu0 %v106
  %220 = vmatpush.msra.mxu0 %v104
  %221 = vmatpush.msra.mxu0 %v102
  %222 = vmatpush.msra.mxu0 %v100
  %223 = vmatpush.msra.mxu0 %v98
  %224 = vmatpush.msra.mxu0 %v96
  %225 = vmatpush.msra.mxu0 %v94
  %226 = vmatpush.msra.mxu0 %v92
  %227 = vmatpush.msra.mxu0 %v90
  %228 = vmatmul.f32.gmra.mxu0 %v16
  %v229 = vpop.f32.mrf.mxu0
  %v230 = vadd.f32 %v204, %v229
  %231 = vmatmul.f32.gmra.mxu0 %v20
  %v232 = vpop.f32.mrf.mxu0
  %v233 = vadd.f32 %v207, %v232
  %234 = vmatmul.f32.gmra.mxu0 %v24
  %v235 = vpop.f32.mrf.mxu0
  %v236 = vadd.f32 %v210, %v235
  %237 = vdwg.mxu0
  %238 = vmatpush.msra.mxu0 %v152
  %239 = vmatpush.msra.mxu0 %v150
  %240 = vmatpush.msra.mxu0 %v148
  %241 = vmatpush.msra.mxu0 %v146
  %242 = vmatpush.msra.mxu0 %v144
  %243 = vmatpush.msra.mxu0 %v142
  %244 = vmatpush.msra.mxu0 %v140
  %245 = vmatpush.msra.mxu0 %v138
  %246 = vmatpush.msra.mxu0 %v136
  %247 = vmatpush.msra.mxu0 %v134
  %248 = vmatpush.msra.mxu0 %v132
  %249 = vmatpush.msra.mxu0 %v130
  %250 = vmatpush.msra.mxu0 %v128
  %251 = vmatpush.msra.mxu0 %v126
  %252 = vmatpush.msra.mxu0 %v124
  %253 = vmatpush.msra.mxu0 %v122
  %254 = vmatmul.f32.gmra.mxu0 %v17
  %v255 = vpop.f32.mrf.mxu0
  %v256 = vadd.f32 %v230, %v255
  %257 = vmatmul.f32.gmra.mxu0 %v21
  %v258 = vpop.f32.mrf.mxu0
  %v259 = vadd.f32 %v233, %v258
  %260 = vmatmul.f32.gmra.mxu0 %v25
  %v261 = vpop.f32.mrf.mxu0
  %v262 = vadd.f32 %v236, %v261
  %263 = vdwg.mxu0
  %264 = vmatpush.msra.mxu0 %v57
  %265 = vmatpush.msra.mxu0 %v55
  %266 = vmatpush.msra.mxu0 %v53
  %267 = vmatpush.msra.mxu0 %v51
  %268 = vmatpush.msra.mxu0 %v49
  %269 = vmatpush.msra.mxu0 %v47
  %270 = vmatpush.msra.mxu0 %v45
  %271 = vmatpush.msra.mxu0 %v43
  %272 = vmatpush.msra.mxu0 %v41
  %273 = vmatpush.msra.mxu0 %v39
  %274 = vmatpush.msra.mxu0 %v37
  %275 = vmatpush.msra.mxu0 %v35
  %276 = vmatpush.msra.mxu0 %v33
  %277 = vmatpush.msra.mxu0 %v31
  %278 = vmatpush.msra.mxu0 %v29
  %279 = vmatpush.msra.mxu0 %v27
  %280 = vmatmul.f32.gmra.mxu0 %v14
  %v281 = vpop.f32.mrf.mxu0
  %v282 = vadd.f32 %v157, %v281
  %283 = vmatmul.f32.gmra.mxu0 %v18
  %v284 = vpop.f32.mrf.mxu0
  %v285 = vadd.f32 %v157, %v284
  %286 = vmatmul.f32.gmra.mxu0 %v22
  %v287 = vpop.f32.mrf.mxu0
  %v288 = vadd.f32 %v157, %v287
  %289 = vdwg.mxu0
  %290 = vmatpush.msra.mxu0 %v89
  %291 = vmatpush.msra.mxu0 %v87
  %292 = vmatpush.msra.mxu0 %v85
  %293 = vmatpush.msra.mxu0 %v83
  %294 = vmatpush.msra.mxu0 %v81
  %295 = vmatpush.msra.mxu0 %v79
  %296 = vmatpush.msra.mxu0 %v77
  %297 = vmatpush.msra.mxu0 %v75
  %298 = vmatpush.msra.mxu0 %v73
  %299 = vmatpush.msra.mxu0 %v71
  %300 = vmatpush.msra.mxu0 %v69
  %301 = vmatpush.msra.mxu0 %v67
  %302 = vmatpush.msra.mxu0 %v65
  %303 = vmatpush.msra.mxu0 %v63
  %304 = vmatpush.msra.mxu0 %v61
  %305 = vmatpush.msra.mxu0 %v59
  %306 = vmatmul.f32.gmra.mxu0 %v15
  %v307 = vpop.f32.mrf.mxu0
  %v308 = vadd.f32 %v282, %v307
  %309 = vmatmul.f32.gmra.mxu0 %v19
  %v310 = vpop.f32.mrf.mxu0
  %v311 = vadd.f32 %v285, %v310
  %312 = vmatmul.f32.gmra.mxu0 %v23
  %v313 = vpop.f32.mrf.mxu0
  %v314 = vadd.f32 %v288, %v313
  %315 = vdwg.mxu0
  %316 = vmatpush.msra.mxu0 %v121
  %317 = vmatpush.msra.mxu0 %v119
  %318 = vmatpush.msra.mxu0 %v117
  %319 = vmatpush.msra.mxu0 %v115
  %320 = vmatpush.msra.mxu0 %v113
  %321 = vmatpush.msra.mxu0 %v111
  %322 = vmatpush.msra.mxu0 %v109
  %323 = vmatpush.msra.mxu0 %v107
  %324 = vmatpush.msra.mxu0 %v105
  %325 = vmatpush.msra.mxu0 %v103
  %326 = vmatpush.msra.mxu0 %v101
  %327 = vmatpush.msra.mxu0 %v99
  %328 = vmatpush.msra.mxu0 %v97
  %329 = vmatpush.msra.mxu0 %v95
  %330 = vmatpush.msra.mxu0 %v93
  %331 = vmatpush.msra.mxu0 %v91
  %332 = vmatmul.f32.gmra.mxu0 %v16
  %v333 = vpop.f32.mrf.mxu0
  %v334 = vadd.f32 %v308, %v333
  %335 = vmatmul.f32.gmra.mxu0 %v20
  %v336 = vpop.f32.mrf.mxu0
  %v337 = vadd.f32 %v311, %v336
  %338 = vmatmul.f32.gmra.mxu0 %v24
  %v339 = vpop.f32.mrf.mxu0
  %v340 = vadd.f32 %v314, %v339
  %341 = vdwg.mxu0
  %342 = vmatpush.msra.mxu0 %v153
  %343 = vmatpush.msra.mxu0 %v151
  %344 = vmatpush.msra.mxu0 %v149
  %345 = vmatpush.msra.mxu0 %v147
  %346 = vmatpush.msra.mxu0 %v145
  %347 = vmatpush.msra.mxu0 %v143
  %348 = vmatpush.msra.mxu0 %v141
  %349 = vmatpush.msra.mxu0 %v139
  %350 = vmatpush.msra.mxu0 %v137
  %351 = vmatpush.msra.mxu0 %v135
  %352 = vmatpush.msra.mxu0 %v133
  %353 = vmatpush.msra.mxu0 %v131
  %354 = vmatpush.msra.mxu0 %v129
  %355 = vmatpush.msra.mxu0 %v127
  %356 = vmatpush.msra.mxu0 %v125
  %357 = vmatpush.msra.mxu0 %v123
  %358 = vmatmul.f32.gmra.mxu0 %v17
  %v359 = vpop.f32.mrf.mxu0
  %v360 = vadd.f32 %v334, %v359
  %361 = vmatmul.f32.gmra.mxu0 %v21
  %v362 = vpop.f32.mrf.mxu0
  %v363 = vadd.f32 %v337, %v362
  %364 = vmatmul.f32.gmra.mxu0 %v25
  %v365 = vpop.f32.mrf.mxu0
  %v366 = vadd.f32 %v340, %v365
  %367 = vdwg.mxu0
  %v368 = vmax.f32 %v256, 0.0
  %v369 = vmax.f32 %v360, 0.0
  %v370 = vmax.f32 %v259, 0.0
  %v371 = vmax.f32 %v363, 0.0
  %v372 = vmax.f32 %v262, 0.0
  %v373 = vmax.f32 %v366, 0.0
  %374 = vst [vmem:[%s3] sm:$0xff] %v368
  %375 = vst [vmem:[%s3 + $0x8] sm:$0xff] %v369
  %376 = vst [vmem:[%s3 + $0x10] sm:$0xff] %v370
  %377 = vst [vmem:[%s3 + $0x18] sm:$0xff] %v371
  %378 = vst [vmem:[%s3 + $0x20] sm:$0x3] %v372
  %379 = vst [vmem:[%s3 + $0x28] sm:$0x3] %v373
  // Predicated region
  $region14: #{conv_vae_forward.9} parent=0 // pred_check
    _
  $region15: #{conv_vae_forward.9} parent=0 // pred_check_branch
    %381 = sbr.rel (0) target = $region17
  $region16: #{conv_vae_forward.9} parent=0 // pred_region
    _
  $region17: #{conv_vae_forward.9} parent=0 // pred_fallthru
    _
  // Predicated region
  $region18: #{conv_vae_forward.9} parent=0 // pred_check
    _
  $region19: #{conv_vae_forward.9} parent=0 // pred_check_branch
    %383 = sbr.rel (0) target = $region21
  $region20: #{conv_vae_forward.9} parent=0 // pred_region
    _
  $region21: #{conv_vae_forward.9} parent=0 // pred_fallthru
    _

// kernel: conv_vae_forward.8
$region0: #{conv_vae_forward.8}
  #allocation0 [shape = 'u32[]', space=smem, size = 0x4, offset = 0x4, fixed_abs, tag = 'smem constant byte address 0x4 - core index']
  #allocation1 [shape = 'u32[72,128]{1,0:T(1,128)}', space=vmem, size = 0x9000, scoped, tag = 'internal scratch']
  %s0 = inlined_call_operand.vmem [shape: f32[8,1024], index: 0, kind: input, shape index: {}]
  %s1 = inlined_call_operand.vmem [shape: f32[2,32], index: 1, kind: input, shape index: {}]
  %s2 = inlined_call_operand.vmem [shape: f32[1024,128], index: 2, kind: input, shape index: {}]
  %s3 = inlined_call_operand.vmem [shape: f32[1,128], index: 3, kind: input, shape index: {}]
  %s4 = inlined_call_operand.vmem [shape: f32[512,256], index: 4, kind: input, shape index: {}]
  %s5 = inlined_call_operand.vmem [shape: f32[1,256], index: 5, kind: input, shape index: {}]
  %s6 = inlined_call_operand.vmem [shape: f32[256,32], index: 6, kind: input, shape index: {}]
  %s7 = inlined_call_operand.vmem [shape: f32[1,32], index: 7, kind: input, shape index: {}]
  %s8 = inlined_call_operand.vmem [shape: f32[256,32], index: 8, kind: input, shape index: {}]
  %s9 = inlined_call_operand.vmem [shape: f32[1,32], index: 9, kind: input, shape index: {}]
  %s10 = inlined_call_operand.vmem [shape: f32[32,256], index: 10, kind: input, shape index: {}]
  %s11 = inlined_call_operand.vmem [shape: f32[1,256], index: 11, kind: input, shape index: {}]
  %s12 = inlined_call_operand.vmem [shape: f32[256,512], index: 12, kind: input, shape index: {}]
  %s13 = inlined_call_operand.vmem [shape: f32[1,512], index: 13, kind: input, shape index: {}]
  %s14 = inlined_call_operand.hbm [shape: f32[2,32], index: 14, kind: output, shape index: {0}]
  %s15 = inlined_call_operand.hbm [shape: f32[2,32], index: 15, kind: output, shape index: {1}]
  %s16 = inlined_call_operand.vmem [shape: f32[2,512], index: 16, kind: output, shape index: {2}]
  %17 = xla_tuple %s14, %s15, %s16
  %s18 = sld [smem:[#allocation0]]
  $region82: #{conv_vae_forward.8} parent=0
    _
  %s20 = ssub.s32 1, %s18
  %s21 = scalar_select 0, %s20, %s18
  $region1: #{conv_vae_forward.8} parent=0
    #allocation2 [shape = 'u8[1024]{0}', space=vmem, size = 0x400, scoped, tag = 'output window, operand 0, single buffered']
    #allocation3 [shape = 's32[1]{0}', space=sflag, size = 0x4, scoped, tag = 'scoped memory for conv_vae_forward.8']
    #allocation4 [shape = 'u8[1024]{0}', space=vmem, size = 0x400, scoped, tag = 'output window, operand 1, single buffered']
    #allocation5 [shape = 's32[1]{0}', space=sflag, size = 0x4, scoped, tag = 'scoped memory for conv_vae_forward.8']
    %22 = vsyncpa [#allocation3], 0
    %23 = vsyncpa [#allocation5], 0
    // Predicated region
    $region2: #{conv_vae_forward.8} parent=1 // pred_check
      _
    $region3: #{conv_vae_forward.8} parent=1 // pred_check_branch
      %25 = sbr.rel (0) target = $region5
    $region4: #{conv_vae_forward.8} parent=1 // pred_region
      _
    $region5: #{conv_vae_forward.8} parent=1 // pred_fallthru
      _
    // Predicated region
    $region6: #{conv_vae_forward.8} parent=1 // pred_check
      _
    $region7: #{conv_vae_forward.8} parent=1 // pred_check_branch
      %27 = sbr.rel (0) target = $region9
    $region8: #{conv_vae_forward.8} parent=1 // pred_region
      _
    $region9: #{conv_vae_forward.8} parent=1 // pred_fallthru
      _
    // Predicated region
    $region10: #{conv_vae_forward.8} parent=1 // pred_check
      _
    $region11: #{conv_vae_forward.8} parent=1 // pred_check_branch
      %29 = sbr.rel (0) target = $region13
    $region12: #{conv_vae_forward.8} parent=1 // pred_region
      _
    $region13: #{conv_vae_forward.8} parent=1 // pred_fallthru
      _
    // Predicated region
    $region14: #{conv_vae_forward.8} parent=1 // pred_check
      _
    $region15: #{conv_vae_forward.8} parent=1 // pred_check_branch
      %31 = sbr.rel (0) target = $region17
    $region16: #{conv_vae_forward.8} parent=1 // pred_region
      _
    $region17: #{conv_vae_forward.8} parent=1 // pred_fallthru
      _
    // Predicated region
    $region18: #{conv_vae_forward.8} parent=1 // pred_check
      _
    $region19: #{conv_vae_forward.8} parent=1 // pred_check_branch
      %33 = sbr.rel (0) target = $region21
    $region20: #{conv_vae_forward.8} parent=1 // pred_region
      _
    $region21: #{conv_vae_forward.8} parent=1 // pred_fallthru
      _
    // Predicated region
    $region22: #{conv_vae_forward.8} parent=1 // pred_check
      _
    $region23: #{conv_vae_forward.8} parent=1 // pred_check_branch
      %35 = sbr.rel (0) target = $region25
    $region24: #{conv_vae_forward.8} parent=1 // pred_region
      _
    $region25: #{conv_vae_forward.8} parent=1 // pred_fallthru
      _
    // Predicated region
    $region26: #{conv_vae_forward.8} parent=1 // pred_check
      _
    $region27: #{conv_vae_forward.8} parent=1 // pred_check_branch
      %37 = sbr.rel (0) target = $region29
    $region28: #{conv_vae_forward.8} parent=1 // pred_region
      _
    $region29: #{conv_vae_forward.8} parent=1 // pred_fallthru
      _
    // Predicated region
    $region30: #{conv_vae_forward.8} parent=1 // pred_check
      _
    $region31: #{conv_vae_forward.8} parent=1 // pred_check_branch
      %39 = sbr.rel (0) target = $region33
    $region32: #{conv_vae_forward.8} parent=1 // pred_region
      _
    $region33: #{conv_vae_forward.8} parent=1 // pred_fallthru
      _
    // Predicated region
    $region34: #{conv_vae_forward.8} parent=1 // pred_check
      _
    $region35: #{conv_vae_forward.8} parent=1 // pred_check_branch
      %41 = sbr.rel (0) target = $region37
    $region36: #{conv_vae_forward.8} parent=1 // pred_region
      _
    $region37: #{conv_vae_forward.8} parent=1 // pred_fallthru
      _
    // Predicated region
    $region38: #{conv_vae_forward.8} parent=1 // pred_check
      _
    $region39: #{conv_vae_forward.8} parent=1 // pred_check_branch
      %43 = sbr.rel (0) target = $region41
    $region40: #{conv_vae_forward.8} parent=1 // pred_region
      _
    $region41: #{conv_vae_forward.8} parent=1 // pred_fallthru
      _
    // Predicated region
    $region42: #{conv_vae_forward.8} parent=1 // pred_check
      _
    $region43: #{conv_vae_forward.8} parent=1 // pred_check_branch
      %45 = sbr.rel (0) target = $region45
    $region44: #{conv_vae_forward.8} parent=1 // pred_region
      _
    $region45: #{conv_vae_forward.8} parent=1 // pred_fallthru
      _
    // Predicated region
    $region46: #{conv_vae_forward.8} parent=1 // pred_check
      _
    $region47: #{conv_vae_forward.8} parent=1 // pred_check_branch
      %47 = sbr.rel (0) target = $region49
    $region48: #{conv_vae_forward.8} parent=1 // pred_region
      _
    $region49: #{conv_vae_forward.8} parent=1 // pred_fallthru
      _
    // Predicated region
    $region50: #{conv_vae_forward.8} parent=1 // pred_check
      _
    $region51: #{conv_vae_forward.8} parent=1 // pred_check_branch
      %49 = sbr.rel (0) target = $region53
    $region52: #{conv_vae_forward.8} parent=1 // pred_region
      _
    $region53: #{conv_vae_forward.8} parent=1 // pred_fallthru
      _
    // Predicated region
    $region54: #{conv_vae_forward.8} parent=1 // pred_check
      _
    $region55: #{conv_vae_forward.8} parent=1 // pred_check_branch
      %51 = sbr.rel (0) target = $region57
    $region56: #{conv_vae_forward.8} parent=1 // pred_region
      _
    $region57: #{conv_vae_forward.8} parent=1 // pred_fallthru
      _
    %v52 = vld [vmem:[%s5] sm:$0x3]
    %v53 = vld [vmem:[%s0] sm:$0x3]
    %v54 = vld [vmem:[%s0 + $0x8] sm:$0x3]
    %v55 = vld [vmem:[%s0 + $0x10] sm:$0x3]
    %v56 = vld [vmem:[%s0 + $0x18] sm:$0x3]
    %v57 = vld [vmem:[%s0 + $0x20] sm:$0x3]
    %v58 = vld [vmem:[%s0 + $0x28] sm:$0x3]
    %v59 = vld [vmem:[%s0 + $0x30] sm:$0x3]
    %v60 = vld [vmem:[%s0 + $0x38] sm:$0x3]
    %v61 = vld [vmem:[%s2] sm:$0xff]
    %v62 = vld [vmem:[%s2 + $0x8] sm:$0xff]
    %v63 = vld [vmem:[%s2 + $0x10] sm:$0xff]
    %v64 = vld [vmem:[%s2 + $0x18] sm:$0xff]
    %v65 = vld [vmem:[%s2 + $0x20] sm:$0xff]
    %v66 = vld [vmem:[%s2 + $0x28] sm:$0xff]
    %v67 = vld [vmem:[%s2 + $0x30] sm:$0xff]
    %v68 = vld [vmem:[%s2 + $0x38] sm:$0xff]
    %v69 = vld [vmem:[%s2 + $0x40] sm:$0xff]
    %v70 = vld [vmem:[%s2 + $0x48] sm:$0xff]
    %v71 = vld [vmem:[%s2 + $0x50] sm:$0xff]
    %v72 = vld [vmem:[%s2 + $0x58] sm:$0xff]
    %v73 = vld [vmem:[%s2 + $0x60] sm:$0xff]
    %v74 = vld [vmem:[%s2 + $0x68] sm:$0xff]
    %v75 = vld [vmem:[%s2 + $0x70] sm:$0xff]
    %v76 = vld [vmem:[%s2 + $0x78] sm:$0xff]
    %v77 = vld [vmem:[%s2 + $0x80] sm:$0xff]
    %v78 = vld [vmem:[%s2 + $0x88] sm:$0xff]
    %v79 = vld [vmem:[%s2 + $0x90] sm:$0xff]
    %v80 = vld [vmem:[%s2 + $0x98] sm:$0xff]
    %v81 = vld [vmem:[%s2 + $0xa0] sm:$0xff]
    %v82 = vld [vmem:[%s2 + $0xa8] sm:$0xff]
    %v83 = vld [vmem:[%s2 + $0xb0] sm:$0xff]
    %v84 = vld [vmem:[%s2 + $0xb8] sm:$0xff]
    %v85 = vld [vmem:[%s2 + $0xc0] sm:$0xff]
    %v86 = vld [vmem:[%s2 + $0xc8] sm:$0xff]
    %v87 = vld [vmem:[%s2 + $0xd0] sm:$0xff]
    %v88 = vld [vmem:[%s2 + $0xd8] sm:$0xff]
    %v89 = vld [vmem:[%s2 + $0xe0] sm:$0xff]
    %v90 = vld [vmem:[%s2 + $0xe8] sm:$0xff]
    %v91 = vld [vmem:[%s2 + $0xf0] sm:$0xff]
    %v92 = vld [vmem:[%s2 + $0xf8] sm:$0xff]
    %v93 = vld [vmem:[%s2 + $0x100] sm:$0xff]
    %v94 = vld [vmem:[%s2 + $0x108] sm:$0xff]
    %v95 = vld [vmem:[%s2 + $0x110] sm:$0xff]
    %v96 = vld [vmem:[%s2 + $0x118] sm:$0xff]
    %v97 = vld [vmem:[%s2 + $0x120] sm:$0xff]
    %v98 = vld [vmem:[%s2 + $0x128] sm:$0xff]
    %v99 = vld [vmem:[%s2 + $0x130] sm:$0xff]
    %v100 = vld [vmem:[%s2 + $0x138] sm:$0xff]
    %v101 = vld [vmem:[%s2 + $0x140] sm:$0xff]
    %v102 = vld [vmem:[%s2 + $0x148] sm:$0xff]
    %v103 = vld [vmem:[%s2 + $0x150] sm:$0xff]
    %v104 = vld [vmem:[%s2 + $0x158] sm:$0xff]
    %v105 = vld [vmem:[%s2 + $0x160] sm:$0xff]
    %v106 = vld [vmem:[%s2 + $0x168] sm:$0xff]
    %v107 = vld [vmem:[%s2 + $0x170] sm:$0xff]
    %v108 = vld [vmem:[%s2 + $0x178] sm:$0xff]
    %v109 = vld [vmem:[%s2 + $0x180] sm:$0xff]
    %v110 = vld [vmem:[%s2 + $0x188] sm:$0xff]
    %v111 = vld [vmem:[%s2 + $0x190] sm:$0xff]
    %v112 = vld [vmem:[%s2 + $0x198] sm:$0xff]
    %v113 = vld [vmem:[%s2 + $0x1a0] sm:$0xff]
    %v114 = vld [vmem:[%s2 + $0x1a8] sm:$0xff]
    %v115 = vld [vmem:[%s2 + $0x1b0] sm:$0xff]
    %v116 = vld [vmem:[%s2 + $0x1b8] sm:$0xff]
    %v117 = vld [vmem:[%s2 + $0x1c0] sm:$0xff]
    %v118 = vld [vmem:[%s2 + $0x1c8] sm:$0xff]
    %v119 = vld [vmem:[%s2 + $0x1d0] sm:$0xff]
    %v120 = vld [vmem:[%s2 + $0x1d8] sm:$0xff]
    %v121 = vld [vmem:[%s2 + $0x1e0] sm:$0xff]
    %v122 = vld [vmem:[%s2 + $0x1e8] sm:$0xff]
    %v123 = vld [vmem:[%s2 + $0x1f0] sm:$0xff]
    %v124 = vld [vmem:[%s2 + $0x1f8] sm:$0xff]
    %v125 = vld [vmem:[%s2 + $0x200] sm:$0xff]
    %v126 = vld [vmem:[%s2 + $0x208] sm:$0xff]
    %v127 = vld [vmem:[%s2 + $0x210] sm:$0xff]
    %v128 = vld [vmem:[%s2 + $0x218] sm:$0xff]
    %v129 = vld [vmem:[%s2 + $0x220] sm:$0xff]
    %v130 = vld [vmem:[%s2 + $0x228] sm:$0xff]
    %v131 = vld [vmem:[%s2 + $0x230] sm:$0xff]
    %v132 = vld [vmem:[%s2 + $0x238] sm:$0xff]
    %v133 = vld [vmem:[%s2 + $0x240] sm:$0xff]
    %v134 = vld [vmem:[%s2 + $0x248] sm:$0xff]
    %v135 = vld [vmem:[%s2 + $0x250] sm:$0xff]
    %v136 = vld [vmem:[%s2 + $0x258] sm:$0xff]
    %v137 = vld [vmem:[%s2 + $0x260] sm:$0xff]
    %v138 = vld [vmem:[%s2 + $0x268] sm:$0xff]
    %v139 = vld [vmem:[%s2 + $0x270] sm:$0xff]
    %v140 = vld [vmem:[%s2 + $0x278] sm:$0xff]
    %v141 = vld [vmem:[%s2 + $0x280] sm:$0xff]
    %v142 = vld [vmem:[%s2 + $0x288] sm:$0xff]
    %v143 = vld [vmem:[%s2 + $0x290] sm:$0xff]
    %v144 = vld [vmem:[%s2 + $0x298] sm:$0xff]
    %v145 = vld [vmem:[%s2 + $0x2a0] sm:$0xff]
    %v146 = vld [vmem:[%s2 + $0x2a8] sm:$0xff]
    %v147 = vld [vmem:[%s2 + $0x2b0] sm:$0xff]
    %v148 = vld [vmem:[%s2 + $0x2b8] sm:$0xff]
    %v149 = vld [vmem:[%s2 + $0x2c0] sm:$0xff]
    %v150 = vld [vmem:[%s2 + $0x2c8] sm:$0xff]
    %v151 = vld [vmem:[%s2 + $0x2d0] sm:$0xff]
    %v152 = vld [vmem:[%s2 + $0x2d8] sm:$0xff]
    %v153 = vld [vmem:[%s2 + $0x2e0] sm:$0xff]
    %v154 = vld [vmem:[%s2 + $0x2e8] sm:$0xff]
    %v155 = vld [vmem:[%s2 + $0x2f0] sm:$0xff]
    %v156 = vld [vmem:[%s2 + $0x2f8] sm:$0xff]
    %v157 = vld [vmem:[%s2 + $0x300] sm:$0xff]
    %v158 = vld [vmem:[%s2 + $0x308] sm:$0xff]
    %v159 = vld [vmem:[%s2 + $0x310] sm:$0xff]
    %v160 = vld [vmem:[%s2 + $0x318] sm:$0xff]
    %v161 = vld [vmem:[%s2 + $0x320] sm:$0xff]
    %v162 = vld [vmem:[%s2 + $0x328] sm:$0xff]
    %v163 = vld [vmem:[%s2 + $0x330] sm:$0xff]
    %v164 = vld [vmem:[%s2 + $0x338] sm:$0xff]
    %v165 = vld [vmem:[%s2 + $0x340] sm:$0xff]
    %v166 = vld [vmem:[%s2 + $0x348] sm:$0xff]
    %v167 = vld [vmem:[%s2 + $0x350] sm:$0xff]
    %v168 = vld [vmem:[%s2 + $0x358] sm:$0xff]
    %v169 = vld [vmem:[%s2 + $0x360] sm:$0xff]
    %v170 = vld [vmem:[%s2 + $0x368] sm:$0xff]
    %v171 = vld [vmem:[%s2 + $0x370] sm:$0xff]
    %v172 = vld [vmem:[%s2 + $0x378] sm:$0xff]
    %v173 = vld [vmem:[%s2 + $0x380] sm:$0xff]
    %v174 = vld [vmem:[%s2 + $0x388] sm:$0xff]
    %v175 = vld [vmem:[%s2 + $0x390] sm:$0xff]
    %v176 = vld [vmem:[%s2 + $0x398] sm:$0xff]
    %v177 = vld [vmem:[%s2 + $0x3a0] sm:$0xff]
    %v178 = vld [vmem:[%s2 + $0x3a8] sm:$0xff]
    %v179 = vld [vmem:[%s2 + $0x3b0] sm:$0xff]
    %v180 = vld [vmem:[%s2 + $0x3b8] sm:$0xff]
    %v181 = vld [vmem:[%s2 + $0x3c0] sm:$0xff]
    %v182 = vld [vmem:[%s2 + $0x3c8] sm:$0xff]
    %v183 = vld [vmem:[%s2 + $0x3d0] sm:$0xff]
    %v184 = vld [vmem:[%s2 + $0x3d8] sm:$0xff]
    %v185 = vld [vmem:[%s2 + $0x3e0] sm:$0xff]
    %v186 = vld [vmem:[%s2 + $0x3e8] sm:$0xff]
    %v187 = vld [vmem:[%s2 + $0x3f0] sm:$0xff]
    %v188 = vld [vmem:[%s2 + $0x3f8] sm:$0xff]
    %v189 = vld [vmem:[%s3] sm:$0x1]
    %v191 = vperm.slane %v189, 0
    %193 = vmatpush.msra.mxu0 %v76
    %194 = vmatpush.msra.mxu0 %v75
    %195 = vmatpush.msra.mxu0 %v74
    %196 = vmatpush.msra.mxu0 %v73
    %197 = vmatpush.msra.mxu0 %v72
    %198 = vmatpush.msra.mxu0 %v71
    %199 = vmatpush.msra.mxu0 %v70
    %200 = vmatpush.msra.mxu0 %v69
    %201 = vmatpush.msra.mxu0 %v68
    %202 = vmatpush.msra.mxu0 %v67
    %203 = vmatpush.msra.mxu0 %v66
    %204 = vmatpush.msra.mxu0 %v65
    %205 = vmatpush.msra.mxu0 %v64
    %206 = vmatpush.msra.mxu0 %v63
    %207 = vmatpush.msra.mxu0 %v62
    %208 = vmatpush.msra.mxu0 %v61
    %209 = vmatmul.f32.gmra.mxu0 %v53
    %v210 = vpop.f32.mrf.mxu0
    %v211 = vadd.f32 %v191, %v210
    %212 = vdwg.mxu0
    %213 = vmatpush.msra.mxu0 %v92
    %214 = vmatpush.msra.mxu0 %v91
    %215 = vmatpush.msra.mxu0 %v90
    %216 = vmatpush.msra.mxu0 %v89
    %217 = vmatpush.msra.mxu0 %v88
    %218 = vmatpush.msra.mxu0 %v87
    %219 = vmatpush.msra.mxu0 %v86
    %220 = vmatpush.msra.mxu0 %v85
    %221 = vmatpush.msra.mxu0 %v84
    %222 = vmatpush.msra.mxu0 %v83
    %223 = vmatpush.msra.mxu0 %v82
    %224 = vmatpush.msra.mxu0 %v81
    %225 = vmatpush.msra.mxu0 %v80
    %226 = vmatpush.msra.mxu0 %v79
    %227 = vmatpush.msra.mxu0 %v78
    %228 = vmatpush.msra.mxu0 %v77
    %229 = vmatmul.f32.gmra.mxu0 %v54
    %v230 = vpop.f32.mrf.mxu0
    %v231 = vadd.f32 %v211, %v230
    %232 = vdwg.mxu0
    %233 = vmatpush.msra.mxu0 %v108
    %234 = vmatpush.msra.mxu0 %v107
    %235 = vmatpush.msra.mxu0 %v106
    %236 = vmatpush.msra.mxu0 %v105
    %237 = vmatpush.msra.mxu0 %v104
    %238 = vmatpush.msra.mxu0 %v103
    %239 = vmatpush.msra.mxu0 %v102
    %240 = vmatpush.msra.mxu0 %v101
    %241 = vmatpush.msra.mxu0 %v100
    %242 = vmatpush.msra.mxu0 %v99
    %243 = vmatpush.msra.mxu0 %v98
    %244 = vmatpush.msra.mxu0 %v97
    %245 = vmatpush.msra.mxu0 %v96
    %246 = vmatpush.msra.mxu0 %v95
    %247 = vmatpush.msra.mxu0 %v94
    %248 = vmatpush.msra.mxu0 %v93
    %249 = vmatmul.f32.gmra.mxu0 %v55
    %v250 = vpop.f32.mrf.mxu0
    %v251 = vadd.f32 %v231, %v250
    %252 = vdwg.mxu0
    %253 = vmatpush.msra.mxu0 %v124
    %254 = vmatpush.msra.mxu0 %v123
    %255 = vmatpush.msra.mxu0 %v122
    %256 = vmatpush.msra.mxu0 %v121
    %257 = vmatpush.msra.mxu0 %v120
    %258 = vmatpush.msra.mxu0 %v119
    %259 = vmatpush.msra.mxu0 %v118
    %260 = vmatpush.msra.mxu0 %v117
    %261 = vmatpush.msra.mxu0 %v116
    %262 = vmatpush.msra.mxu0 %v115
    %263 = vmatpush.msra.mxu0 %v114
    %264 = vmatpush.msra.mxu0 %v113
    %265 = vmatpush.msra.mxu0 %v112
    %266 = vmatpush.msra.mxu0 %v111
    %267 = vmatpush.msra.mxu0 %v110
    %268 = vmatpush.msra.mxu0 %v109
    %269 = vmatmul.f32.gmra.mxu0 %v56
    %v270 = vpop.f32.mrf.mxu0
    %v271 = vadd.f32 %v251, %v270
    %272 = vdwg.mxu0
    %273 = vmatpush.msra.mxu0 %v140
    %274 = vmatpush.msra.mxu0 %v139
    %275 = vmatpush.msra.mxu0 %v138
    %276 = vmatpush.msra.mxu0 %v137
    %277 = vmatpush.msra.mxu0 %v136
    %278 = vmatpush.msra.mxu0 %v135
    %279 = vmatpush.msra.mxu0 %v134
    %280 = vmatpush.msra.mxu0 %v133
    %281 = vmatpush.msra.mxu0 %v132
    %282 = vmatpush.msra.mxu0 %v131
    %283 = vmatpush.msra.mxu0 %v130
    %284 = vmatpush.msra.mxu0 %v129
    %285 = vmatpush.msra.mxu0 %v128
    %286 = vmatpush.msra.mxu0 %v127
    %287 = vmatpush.msra.mxu0 %v126
    %288 = vmatpush.msra.mxu0 %v125
    %289 = vmatmul.f32.gmra.mxu0 %v57
    %v290 = vpop.f32.mrf.mxu0
    %v291 = vadd.f32 %v271, %v290
    %292 = vdwg.mxu0
    %293 = vmatpush.msra.mxu0 %v156
    %294 = vmatpush.msra.mxu0 %v155
    %295 = vmatpush.msra.mxu0 %v154
    %296 = vmatpush.msra.mxu0 %v153
    %297 = vmatpush.msra.mxu0 %v152
    %298 = vmatpush.msra.mxu0 %v151
    %299 = vmatpush.msra.mxu0 %v150
    %300 = vmatpush.msra.mxu0 %v149
    %301 = vmatpush.msra.mxu0 %v148
    %302 = vmatpush.msra.mxu0 %v147
    %303 = vmatpush.msra.mxu0 %v146
    %304 = vmatpush.msra.mxu0 %v145
    %305 = vmatpush.msra.mxu0 %v144
    %306 = vmatpush.msra.mxu0 %v143
    %307 = vmatpush.msra.mxu0 %v142
    %308 = vmatpush.msra.mxu0 %v141
    %309 = vmatmul.f32.gmra.mxu0 %v58
    %v310 = vpop.f32.mrf.mxu0
    %v311 = vadd.f32 %v291, %v310
    %312 = vdwg.mxu0
    %313 = vmatpush.msra.mxu0 %v172
    %314 = vmatpush.msra.mxu0 %v171
    %315 = vmatpush.msra.mxu0 %v170
    %316 = vmatpush.msra.mxu0 %v169
    %317 = vmatpush.msra.mxu0 %v168
    %318 = vmatpush.msra.mxu0 %v167
    %319 = vmatpush.msra.mxu0 %v166
    %320 = vmatpush.msra.mxu0 %v165
    %321 = vmatpush.msra.mxu0 %v164
    %322 = vmatpush.msra.mxu0 %v163
    %323 = vmatpush.msra.mxu0 %v162
    %324 = vmatpush.msra.mxu0 %v161
    %325 = vmatpush.msra.mxu0 %v160
    %326 = vmatpush.msra.mxu0 %v159
    %327 = vmatpush.msra.mxu0 %v158
    %328 = vmatpush.msra.mxu0 %v157
    %329 = vmatmul.f32.gmra.mxu0 %v59
    %v330 = vpop.f32.mrf.mxu0
    %v331 = vadd.f32 %v311, %v330
    %332 = vdwg.mxu0
    %333 = vmatpush.msra.mxu0 %v188
    %334 = vmatpush.msra.mxu0 %v187
    %335 = vmatpush.msra.mxu0 %v186
    %336 = vmatpush.msra.mxu0 %v185
    %337 = vmatpush.msra.mxu0 %v184
    %338 = vmatpush.msra.mxu0 %v183
    %339 = vmatpush.msra.mxu0 %v182
    %340 = vmatpush.msra.mxu0 %v181
    %341 = vmatpush.msra.mxu0 %v180
    %342 = vmatpush.msra.mxu0 %v179
    %343 = vmatpush.msra.mxu0 %v178
    %344 = vmatpush.msra.mxu0 %v177
    %345 = vmatpush.msra.mxu0 %v176
    %346 = vmatpush.msra.mxu0 %v175
    %347 = vmatpush.msra.mxu0 %v174
    %348 = vmatpush.msra.mxu0 %v173
    %349 = vmatmul.f32.gmra.mxu0 %v60
    %v350 = vpop.f32.mrf.mxu0
    %v351 = vadd.f32 %v331, %v350
    %352 = vdwg.mxu0
    %v353 = vmax.f32 %v351, 0.0
    %v354 = vld [vmem:[%s4] sm:$0xff]
    %v355 = vld [vmem:[%s4 + $0x8] sm:$0xff]
    %v356 = vld [vmem:[%s4 + $0x10] sm:$0xff]
    %v357 = vld [vmem:[%s4 + $0x18] sm:$0xff]
    %v358 = vld [vmem:[%s4 + $0x20] sm:$0xff]
    %v359 = vld [vmem:[%s4 + $0x28] sm:$0xff]
    %v360 = vld [vmem:[%s4 + $0x30] sm:$0xff]
    %v361 = vld [vmem:[%s4 + $0x38] sm:$0xff]
    %v362 = vld [vmem:[%s4 + $0x40] sm:$0xff]
    %v363 = vld [vmem:[%s4 + $0x48] sm:$0xff]
    %v364 = vld [vmem:[%s4 + $0x50] sm:$0xff]
    %v365 = vld [vmem:[%s4 + $0x58] sm:$0xff]
    %v366 = vld [vmem:[%s4 + $0x60] sm:$0xff]
    %v367 = vld [vmem:[%s4 + $0x68] sm:$0xff]
    %v368 = vld [vmem:[%s4 + $0x70] sm:$0xff]
    %v369 = vld [vmem:[%s4 + $0x78] sm:$0xff]
    %v370 = vld [vmem:[%s4 + $0x80] sm:$0xff]
    %v371 = vld [vmem:[%s4 + $0x88] sm:$0xff]
    %v372 = vld [vmem:[%s4 + $0x90] sm:$0xff]
    %v373 = vld [vmem:[%s4 + $0x98] sm:$0xff]
    %v374 = vld [vmem:[%s4 + $0xa0] sm:$0xff]
    %v375 = vld [vmem:[%s4 + $0xa8] sm:$0xff]
    %v376 = vld [vmem:[%s4 + $0xb0] sm:$0xff]
    %v377 = vld [vmem:[%s4 + $0xb8] sm:$0xff]
    %v378 = vld [vmem:[%s4 + $0xc0] sm:$0xff]
    %v379 = vld [vmem:[%s4 + $0xc8] sm:$0xff]
    %v380 = vld [vmem:[%s4 + $0xd0] sm:$0xff]
    %v381 = vld [vmem:[%s4 + $0xd8] sm:$0xff]
    %v382 = vld [vmem:[%s4 + $0xe0] sm:$0xff]
    %v383 = vld [vmem:[%s4 + $0xe8] sm:$0xff]
    %v384 = vld [vmem:[%s4 + $0xf0] sm:$0xff]
    %v385 = vld [vmem:[%s4 + $0xf8] sm:$0xff]
    %386 = vmatpush.msra.mxu0 %v384
    %387 = vmatpush.msra.mxu0 %v382
    %388 = vmatpush.msra.mxu0 %v380
    %389 = vmatpush.msra.mxu0 %v378
    %390 = vmatpush.msra.mxu0 %v376
    %391 = vmatpush.msra.mxu0 %v374
    %392 = vmatpush.msra.mxu0 %v372
    %393 = vmatpush.msra.mxu0 %v370
    %394 = vmatpush.msra.mxu0 %v368
    %395 = vmatpush.msra.mxu0 %v366
    %396 = vmatpush.msra.mxu0 %v364
    %397 = vmatpush.msra.mxu0 %v362
    %398 = vmatpush.msra.mxu0 %v360
    %399 = vmatpush.msra.mxu0 %v358
    %400 = vmatpush.msra.mxu0 %v356
    %401 = vmatpush.msra.mxu0 %v354
    %402 = vmatmul.f32.gmra.mxu0 %v353
    %v403 = vpop.f32.mrf.mxu0
    %v404 = vadd.f32 0.0, %v403
    %405 = vdwg.mxu0
    %406 = vmatpush.msra.mxu0 %v385
    %407 = vmatpush.msra.mxu0 %v383
    %408 = vmatpush.msra.mxu0 %v381
    %409 = vmatpush.msra.mxu0 %v379
    %410 = vmatpush.msra.mxu0 %v377
    %411 = vmatpush.msra.mxu0 %v375
    %412 = vmatpush.msra.mxu0 %v373
    %413 = vmatpush.msra.mxu0 %v371
    %414 = vmatpush.msra.mxu0 %v369
    %415 = vmatpush.msra.mxu0 %v367
    %416 = vmatpush.msra.mxu0 %v365
    %417 = vmatpush.msra.mxu0 %v363
    %418 = vmatpush.msra.mxu0 %v361
    %419 = vmatpush.msra.mxu0 %v359
    %420 = vmatpush.msra.mxu0 %v357
    %421 = vmatpush.msra.mxu0 %v355
    %422 = vmatmul.f32.gmra.mxu0 %v353
    %v423 = vpop.f32.mrf.mxu0
    %v424 = vadd.f32 0.0, %v423
    %425 = vdwg.mxu0
    %v427 = vperm.slane %v52, 0
    %v428 = vperm.slane %v52, 1
    %v431 = vadd.f32 %v427, %v404
    %v432 = vadd.f32 %v428, %v424
    %v433 = vld [vmem:[%s0] sm:$0xc]
    %v434 = vld [vmem:[%s0 + $0x8] sm:$0xc]
    %v435 = vld [vmem:[%s0 + $0x10] sm:$0xc]
    %v436 = vld [vmem:[%s0 + $0x18] sm:$0xc]
    %v437 = vld [vmem:[%s0 + $0x20] sm:$0xc]
    %v438 = vld [vmem:[%s0 + $0x28] sm:$0xc]
    %v439 = vld [vmem:[%s0 + $0x30] sm:$0xc]
    %v440 = vld [vmem:[%s0 + $0x38] sm:$0xc]
    %v449 = vrot.slane %v433, 2
    %v450 = vrot.slane %v434, 2
    %v451 = vrot.slane %v435, 2
    %v452 = vrot.slane %v436, 2
    %v453 = vrot.slane %v437, 2
    %v454 = vrot.slane %v438, 2
    %v455 = vrot.slane %v439, 2
    %v456 = vrot.slane %v440, 2
    %465 = vmatpush.msra.mxu0 %v76
    %466 = vmatpush.msra.mxu0 %v75
    %467 = vmatpush.msra.mxu0 %v74
    %468 = vmatpush.msra.mxu0 %v73
    %469 = vmatpush.msra.mxu0 %v72
    %470 = vmatpush.msra.mxu0 %v71
    %471 = vmatpush.msra.mxu0 %v70
    %472 = vmatpush.msra.mxu0 %v69
    %473 = vmatpush.msra.mxu0 %v68
    %474 = vmatpush.msra.mxu0 %v67
    %475 = vmatpush.msra.mxu0 %v66
    %476 = vmatpush.msra.mxu0 %v65
    %477 = vmatpush.msra.mxu0 %v64
    %478 = vmatpush.msra.mxu0 %v63
    %479 = vmatpush.msra.mxu0 %v62
    %480 = vmatpush.msra.mxu0 %v61
    %481 = vmatmul.f32.gmra.mxu0 %v449
    %v482 = vpop.f32.mrf.mxu0
    %v483 = vadd.f32 %v191, %v482
    %484 = vdwg.mxu0
    %485 = vmatpush.msra.mxu0 %v92
    %486 = vmatpush.msra.mxu0 %v91
    %487 = vmatpush.msra.mxu0 %v90
    %488 = vmatpush.msra.mxu0 %v89
    %489 = vmatpush.msra.mxu0 %v88
    %490 = vmatpush.msra.mxu0 %v87
    %491 = vmatpush.msra.mxu0 %v86
    %492 = vmatpush.msra.mxu0 %v85
    %493 = vmatpush.msra.mxu0 %v84
    %494 = vmatpush.msra.mxu0 %v83
    %495 = vmatpush.msra.mxu0 %v82
    %496 = vmatpush.msra.mxu0 %v81
    %497 = vmatpush.msra.mxu0 %v80
    %498 = vmatpush.msra.mxu0 %v79
    %499 = vmatpush.msra.mxu0 %v78
    %500 = vmatpush.msra.mxu0 %v77
    %501 = vmatmul.f32.gmra.mxu0 %v450
    %v502 = vpop.f32.mrf.mxu0
    %v503 = vadd.f32 %v483, %v502
    %504 = vdwg.mxu0
    %505 = vmatpush.msra.mxu0 %v108
    %506 = vmatpush.msra.mxu0 %v107
    %507 = vmatpush.msra.mxu0 %v106
    %508 = vmatpush.msra.mxu0 %v105
    %509 = vmatpush.msra.mxu0 %v104
    %510 = vmatpush.msra.mxu0 %v103
    %511 = vmatpush.msra.mxu0 %v102
    %512 = vmatpush.msra.mxu0 %v101
    %513 = vmatpush.msra.mxu0 %v100
    %514 = vmatpush.msra.mxu0 %v99
    %515 = vmatpush.msra.mxu0 %v98
    %516 = vmatpush.msra.mxu0 %v97
    %517 = vmatpush.msra.mxu0 %v96
    %518 = vmatpush.msra.mxu0 %v95
    %519 = vmatpush.msra.mxu0 %v94
    %520 = vmatpush.msra.mxu0 %v93
    %521 = vmatmul.f32.gmra.mxu0 %v451
    %v522 = vpop.f32.mrf.mxu0
    %v523 = vadd.f32 %v503, %v522
    %524 = vdwg.mxu0
    %525 = vmatpush.msra.mxu0 %v124
    %526 = vmatpush.msra.mxu0 %v123
    %527 = vmatpush.msra.mxu0 %v122
    %528 = vmatpush.msra.mxu0 %v121
    %529 = vmatpush.msra.mxu0 %v120
    %530 = vmatpush.msra.mxu0 %v119
    %531 = vmatpush.msra.mxu0 %v118
    %532 = vmatpush.msra.mxu0 %v117
    %533 = vmatpush.msra.mxu0 %v116
    %534 = vmatpush.msra.mxu0 %v115
    %535 = vmatpush.msra.mxu0 %v114
    %536 = vmatpush.msra.mxu0 %v113
    %537 = vmatpush.msra.mxu0 %v112
    %538 = vmatpush.msra.mxu0 %v111
    %539 = vmatpush.msra.mxu0 %v110
    %540 = vmatpush.msra.mxu0 %v109
    %541 = vmatmul.f32.gmra.mxu0 %v452
    %v542 = vpop.f32.mrf.mxu0
    %v543 = vadd.f32 %v523, %v542
    %544 = vdwg.mxu0
    %545 = vmatpush.msra.mxu0 %v140
    %546 = vmatpush.msra.mxu0 %v139
    %547 = vmatpush.msra.mxu0 %v138
    %548 = vmatpush.msra.mxu0 %v137
    %549 = vmatpush.msra.mxu0 %v136
    %550 = vmatpush.msra.mxu0 %v135
    %551 = vmatpush.msra.mxu0 %v134
    %552 = vmatpush.msra.mxu0 %v133
    %553 = vmatpush.msra.mxu0 %v132
    %554 = vmatpush.msra.mxu0 %v131
    %555 = vmatpush.msra.mxu0 %v130
    %556 = vmatpush.msra.mxu0 %v129
    %557 = vmatpush.msra.mxu0 %v128
    %558 = vmatpush.msra.mxu0 %v127
    %559 = vmatpush.msra.mxu0 %v126
    %560 = vmatpush.msra.mxu0 %v125
    %561 = vmatmul.f32.gmra.mxu0 %v453
    %v562 = vpop.f32.mrf.mxu0
    %v563 = vadd.f32 %v543, %v562
    %564 = vdwg.mxu0
    %565 = vmatpush.msra.mxu0 %v156
    %566 = vmatpush.msra.mxu0 %v155
    %567 = vmatpush.msra.mxu0 %v154
    %568 = vmatpush.msra.mxu0 %v153
    %569 = vmatpush.msra.mxu0 %v152
    %570 = vmatpush.msra.mxu0 %v151
    %571 = vmatpush.msra.mxu0 %v150
    %572 = vmatpush.msra.mxu0 %v149
    %573 = vmatpush.msra.mxu0 %v148
    %574 = vmatpush.msra.mxu0 %v147
    %575 = vmatpush.msra.mxu0 %v146
    %576 = vmatpush.msra.mxu0 %v145
    %577 = vmatpush.msra.mxu0 %v144
    %578 = vmatpush.msra.mxu0 %v143
    %579 = vmatpush.msra.mxu0 %v142
    %580 = vmatpush.msra.mxu0 %v141
    %581 = vmatmul.f32.gmra.mxu0 %v454
    %v582 = vpop.f32.mrf.mxu0
    %v583 = vadd.f32 %v563, %v582
    %584 = vdwg.mxu0
    %585 = vmatpush.msra.mxu0 %v172
    %586 = vmatpush.msra.mxu0 %v171
    %587 = vmatpush.msra.mxu0 %v170
    %588 = vmatpush.msra.mxu0 %v169
    %589 = vmatpush.msra.mxu0 %v168
    %590 = vmatpush.msra.mxu0 %v167
    %591 = vmatpush.msra.mxu0 %v166
    %592 = vmatpush.msra.mxu0 %v165
    %593 = vmatpush.msra.mxu0 %v164
    %594 = vmatpush.msra.mxu0 %v163
    %595 = vmatpush.msra.mxu0 %v162
    %596 = vmatpush.msra.mxu0 %v161
    %597 = vmatpush.msra.mxu0 %v160
    %598 = vmatpush.msra.mxu0 %v159
    %599 = vmatpush.msra.mxu0 %v158
    %600 = vmatpush.msra.mxu0 %v157
    %601 = vmatmul.f32.gmra.mxu0 %v455
    %v602 = vpop.f32.mrf.mxu0
    %v603 = vadd.f32 %v583, %v602
    %604 = vdwg.mxu0
    %605 = vmatpush.msra.mxu0 %v188
    %606 = vmatpush.msra.mxu0 %v187
    %607 = vmatpush.msra.mxu0 %v186
    %608 = vmatpush.msra.mxu0 %v185
    %609 = vmatpush.msra.mxu0 %v184
    %610 = vmatpush.msra.mxu0 %v183
    %611 = vmatpush.msra.mxu0 %v182
    %612 = vmatpush.msra.mxu0 %v181
    %613 = vmatpush.msra.mxu0 %v180
    %614 = vmatpush.msra.mxu0 %v179
    %615 = vmatpush.msra.mxu0 %v178
    %616 = vmatpush.msra.mxu0 %v177
    %617 = vmatpush.msra.mxu0 %v176
    %618 = vmatpush.msra.mxu0 %v175
    %619 = vmatpush.msra.mxu0 %v174
    %620 = vmatpush.msra.mxu0 %v173
    %621 = vmatmul.f32.gmra.mxu0 %v456
    %v622 = vpop.f32.mrf.mxu0
    %v623 = vadd.f32 %v603, %v622
    %624 = vdwg.mxu0
    %v625 = vmax.f32 %v623, 0.0
    %v626 = vld [vmem:[%s4 + $0x100] sm:$0xff]
    %v627 = vld [vmem:[%s4 + $0x108] sm:$0xff]
    %v628 = vld [vmem:[%s4 + $0x110] sm:$0xff]
    %v629 = vld [vmem:[%s4 + $0x118] sm:$0xff]
    %v630 = vld [vmem:[%s4 + $0x120] sm:$0xff]
    %v631 = vld [vmem:[%s4 + $0x128] sm:$0xff]
    %v632 = vld [vmem:[%s4 + $0x130] sm:$0xff]
    %v633 = vld [vmem:[%s4 + $0x138] sm:$0xff]
    %v634 = vld [vmem:[%s4 + $0x140] sm:$0xff]
    %v635 = vld [vmem:[%s4 + $0x148] sm:$0xff]
    %v636 = vld [vmem:[%s4 + $0x150] sm:$0xff]
    %v637 = vld [vmem:[%s4 + $0x158] sm:$0xff]
    %v638 = vld [vmem:[%s4 + $0x160] sm:$0xff]
    %v639 = vld [vmem:[%s4 + $0x168] sm:$0xff]
    %v640 = vld [vmem:[%s4 + $0x170] sm:$0xff]
    %v641 = vld [vmem:[%s4 + $0x178] sm:$0xff]
    %v642 = vld [vmem:[%s4 + $0x180] sm:$0xff]
    %v643 = vld [vmem:[%s4 + $0x188] sm:$0xff]
    %v644 = vld [vmem:[%s4 + $0x190] sm:$0xff]
    %v645 = vld [vmem:[%s4 + $0x198] sm:$0xff]
    %v646 = vld [vmem:[%s4 + $0x1a0] sm:$0xff]
    %v647 = vld [vmem:[%s4 + $0x1a8] sm:$0xff]
    %v648 = vld [vmem:[%s4 + $0x1b0] sm:$0xff]
    %v649 = vld [vmem:[%s4 + $0x1b8] sm:$0xff]
    %v650 = vld [vmem:[%s4 + $0x1c0] sm:$0xff]
    %v651 = vld [vmem:[%s4 + $0x1c8] sm:$0xff]
    %v652 = vld [vmem:[%s4 + $0x1d0] sm:$0xff]
    %v653 = vld [vmem:[%s4 + $0x1d8] sm:$0xff]
    %v654 = vld [vmem:[%s4 + $0x1e0] sm:$0xff]
    %v655 = vld [vmem:[%s4 + $0x1e8] sm:$0xff]
    %v656 = vld [vmem:[%s4 + $0x1f0] sm:$0xff]
    %v657 = vld [vmem:[%s4 + $0x1f8] sm:$0xff]
    %658 = vmatpush.msra.mxu0 %v656
    %659 = vmatpush.msra.mxu0 %v654
    %660 = vmatpush.msra.mxu0 %v652
    %661 = vmatpush.msra.mxu0 %v650
    %662 = vmatpush.msra.mxu0 %v648
    %663 = vmatpush.msra.mxu0 %v646
    %664 = vmatpush.msra.mxu0 %v644
    %665 = vmatpush.msra.mxu0 %v642
    %666 = vmatpush.msra.mxu0 %v640
    %667 = vmatpush.msra.mxu0 %v638
    %668 = vmatpush.msra.mxu0 %v636
    %669 = vmatpush.msra.mxu0 %v634
    %670 = vmatpush.msra.mxu0 %v632
    %671 = vmatpush.msra.mxu0 %v630
    %672 = vmatpush.msra.mxu0 %v628
    %673 = vmatpush.msra.mxu0 %v626
    %674 = vmatmul.f32.gmra.mxu0 %v625
    %v675 = vpop.f32.mrf.mxu0
    %v676 = vadd.f32 0.0, %v675
    %677 = vdwg.mxu0
    %678 = vmatpush.msra.mxu0 %v657
    %679 = vmatpush.msra.mxu0 %v655
    %680 = vmatpush.msra.mxu0 %v653
    %681 = vmatpush.msra.mxu0 %v651
    %682 = vmatpush.msra.mxu0 %v649
    %683 = vmatpush.msra.mxu0 %v647
    %684 = vmatpush.msra.mxu0 %v645
    %685 = vmatpush.msra.mxu0 %v643
    %686 = vmatpush.msra.mxu0 %v641
    %687 = vmatpush.msra.mxu0 %v639
    %688 = vmatpush.msra.mxu0 %v637
    %689 = vmatpush.msra.mxu0 %v635
    %690 = vmatpush.msra.mxu0 %v633
    %691 = vmatpush.msra.mxu0 %v631
    %692 = vmatpush.msra.mxu0 %v629
    %693 = vmatpush.msra.mxu0 %v627
    %694 = vmatmul.f32.gmra.mxu0 %v625
    %v695 = vpop.f32.mrf.mxu0
    %v696 = vadd.f32 0.0, %v695
    %697 = vdwg.mxu0
    %v698 = vadd.f32 %v431, %v676
    %v699 = vadd.f32 %v432, %v696
    %v700 = vld [vmem:[%s0] sm:$0x30]
    %v701 = vld [vmem:[%s0 + $0x8] sm:$0x30]
    %v702 = vld [vmem:[%s0 + $0x10] sm:$0x30]
    %v703 = vld [vmem:[%s0 + $0x18] sm:$0x30]
    %v704 = vld [vmem:[%s0 + $0x20] sm:$0x30]
    %v705 = vld [vmem:[%s0 + $0x28] sm:$0x30]
    %v706 = vld [vmem:[%s0 + $0x30] sm:$0x30]
    %v707 = vld [vmem:[%s0 + $0x38] sm:$0x30]
    %v716 = vrot.slane %v700, 4
    %v717 = vrot.slane %v701, 4
    %v718 = vrot.slane %v702, 4
    %v719 = vrot.slane %v703, 4
    %v720 = vrot.slane %v704, 4
    %v721 = vrot.slane %v705, 4
    %v722 = vrot.slane %v706, 4
    %v723 = vrot.slane %v707, 4
    %732 = vmatpush.msra.mxu0 %v76
    %733 = vmatpush.msra.mxu0 %v75
    %734 = vmatpush.msra.mxu0 %v74
    %735 = vmatpush.msra.mxu0 %v73
    %736 = vmatpush.msra.mxu0 %v72
    %737 = vmatpush.msra.mxu0 %v71
    %738 = vmatpush.msra.mxu0 %v70
    %739 = vmatpush.msra.mxu0 %v69
    %740 = vmatpush.msra.mxu0 %v68
    %741 = vmatpush.msra.mxu0 %v67
    %742 = vmatpush.msra.mxu0 %v66
    %743 = vmatpush.msra.mxu0 %v65
    %744 = vmatpush.msra.mxu0 %v64
    %745 = vmatpush.msra.mxu0 %v63
    %746 = vmatpush.msra.mxu0 %v62
    %747 = vmatpush.msra.mxu0 %v61
    %748 = vmatmul.f32.gmra.mxu0 %v716
    %v749 = vpop.f32.mrf.mxu0
    %v750 = vadd.f32 %v191, %v749
    %751 = vdwg.mxu0
    %752 = vmatpush.msra.mxu0 %v92
    %753 = vmatpush.msra.mxu0 %v91
    %754 = vmatpush.msra.mxu0 %v90
    %755 = vmatpush.msra.mxu0 %v89
    %756 = vmatpush.msra.mxu0 %v88
    %757 = vmatpush.msra.mxu0 %v87
    %758 = vmatpush.msra.mxu0 %v86
    %759 = vmatpush.msra.mxu0 %v85
    %760 = vmatpush.msra.mxu0 %v84
    %761 = vmatpush.msra.mxu0 %v83
    %762 = vmatpush.msra.mxu0 %v82
    %763 = vmatpush.msra.mxu0 %v81
    %764 = vmatpush.msra.mxu0 %v80
    %765 = vmatpush.msra.mxu0 %v79
    %766 = vmatpush.msra.mxu0 %v78
    %767 = vmatpush.msra.mxu0 %v77
    %768 = vmatmul.f32.gmra.mxu0 %v717
    %v769 = vpop.f32.mrf.mxu0
    %v770 = vadd.f32 %v750, %v769
    %771 = vdwg.mxu0
    %772 = vmatpush.msra.mxu0 %v108
    %773 = vmatpush.msra.mxu0 %v107
    %774 = vmatpush.msra.mxu0 %v106
    %775 = vmatpush.msra.mxu0 %v105
    %776 = vmatpush.msra.mxu0 %v104
    %777 = vmatpush.msra.mxu0 %v103
    %778 = vmatpush.msra.mxu0 %v102
    %779 = vmatpush.msra.mxu0 %v101
    %780 = vmatpush.msra.mxu0 %v100
    %781 = vmatpush.msra.mxu0 %v99
    %782 = vmatpush.msra.mxu0 %v98
    %783 = vmatpush.msra.mxu0 %v97
    %784 = vmatpush.msra.mxu0 %v96
    %785 = vmatpush.msra.mxu0 %v95
    %786 = vmatpush.msra.mxu0 %v94
    %787 = vmatpush.msra.mxu0 %v93
    %788 = vmatmul.f32.gmra.mxu0 %v718
    %v789 = vpop.f32.mrf.mxu0
    %v790 = vadd.f32 %v770, %v789
    %791 = vdwg.mxu0
    %792 = vmatpush.msra.mxu0 %v124
    %793 = vmatpush.msra.mxu0 %v123
    %794 = vmatpush.msra.mxu0 %v122
    %795 = vmatpush.msra.mxu0 %v121
    %796 = vmatpush.msra.mxu0 %v120
    %797 = vmatpush.msra.mxu0 %v119
    %798 = vmatpush.msra.mxu0 %v118
    %799 = vmatpush.msra.mxu0 %v117
    %800 = vmatpush.msra.mxu0 %v116
    %801 = vmatpush.msra.mxu0 %v115
    %802 = vmatpush.msra.mxu0 %v114
    %803 = vmatpush.msra.mxu0 %v113
    %804 = vmatpush.msra.mxu0 %v112
    %805 = vmatpush.msra.mxu0 %v111
    %806 = vmatpush.msra.mxu0 %v110
    %807 = vmatpush.msra.mxu0 %v109
    %808 = vmatmul.f32.gmra.mxu0 %v719
    %v809 = vpop.f32.mrf.mxu0
    %v810 = vadd.f32 %v790, %v809
    %811 = vdwg.mxu0
    %812 = vmatpush.msra.mxu0 %v140
    %813 = vmatpush.msra.mxu0 %v139
    %814 = vmatpush.msra.mxu0 %v138
    %815 = vmatpush.msra.mxu0 %v137
    %816 = vmatpush.msra.mxu0 %v136
    %817 = vmatpush.msra.mxu0 %v135
    %818 = vmatpush.msra.mxu0 %v134
    %819 = vmatpush.msra.mxu0 %v133
    %820 = vmatpush.msra.mxu0 %v132
    %821 = vmatpush.msra.mxu0 %v131
    %822 = vmatpush.msra.mxu0 %v130
    %823 = vmatpush.msra.mxu0 %v129
    %824 = vmatpush.msra.mxu0 %v128
    %825 = vmatpush.msra.mxu0 %v127
    %826 = vmatpush.msra.mxu0 %v126
    %827 = vmatpush.msra.mxu0 %v125
    %828 = vmatmul.f32.gmra.mxu0 %v720
    %v829 = vpop.f32.mrf.mxu0
    %v830 = vadd.f32 %v810, %v829
    %831 = vdwg.mxu0
    %832 = vmatpush.msra.mxu0 %v156
    %833 = vmatpush.msra.mxu0 %v155
    %834 = vmatpush.msra.mxu0 %v154
    %835 = vmatpush.msra.mxu0 %v153
    %836 = vmatpush.msra.mxu0 %v152
    %837 = vmatpush.msra.mxu0 %v151
    %838 = vmatpush.msra.mxu0 %v150
    %839 = vmatpush.msra.mxu0 %v149
    %840 = vmatpush.msra.mxu0 %v148
    %841 = vmatpush.msra.mxu0 %v147
    %842 = vmatpush.msra.mxu0 %v146
    %843 = vmatpush.msra.mxu0 %v145
    %844 = vmatpush.msra.mxu0 %v144
    %845 = vmatpush.msra.mxu0 %v143
    %846 = vmatpush.msra.mxu0 %v142
    %847 = vmatpush.msra.mxu0 %v141
    %848 = vmatmul.f32.gmra.mxu0 %v721
    %v849 = vpop.f32.mrf.mxu0
    %v850 = vadd.f32 %v830, %v849
    %851 = vdwg.mxu0
    %852 = vmatpush.msra.mxu0 %v172
    %853 = vmatpush.msra.mxu0 %v171
    %854 = vmatpush.msra.mxu0 %v170
    %855 = vmatpush.msra.mxu0 %v169
    %856 = vmatpush.msra.mxu0 %v168
    %857 = vmatpush.msra.mxu0 %v167
    %858 = vmatpush.msra.mxu0 %v166
    %859 = vmatpush.msra.mxu0 %v165
    %860 = vmatpush.msra.mxu0 %v164
    %861 = vmatpush.msra.mxu0 %v163
    %862 = vmatpush.msra.mxu0 %v162
    %863 = vmatpush.msra.mxu0 %v161
    %864 = vmatpush.msra.mxu0 %v160
    %865 = vmatpush.msra.mxu0 %v159
    %866 = vmatpush.msra.mxu0 %v158
    %867 = vmatpush.msra.mxu0 %v157
    %868 = vmatmul.f32.gmra.mxu0 %v722
    %v869 = vpop.f32.mrf.mxu0
    %v870 = vadd.f32 %v850, %v869
    %871 = vdwg.mxu0
    %872 = vmatpush.msra.mxu0 %v188
    %873 = vmatpush.msra.mxu0 %v187
    %874 = vmatpush.msra.mxu0 %v186
    %875 = vmatpush.msra.mxu0 %v185
    %876 = vmatpush.msra.mxu0 %v184
    %877 = vmatpush.msra.mxu0 %v183
    %878 = vmatpush.msra.mxu0 %v182
    %879 = vmatpush.msra.mxu0 %v181
    %880 = vmatpush.msra.mxu0 %v180
    %881 = vmatpush.msra.mxu0 %v179
    %882 = vmatpush.msra.mxu0 %v178
    %883 = vmatpush.msra.mxu0 %v177
    %884 = vmatpush.msra.mxu0 %v176
    %885 = vmatpush.msra.mxu0 %v175
    %886 = vmatpush.msra.mxu0 %v174
    %887 = vmatpush.msra.mxu0 %v173
    %888 = vmatmul.f32.gmra.mxu0 %v723
    %v889 = vpop.f32.mrf.mxu0
    %v890 = vadd.f32 %v870, %v889
    %891 = vdwg.mxu0
    %v892 = vmax.f32 %v890, 0.0
    %v893 = vld [vmem:[%s4 + $0x200] sm:$0xff]
    %v894 = vld [vmem:[%s4 + $0x208] sm:$0xff]
    %v895 = vld [vmem:[%s4 + $0x210] sm:$0xff]
    %v896 = vld [vmem:[%s4 + $0x218] sm:$0xff]
    %v897 = vld [vmem:[%s4 + $0x220] sm:$0xff]
    %v898 = vld [vmem:[%s4 + $0x228] sm:$0xff]
    %v899 = vld [vmem:[%s4 + $0x230] sm:$0xff]
    %v900 = vld [vmem:[%s4 + $0x238] sm:$0xff]
    %v901 = vld [vmem:[%s4 + $0x240] sm:$0xff]
    %v902 = vld [vmem:[%s4 + $0x248] sm:$0xff]
    %v903 = vld [vmem:[%s4 + $0x250] sm:$0xff]
    %v904 = vld [vmem:[%s4 + $0x258] sm:$0xff]
    %v905 = vld [vmem:[%s4 + $0x260] sm:$0xff]
    %v906 = vld [vmem:[%s4 + $0x268] sm:$0xff]
    %v907 = vld [vmem:[%s4 + $0x270] sm:$0xff]
    %v908 = vld [vmem:[%s4 + $0x278] sm:$0xff]
    %v909 = vld [vmem:[%s4 + $0x280] sm:$0xff]
    %v910 = vld [vmem:[%s4 + $0x288] sm:$0xff]
    %v911 = vld [vmem:[%s4 + $0x290] sm:$0xff]
    %v912 = vld [vmem:[%s4 + $0x298] sm:$0xff]
    %v913 = vld [vmem:[%s4 + $0x2a0] sm:$0xff]
    %v914 = vld [vmem:[%s4 + $0x2a8] sm:$0xff]
    %v915 = vld [vmem:[%s4 + $0x2b0] sm:$0xff]
    %v916 = vld [vmem:[%s4 + $0x2b8] sm:$0xff]
    %v917 = vld [vmem:[%s4 + $0x2c0] sm:$0xff]
    %v918 = vld [vmem:[%s4 + $0x2c8] sm:$0xff]
    %v919 = vld [vmem:[%s4 + $0x2d0] sm:$0xff]
    %v920 = vld [vmem:[%s4 + $0x2d8] sm:$0xff]
    %v921 = vld [vmem:[%s4 + $0x2e0] sm:$0xff]
    %v922 = vld [vmem:[%s4 + $0x2e8] sm:$0xff]
    %v923 = vld [vmem:[%s4 + $0x2f0] sm:$0xff]
    %v924 = vld [vmem:[%s4 + $0x2f8] sm:$0xff]
    %925 = vmatpush.msra.mxu0 %v923
    %926 = vmatpush.msra.mxu0 %v921
    %927 = vmatpush.msra.mxu0 %v919
    %928 = vmatpush.msra.mxu0 %v917
    %929 = vmatpush.msra.mxu0 %v915
    %930 = vmatpush.msra.mxu0 %v913
    %931 = vmatpush.msra.mxu0 %v911
    %932 = vmatpush.msra.mxu0 %v909
    %933 = vmatpush.msra.mxu0 %v907
    %934 = vmatpush.msra.mxu0 %v905
    %935 = vmatpush.msra.mxu0 %v903
    %936 = vmatpush.msra.mxu0 %v901
    %937 = vmatpush.msra.mxu0 %v899
    %938 = vmatpush.msra.mxu0 %v897
    %939 = vmatpush.msra.mxu0 %v895
    %940 = vmatpush.msra.mxu0 %v893
    %941 = vmatmul.f32.gmra.mxu0 %v892
    %v942 = vpop.f32.mrf.mxu0
    %v943 = vadd.f32 0.0, %v942
    %944 = vdwg.mxu0
    %945 = vmatpush.msra.mxu0 %v924
    %946 = vmatpush.msra.mxu0 %v922
    %947 = vmatpush.msra.mxu0 %v920
    %948 = vmatpush.msra.mxu0 %v918
    %949 = vmatpush.msra.mxu0 %v916
    %950 = vmatpush.msra.mxu0 %v914
    %951 = vmatpush.msra.mxu0 %v912
    %952 = vmatpush.msra.mxu0 %v910
    %953 = vmatpush.msra.mxu0 %v908
    %954 = vmatpush.msra.mxu0 %v906
    %955 = vmatpush.msra.mxu0 %v904
    %956 = vmatpush.msra.mxu0 %v902
    %957 = vmatpush.msra.mxu0 %v900
    %958 = vmatpush.msra.mxu0 %v898
    %959 = vmatpush.msra.mxu0 %v896
    %960 = vmatpush.msra.mxu0 %v894
    %961 = vmatmul.f32.gmra.mxu0 %v892
    %v962 = vpop.f32.mrf.mxu0
    %v963 = vadd.f32 0.0, %v962
    %964 = vdwg.mxu0
    %v965 = vadd.f32 %v698, %v943
    %v966 = vadd.f32 %v699, %v963
    %v967 = vld [vmem:[%s0] sm:$0xc0]
    %v968 = vld [vmem:[%s0 + $0x8] sm:$0xc0]
    %v969 = vld [vmem:[%s0 + $0x10] sm:$0xc0]
    %v970 = vld [vmem:[%s0 + $0x18] sm:$0xc0]
    %v971 = vld [vmem:[%s0 + $0x20] sm:$0xc0]
    %v972 = vld [vmem:[%s0 + $0x28] sm:$0xc0]
    %v973 = vld [vmem:[%s0 + $0x30] sm:$0xc0]
    %v974 = vld [vmem:[%s0 + $0x38] sm:$0xc0]
    %v983 = vrot.slane %v967, 6
    %v984 = vrot.slane %v968, 6
    %v985 = vrot.slane %v969, 6
    %v986 = vrot.slane %v970, 6
    %v987 = vrot.slane %v971, 6
    %v988 = vrot.slane %v972, 6
    %v989 = vrot.slane %v973, 6
    %v990 = vrot.slane %v974, 6
    %999 = vmatpush.msra.mxu0 %v76
    %1000 = vmatpush.msra.mxu0 %v75
    %1001 = vmatpush.msra.mxu0 %v74
    %1002 = vmatpush.msra.mxu0 %v73
    %1003 = vmatpush.msra.mxu0 %v72
    %1004 = vmatpush.msra.mxu0 %v71
    %1005 = vmatpush.msra.mxu0 %v70
    %1006 = vmatpush.msra.mxu0 %v69
    %1007 = vmatpush.msra.mxu0 %v68
    %1008 = vmatpush.msra.mxu0 %v67
    %1009 = vmatpush.msra.mxu0 %v66
    %1010 = vmatpush.msra.mxu0 %v65
    %1011 = vmatpush.msra.mxu0 %v64
    %1012 = vmatpush.msra.mxu0 %v63
    %1013 = vmatpush.msra.mxu0 %v62
    %1014 = vmatpush.msra.mxu0 %v61
    %1015 = vmatmul.f32.gmra.mxu0 %v983
    %v1016 = vpop.f32.mrf.mxu0
    %v1017 = vadd.f32 %v191, %v1016
    %1018 = vdwg.mxu0
    %1019 = vmatpush.msra.mxu0 %v92
    %1020 = vmatpush.msra.mxu0 %v91
    %1021 = vmatpush.msra.mxu0 %v90
    %1022 = vmatpush.msra.mxu0 %v89
    %1023 = vmatpush.msra.mxu0 %v88
    %1024 = vmatpush.msra.mxu0 %v87
    %1025 = vmatpush.msra.mxu0 %v86
    %1026 = vmatpush.msra.mxu0 %v85
    %1027 = vmatpush.msra.mxu0 %v84
    %1028 = vmatpush.msra.mxu0 %v83
    %1029 = vmatpush.msra.mxu0 %v82
    %1030 = vmatpush.msra.mxu0 %v81
    %1031 = vmatpush.msra.mxu0 %v80
    %1032 = vmatpush.msra.mxu0 %v79
    %1033 = vmatpush.msra.mxu0 %v78
    %1034 = vmatpush.msra.mxu0 %v77
    %1035 = vmatmul.f32.gmra.mxu0 %v984
    %v1036 = vpop.f32.mrf.mxu0
    %v1037 = vadd.f32 %v1017, %v1036
    %1038 = vdwg.mxu0
    %1039 = vmatpush.msra.mxu0 %v108
    %1040 = vmatpush.msra.mxu0 %v107
    %1041 = vmatpush.msra.mxu0 %v106
    %1042 = vmatpush.msra.mxu0 %v105
    %1043 = vmatpush.msra.mxu0 %v104
    %1044 = vmatpush.msra.mxu0 %v103
    %1045 = vmatpush.msra.mxu0 %v102
    %1046 = vmatpush.msra.mxu0 %v101
    %1047 = vmatpush.msra.mxu0 %v100
    %1048 = vmatpush.msra.mxu0 %v99
    %1049 = vmatpush.msra.mxu0 %v98
    %1050 = vmatpush.msra.mxu0 %v97
    %1051 = vmatpush.msra.mxu0 %v96
    %1052 = vmatpush.msra.mxu0 %v95
    %1053 = vmatpush.msra.mxu0 %v94
    %1054 = vmatpush.msra.mxu0 %v93
    %1055 = vmatmul.f32.gmra.mxu0 %v985
    %v1056 = vpop.f32.mrf.mxu0
    %v1057 = vadd.f32 %v1037, %v1056
    %1058 = vdwg.mxu0
    %1059 = vmatpush.msra.mxu0 %v124
    %1060 = vmatpush.msra.mxu0 %v123
    %1061 = vmatpush.msra.mxu0 %v122
    %1062 = vmatpush.msra.mxu0 %v121
    %1063 = vmatpush.msra.mxu0 %v120
    %1064 = vmatpush.msra.mxu0 %v119
    %1065 = vmatpush.msra.mxu0 %v118
    %1066 = vmatpush.msra.mxu0 %v117
    %1067 = vmatpush.msra.mxu0 %v116
    %1068 = vmatpush.msra.mxu0 %v115
    %1069 = vmatpush.msra.mxu0 %v114
    %1070 = vmatpush.msra.mxu0 %v113
    %1071 = vmatpush.msra.mxu0 %v112
    %1072 = vmatpush.msra.mxu0 %v111
    %1073 = vmatpush.msra.mxu0 %v110
    %1074 = vmatpush.msra.mxu0 %v109
    %1075 = vmatmul.f32.gmra.mxu0 %v986
    %v1076 = vpop.f32.mrf.mxu0
    %v1077 = vadd.f32 %v1057, %v1076
    %1078 = vdwg.mxu0
    %1079 = vmatpush.msra.mxu0 %v140
    %1080 = vmatpush.msra.mxu0 %v139
    %1081 = vmatpush.msra.mxu0 %v138
    %1082 = vmatpush.msra.mxu0 %v137
    %1083 = vmatpush.msra.mxu0 %v136
    %1084 = vmatpush.msra.mxu0 %v135
    %1085 = vmatpush.msra.mxu0 %v134
    %1086 = vmatpush.msra.mxu0 %v133
    %1087 = vmatpush.msra.mxu0 %v132
    %1088 = vmatpush.msra.mxu0 %v131
    %1089 = vmatpush.msra.mxu0 %v130
    %1090 = vmatpush.msra.mxu0 %v129
    %1091 = vmatpush.msra.mxu0 %v128
    %1092 = vmatpush.msra.mxu0 %v127
    %1093 = vmatpush.msra.mxu0 %v126
    %1094 = vmatpush.msra.mxu0 %v125
    %1095 = vmatmul.f32.gmra.mxu0 %v987
    %v1096 = vpop.f32.mrf.mxu0
    %v1097 = vadd.f32 %v1077, %v1096
    %1098 = vdwg.mxu0
    %1099 = vmatpush.msra.mxu0 %v156
    %1100 = vmatpush.msra.mxu0 %v155
    %1101 = vmatpush.msra.mxu0 %v154
    %1102 = vmatpush.msra.mxu0 %v153
    %1103 = vmatpush.msra.mxu0 %v152
    %1104 = vmatpush.msra.mxu0 %v151
    %1105 = vmatpush.msra.mxu0 %v150
    %1106 = vmatpush.msra.mxu0 %v149
    %1107 = vmatpush.msra.mxu0 %v148
    %1108 = vmatpush.msra.mxu0 %v147
    %1109 = vmatpush.msra.mxu0 %v146
    %1110 = vmatpush.msra.mxu0 %v145
    %1111 = vmatpush.msra.mxu0 %v144
    %1112 = vmatpush.msra.mxu0 %v143
    %1113 = vmatpush.msra.mxu0 %v142
    %1114 = vmatpush.msra.mxu0 %v141
    %1115 = vmatmul.f32.gmra.mxu0 %v988
    %v1116 = vpop.f32.mrf.mxu0
    %v1117 = vadd.f32 %v1097, %v1116
    %1118 = vdwg.mxu0
    %1119 = vmatpush.msra.mxu0 %v172
    %1120 = vmatpush.msra.mxu0 %v171
    %1121 = vmatpush.msra.mxu0 %v170
    %1122 = vmatpush.msra.mxu0 %v169
    %1123 = vmatpush.msra.mxu0 %v168
    %1124 = vmatpush.msra.mxu0 %v167
    %1125 = vmatpush.msra.mxu0 %v166
    %1126 = vmatpush.msra.mxu0 %v165
    %1127 = vmatpush.msra.mxu0 %v164
    %1128 = vmatpush.msra.mxu0 %v163
    %1129 = vmatpush.msra.mxu0 %v162
    %1130 = vmatpush.msra.mxu0 %v161
    %1131 = vmatpush.msra.mxu0 %v160
    %1132 = vmatpush.msra.mxu0 %v159
    %1133 = vmatpush.msra.mxu0 %v158
    %1134 = vmatpush.msra.mxu0 %v157
    %1135 = vmatmul.f32.gmra.mxu0 %v989
    %v1136 = vpop.f32.mrf.mxu0
    %v1137 = vadd.f32 %v1117, %v1136
    %1138 = vdwg.mxu0
    %1139 = vmatpush.msra.mxu0 %v188
    %1140 = vmatpush.msra.mxu0 %v187
    %1141 = vmatpush.msra.mxu0 %v186
    %1142 = vmatpush.msra.mxu0 %v185
    %1143 = vmatpush.msra.mxu0 %v184
    %1144 = vmatpush.msra.mxu0 %v183
    %1145 = vmatpush.msra.mxu0 %v182
    %1146 = vmatpush.msra.mxu0 %v181
    %1147 = vmatpush.msra.mxu0 %v180
    %1148 = vmatpush.msra.mxu0 %v179
    %1149 = vmatpush.msra.mxu0 %v178
    %1150 = vmatpush.msra.mxu0 %v177
    %1151 = vmatpush.msra.mxu0 %v176
    %1152 = vmatpush.msra.mxu0 %v175
    %1153 = vmatpush.msra.mxu0 %v174
    %1154 = vmatpush.msra.mxu0 %v173
    %1155 = vmatmul.f32.gmra.mxu0 %v990
    %v1156 = vpop.f32.mrf.mxu0
    %v1157 = vadd.f32 %v1137, %v1156
    %1158 = vdwg.mxu0
    %v1159 = vmax.f32 %v1157, 0.0
    %v1160 = vld [vmem:[%s4 + $0x300] sm:$0xff]
    %v1161 = vld [vmem:[%s4 + $0x308] sm:$0xff]
    %v1162 = vld [vmem:[%s4 + $0x310] sm:$0xff]
    %v1163 = vld [vmem:[%s4 + $0x318] sm:$0xff]
    %v1164 = vld [vmem:[%s4 + $0x320] sm:$0xff]
    %v1165 = vld [vmem:[%s4 + $0x328] sm:$0xff]
    %v1166 = vld [vmem:[%s4 + $0x330] sm:$0xff]
    %v1167 = vld [vmem:[%s4 + $0x338] sm:$0xff]
    %v1168 = vld [vmem:[%s4 + $0x340] sm:$0xff]
    %v1169 = vld [vmem:[%s4 + $0x348] sm:$0xff]
    %v1170 = vld [vmem:[%s4 + $0x350] sm:$0xff]
    %v1171 = vld [vmem:[%s4 + $0x358] sm:$0xff]
    %v1172 = vld [vmem:[%s4 + $0x360] sm:$0xff]
    %v1173 = vld [vmem:[%s4 + $0x368] sm:$0xff]
    %v1174 = vld [vmem:[%s4 + $0x370] sm:$0xff]
    %v1175 = vld [vmem:[%s4 + $0x378] sm:$0xff]
    %v1176 = vld [vmem:[%s4 + $0x380] sm:$0xff]
    %v1177 = vld [vmem:[%s4 + $0x388] sm:$0xff]
    %v1178 = vld [vmem:[%s4 + $0x390] sm:$0xff]
    %v1179 = vld [vmem:[%s4 + $0x398] sm:$0xff]
    %v1180 = vld [vmem:[%s4 + $0x3a0] sm:$0xff]
    %v1181 = vld [vmem:[%s4 + $0x3a8] sm:$0xff]
    %v1182 = vld [vmem:[%s4 + $0x3b0] sm:$0xff]
    %v1183 = vld [vmem:[%s4 + $0x3b8] sm:$0xff]
    %v1184 = vld [vmem:[%s4 + $0x3c0] sm:$0xff]
    %v1185 = vld [vmem:[%s4 + $0x3c8] sm:$0xff]
    %v1186 = vld [vmem:[%s4 + $0x3d0] sm:$0xff]
    %v1187 = vld [vmem:[%s4 + $0x3d8] sm:$0xff]
    %v1188 = vld [vmem:[%s4 + $0x3e0] sm:$0xff]
    %v1189 = vld [vmem:[%s4 + $0x3e8] sm:$0xff]
    %v1190 = vld [vmem:[%s4 + $0x3f0] sm:$0xff]
    %v1191 = vld [vmem:[%s4 + $0x3f8] sm:$0xff]
    %1192 = vmatpush.msra.mxu0 %v1190
    %1193 = vmatpush.msra.mxu0 %v1188
    %1194 = vmatpush.msra.mxu0 %v1186
    %1195 = vmatpush.msra.mxu0 %v1184
    %1196 = vmatpush.msra.mxu0 %v1182
    %1197 = vmatpush.msra.mxu0 %v1180
    %1198 = vmatpush.msra.mxu0 %v1178
    %1199 = vmatpush.msra.mxu0 %v1176
    %1200 = vmatpush.msra.mxu0 %v1174
    %1201 = vmatpush.msra.mxu0 %v1172
    %1202 = vmatpush.msra.mxu0 %v1170
    %1203 = vmatpush.msra.mxu0 %v1168
    %1204 = vmatpush.msra.mxu0 %v1166
    %1205 = vmatpush.msra.mxu0 %v1164
    %1206 = vmatpush.msra.mxu0 %v1162
    %1207 = vmatpush.msra.mxu0 %v1160
    %1208 = vmatmul.f32.gmra.mxu0 %v1159
    %v1209 = vpop.f32.mrf.mxu0
    %v1210 = vadd.f32 0.0, %v1209
    %1211 = vdwg.mxu0
    %1212 = vmatpush.msra.mxu0 %v1191
    %1213 = vmatpush.msra.mxu0 %v1189
    %1214 = vmatpush.msra.mxu0 %v1187
    %1215 = vmatpush.msra.mxu0 %v1185
    %1216 = vmatpush.msra.mxu0 %v1183
    %1217 = vmatpush.msra.mxu0 %v1181
    %1218 = vmatpush.msra.mxu0 %v1179
    %1219 = vmatpush.msra.mxu0 %v1177
    %1220 = vmatpush.msra.mxu0 %v1175
    %1221 = vmatpush.msra.mxu0 %v1173
    %1222 = vmatpush.msra.mxu0 %v1171
    %1223 = vmatpush.msra.mxu0 %v1169
    %1224 = vmatpush.msra.mxu0 %v1167
    %1225 = vmatpush.msra.mxu0 %v1165
    %1226 = vmatpush.msra.mxu0 %v1163
    %1227 = vmatpush.msra.mxu0 %v1161
    %1228 = vmatmul.f32.gmra.mxu0 %v1159
    %v1229 = vpop.f32.mrf.mxu0
    %v1230 = vadd.f32 0.0, %v1229
    %1231 = vdwg.mxu0
    %v1232 = vadd.f32 %v965, %v1210
    %v1233 = vadd.f32 %v966, %v1230
    %v1234 = vmax.f32 %v1232, 0.0
    %v1235 = vmax.f32 %v1233, 0.0
    %v1236 = vld [vmem:[%s6] sm:$0xff]
    %v1237 = vld [vmem:[%s6 + $0x8] sm:$0xff]
    %v1238 = vld [vmem:[%s6 + $0x10] sm:$0xff]
    %v1239 = vld [vmem:[%s6 + $0x18] sm:$0xff]
    %v1240 = vld [vmem:[%s6 + $0x20] sm:$0xff]
    %v1241 = vld [vmem:[%s6 + $0x28] sm:$0xff]
    %v1242 = vld [vmem:[%s6 + $0x30] sm:$0xff]
    %v1243 = vld [vmem:[%s6 + $0x38] sm:$0xff]
    %v1244 = vld [vmem:[%s6 + $0x40] sm:$0xff]
    %v1245 = vld [vmem:[%s6 + $0x48] sm:$0xff]
    %v1246 = vld [vmem:[%s6 + $0x50] sm:$0xff]
    %v1247 = vld [vmem:[%s6 + $0x58] sm:$0xff]
    %v1248 = vld [vmem:[%s6 + $0x60] sm:$0xff]
    %v1249 = vld [vmem:[%s6 + $0x68] sm:$0xff]
    %v1250 = vld [vmem:[%s6 + $0x70] sm:$0xff]
    %v1251 = vld [vmem:[%s6 + $0x78] sm:$0xff]
    %v1252 = vld [vmem:[%s6 + $0x80] sm:$0xff]
    %v1253 = vld [vmem:[%s6 + $0x88] sm:$0xff]
    %v1254 = vld [vmem:[%s6 + $0x90] sm:$0xff]
    %v1255 = vld [vmem:[%s6 + $0x98] sm:$0xff]
    %v1256 = vld [vmem:[%s6 + $0xa0] sm:$0xff]
    %v1257 = vld [vmem:[%s6 + $0xa8] sm:$0xff]
    %v1258 = vld [vmem:[%s6 + $0xb0] sm:$0xff]
    %v1259 = vld [vmem:[%s6 + $0xb8] sm:$0xff]
    %v1260 = vld [vmem:[%s6 + $0xc0] sm:$0xff]
    %v1261 = vld [vmem:[%s6 + $0xc8] sm:$0xff]
    %v1262 = vld [vmem:[%s6 + $0xd0] sm:$0xff]
    %v1263 = vld [vmem:[%s6 + $0xd8] sm:$0xff]
    %v1264 = vld [vmem:[%s6 + $0xe0] sm:$0xff]
    %v1265 = vld [vmem:[%s6 + $0xe8] sm:$0xff]
    %v1266 = vld [vmem:[%s6 + $0xf0] sm:$0xff]
    %v1267 = vld [vmem:[%s6 + $0xf8] sm:$0xff]
    %v1268 = vld [vmem:[%s7] sm:$0x1]
    %v1270 = vperm.slane %v1268, 0
    %1272 = vmatpush.msra.mxu0 %v1251
    %1273 = vmatpush.msra.mxu0 %v1250
    %1274 = vmatpush.msra.mxu0 %v1249
    %1275 = vmatpush.msra.mxu0 %v1248
    %1276 = vmatpush.msra.mxu0 %v1247
    %1277 = vmatpush.msra.mxu0 %v1246
    %1278 = vmatpush.msra.mxu0 %v1245
    %1279 = vmatpush.msra.mxu0 %v1244
    %1280 = vmatpush.msra.mxu0 %v1243
    %1281 = vmatpush.msra.mxu0 %v1242
    %1282 = vmatpush.msra.mxu0 %v1241
    %1283 = vmatpush.msra.mxu0 %v1240
    %1284 = vmatpush.msra.mxu0 %v1239
    %1285 = vmatpush.msra.mxu0 %v1238
    %1286 = vmatpush.msra.mxu0 %v1237
    %1287 = vmatpush.msra.mxu0 %v1236
    %1288 = vmatmul.f32.gmra.mxu0 %v1234
    %v1289 = vpop.f32.mrf.mxu0
    %v1290 = vadd.f32 %v1270, %v1289
    %1291 = vdwg.mxu0
    %1292 = vmatpush.msra.mxu0 %v1267
    %1293 = vmatpush.msra.mxu0 %v1266
    %1294 = vmatpush.msra.mxu0 %v1265
    %1295 = vmatpush.msra.mxu0 %v1264
    %1296 = vmatpush.msra.mxu0 %v1263
    %1297 = vmatpush.msra.mxu0 %v1262
    %1298 = vmatpush.msra.mxu0 %v1261
    %1299 = vmatpush.msra.mxu0 %v1260
    %1300 = vmatpush.msra.mxu0 %v1259
    %1301 = vmatpush.msra.mxu0 %v1258
    %1302 = vmatpush.msra.mxu0 %v1257
    %1303 = vmatpush.msra.mxu0 %v1256
    %1304 = vmatpush.msra.mxu0 %v1255
    %1305 = vmatpush.msra.mxu0 %v1254
    %1306 = vmatpush.msra.mxu0 %v1253
    %1307 = vmatpush.msra.mxu0 %v1252
    %1308 = vmatmul.f32.gmra.mxu0 %v1235
    %v1309 = vpop.f32.mrf.mxu0
    %v1310 = vadd.f32 %v1290, %v1309
    %1311 = vdwg.mxu0
    %v1312 = vld [vmem:[%s8] sm:$0xff]
    %v1313 = vld [vmem:[%s8 + $0x8] sm:$0xff]
    %v1314 = vld [vmem:[%s8 + $0x10] sm:$0xff]
    %v1315 = vld [vmem:[%s8 + $0x18] sm:$0xff]
    %v1316 = vld [vmem:[%s8 + $0x20] sm:$0xff]
    %v1317 = vld [vmem:[%s8 + $0x28] sm:$0xff]
    %v1318 = vld [vmem:[%s8 + $0x30] sm:$0xff]
    %v1319 = vld [vmem:[%s8 + $0x38] sm:$0xff]
    %v1320 = vld [vmem:[%s8 + $0x40] sm:$0xff]
    %v1321 = vld [vmem:[%s8 + $0x48] sm:$0xff]
    %v1322 = vld [vmem:[%s8 + $0x50] sm:$0xff]
    %v1323 = vld [vmem:[%s8 + $0x58] sm:$0xff]
    %v1324 = vld [vmem:[%s8 + $0x60] sm:$0xff]
    %v1325 = vld [vmem:[%s8 + $0x68] sm:$0xff]
    %v1326 = vld [vmem:[%s8 + $0x70] sm:$0xff]
    %v1327 = vld [vmem:[%s8 + $0x78] sm:$0xff]
    %v1328 = vld [vmem:[%s8 + $0x80] sm:$0xff]
    %v1329 = vld [vmem:[%s8 + $0x88] sm:$0xff]
    %v1330 = vld [vmem:[%s8 + $0x90] sm:$0xff]
    %v1331 = vld [vmem:[%s8 + $0x98] sm:$0xff]
    %v1332 = vld [vmem:[%s8 + $0xa0] sm:$0xff]
    %v1333 = vld [vmem:[%s8 + $0xa8] sm:$0xff]
    %v1334 = vld [vmem:[%s8 + $0xb0] sm:$0xff]
    %v1335 = vld [vmem:[%s8 + $0xb8] sm:$0xff]
    %v1336 = vld [vmem:[%s8 + $0xc0] sm:$0xff]
    %v1337 = vld [vmem:[%s8 + $0xc8] sm:$0xff]
    %v1338 = vld [vmem:[%s8 + $0xd0] sm:$0xff]
    %v1339 = vld [vmem:[%s8 + $0xd8] sm:$0xff]
    %v1340 = vld [vmem:[%s8 + $0xe0] sm:$0xff]
    %v1341 = vld [vmem:[%s8 + $0xe8] sm:$0xff]
    %v1342 = vld [vmem:[%s8 + $0xf0] sm:$0xff]
    %v1343 = vld [vmem:[%s8 + $0xf8] sm:$0xff]
    %v1344 = vld [vmem:[%s9] sm:$0x1]
    %v1346 = vperm.slane %v1344, 0
    %1348 = vmatpush.msra.mxu0 %v1327
    %1349 = vmatpush.msra.mxu0 %v1326
    %1350 = vmatpush.msra.mxu0 %v1325
    %1351 = vmatpush.msra.mxu0 %v1324
    %1352 = vmatpush.msra.mxu0 %v1323
    %1353 = vmatpush.msra.mxu0 %v1322
    %1354 = vmatpush.msra.mxu0 %v1321
    %1355 = vmatpush.msra.mxu0 %v1320
    %1356 = vmatpush.msra.mxu0 %v1319
    %1357 = vmatpush.msra.mxu0 %v1318
    %1358 = vmatpush.msra.mxu0 %v1317
    %1359 = vmatpush.msra.mxu0 %v1316
    %1360 = vmatpush.msra.mxu0 %v1315
    %1361 = vmatpush.msra.mxu0 %v1314
    %1362 = vmatpush.msra.mxu0 %v1313
    %1363 = vmatpush.msra.mxu0 %v1312
    %1364 = vmatmul.f32.gmra.mxu0 %v1234
    %v1365 = vpop.f32.mrf.mxu0
    %v1366 = vadd.f32 %v1346, %v1365
    %1367 = vdwg.mxu0
    %1368 = vmatpush.msra.mxu0 %v1343
    %1369 = vmatpush.msra.mxu0 %v1342
    %1370 = vmatpush.msra.mxu0 %v1341
    %1371 = vmatpush.msra.mxu0 %v1340
    %1372 = vmatpush.msra.mxu0 %v1339
    %1373 = vmatpush.msra.mxu0 %v1338
    %1374 = vmatpush.msra.mxu0 %v1337
    %1375 = vmatpush.msra.mxu0 %v1336
    %1376 = vmatpush.msra.mxu0 %v1335
    %1377 = vmatpush.msra.mxu0 %v1334
    %1378 = vmatpush.msra.mxu0 %v1333
    %1379 = vmatpush.msra.mxu0 %v1332
    %1380 = vmatpush.msra.mxu0 %v1331
    %1381 = vmatpush.msra.mxu0 %v1330
    %1382 = vmatpush.msra.mxu0 %v1329
    %1383 = vmatpush.msra.mxu0 %v1328
    %1384 = vmatmul.f32.gmra.mxu0 %v1235
    %v1385 = vpop.f32.mrf.mxu0
    %v1386 = vadd.f32 %v1366, %v1385
    %1387 = vdwg.mxu0
    %v1388 = vld [vmem:[%s1] sm:$0x3]
    %v1389 = vmul.f32 %v1386, 0.5
    %v1390 = vmul.f32 %v1389, 1.442695
    %v1391 = vpow.pop %v1390
    %v1392 = vmul.f32 %v1388, %v1391
    %v1393 = vadd.f32 %v1310, %v1392
    %v1394 = vld [vmem:[%s10] sm:$0xff]
    %v1395 = vld [vmem:[%s10 + $0x8] sm:$0xff]
    %v1396 = vld [vmem:[%s10 + $0x10] sm:$0xff]
    %v1397 = vld [vmem:[%s10 + $0x18] sm:$0xff]
    %v1398 = vld [vmem:[%s10 + $0x20] sm:$0xff]
    %v1399 = vld [vmem:[%s10 + $0x28] sm:$0xff]
    %v1400 = vld [vmem:[%s10 + $0x30] sm:$0xff]
    %v1401 = vld [vmem:[%s10 + $0x38] sm:$0xff]
    %v1402 = vld [vmem:[%s11] sm:$0x3]
    %v1404 = vperm.slane %v1402, 0
    %v1405 = vperm.slane %v1402, 1
    %vm1408 = vcmask 261120
    %v1410 = vsel %vm1408, %v1393, 0
    %1412 = vmatpush.msra.mxu0 0.0
    %1413 = vmatpush.msra.mxu0 0.0
    %1414 = vmatpush.msra.mxu0 0.0
    %1415 = vmatpush.msra.mxu0 0.0
    %1416 = vmatpush.msra.mxu0 0.0
    %1417 = vmatpush.msra.mxu0 0.0
    %1418 = vmatpush.msra.mxu0 0.0
    %1419 = vmatpush.msra.mxu0 0.0
    %1420 = vmatpush.msra.mxu0 0.0
    %1421 = vmatpush.msra.mxu0 0.0
    %1422 = vmatpush.msra.mxu0 0.0
    %1423 = vmatpush.msra.mxu0 0.0
    %1424 = vmatpush.msra.mxu0 %v1400
    %1425 = vmatpush.msra.mxu0 %v1398
    %1426 = vmatpush.msra.mxu0 %v1396
    %1427 = vmatpush.msra.mxu0 %v1394
    %1428 = vmatmul.f32.gmra.mxu0 %v1410
    %v1429 = vpop.f32.mrf.mxu0
    %v1430 = vadd.f32 %v1404, %v1429
    %1431 = vdwg.mxu0
    %1432 = vmatpush.msra.mxu0 0.0
    %1433 = vmatpush.msra.mxu0 0.0
    %1434 = vmatpush.msra.mxu0 0.0
    %1435 = vmatpush.msra.mxu0 0.0
    %1436 = vmatpush.msra.mxu0 0.0
    %1437 = vmatpush.msra.mxu0 0.0
    %1438 = vmatpush.msra.mxu0 0.0
    %1439 = vmatpush.msra.mxu0 0.0
    %1440 = vmatpush.msra.mxu0 0.0
    %1441 = vmatpush.msra.mxu0 0.0
    %1442 = vmatpush.msra.mxu0 0.0
    %1443 = vmatpush.msra.mxu0 0.0
    %1444 = vmatpush.msra.mxu0 %v1401
    %1445 = vmatpush.msra.mxu0 %v1399
    %1446 = vmatpush.msra.mxu0 %v1397
    %1447 = vmatpush.msra.mxu0 %v1395
    %1448 = vmatmul.f32.gmra.mxu0 %v1410
    %v1449 = vpop.f32.mrf.mxu0
    %v1450 = vadd.f32 %v1405, %v1449
    %1451 = vdwg.mxu0
    %v1452 = vmax.f32 %v1430, 0.0
    %v1453 = vmax.f32 %v1450, 0.0
    %v1454 = vld [vmem:[%s12] sm:$0xff]
    %v1455 = vld [vmem:[%s12 + $0x8] sm:$0xff]
    %v1456 = vld [vmem:[%s12 + $0x10] sm:$0xff]
    %v1457 = vld [vmem:[%s12 + $0x18] sm:$0xff]
    %v1458 = vld [vmem:[%s12 + $0x20] sm:$0xff]
    %v1459 = vld [vmem:[%s12 + $0x28] sm:$0xff]
    %v1460 = vld [vmem:[%s12 + $0x30] sm:$0xff]
    %v1461 = vld [vmem:[%s12 + $0x38] sm:$0xff]
    %v1462 = vld [vmem:[%s12 + $0x40] sm:$0xff]
    %v1463 = vld [vmem:[%s12 + $0x48] sm:$0xff]
    %v1464 = vld [vmem:[%s12 + $0x50] sm:$0xff]
    %v1465 = vld [vmem:[%s12 + $0x58] sm:$0xff]
    %v1466 = vld [vmem:[%s12 + $0x60] sm:$0xff]
    %v1467 = vld [vmem:[%s12 + $0x68] sm:$0xff]
    %v1468 = vld [vmem:[%s12 + $0x70] sm:$0xff]
    %v1469 = vld [vmem:[%s12 + $0x78] sm:$0xff]
    %v1470 = vld [vmem:[%s12 + $0x80] sm:$0xff]
    %v1471 = vld [vmem:[%s12 + $0x88] sm:$0xff]
    %v1472 = vld [vmem:[%s12 + $0x90] sm:$0xff]
    %v1473 = vld [vmem:[%s12 + $0x98] sm:$0xff]
    %v1474 = vld [vmem:[%s12 + $0xa0] sm:$0xff]
    %v1475 = vld [vmem:[%s12 + $0xa8] sm:$0xff]
    %v1476 = vld [vmem:[%s12 + $0xb0] sm:$0xff]
    %v1477 = vld [vmem:[%s12 + $0xb8] sm:$0xff]
    %v1478 = vld [vmem:[%s12 + $0xc0] sm:$0xff]
    %v1479 = vld [vmem:[%s12 + $0xc8] sm:$0xff]
    %v1480 = vld [vmem:[%s12 + $0xd0] sm:$0xff]
    %v1481 = vld [vmem:[%s12 + $0xd8] sm:$0xff]
    %v1482 = vld [vmem:[%s12 + $0xe0] sm:$0xff]
    %v1483 = vld [vmem:[%s12 + $0xe8] sm:$0xff]
    %v1484 = vld [vmem:[%s12 + $0xf0] sm:$0xff]
    %v1485 = vld [vmem:[%s12 + $0xf8] sm:$0xff]
    %v1486 = vld [vmem:[%s12 + $0x100] sm:$0xff]
    %v1487 = vld [vmem:[%s12 + $0x108] sm:$0xff]
    %v1488 = vld [vmem:[%s12 + $0x110] sm:$0xff]
    %v1489 = vld [vmem:[%s12 + $0x118] sm:$0xff]
    %v1490 = vld [vmem:[%s12 + $0x120] sm:$0xff]
    %v1491 = vld [vmem:[%s12 + $0x128] sm:$0xff]
    %v1492 = vld [vmem:[%s12 + $0x130] sm:$0xff]
    %v1493 = vld [vmem:[%s12 + $0x138] sm:$0xff]
    %v1494 = vld [vmem:[%s12 + $0x140] sm:$0xff]
    %v1495 = vld [vmem:[%s12 + $0x148] sm:$0xff]
    %v1496 = vld [vmem:[%s12 + $0x150] sm:$0xff]
    %v1497 = vld [vmem:[%s12 + $0x158] sm:$0xff]
    %v1498 = vld [vmem:[%s12 + $0x160] sm:$0xff]
    %v1499 = vld [vmem:[%s12 + $0x168] sm:$0xff]
    %v1500 = vld [vmem:[%s12 + $0x170] sm:$0xff]
    %v1501 = vld [vmem:[%s12 + $0x178] sm:$0xff]
    %v1502 = vld [vmem:[%s12 + $0x180] sm:$0xff]
    %v1503 = vld [vmem:[%s12 + $0x188] sm:$0xff]
    %v1504 = vld [vmem:[%s12 + $0x190] sm:$0xff]
    %v1505 = vld [vmem:[%s12 + $0x198] sm:$0xff]
    %v1506 = vld [vmem:[%s12 + $0x1a0] sm:$0xff]
    %v1507 = vld [vmem:[%s12 + $0x1a8] sm:$0xff]
    %v1508 = vld [vmem:[%s12 + $0x1b0] sm:$0xff]
    %v1509 = vld [vmem:[%s12 + $0x1b8] sm:$0xff]
    %v1510 = vld [vmem:[%s12 + $0x1c0] sm:$0xff]
    %v1511 = vld [vmem:[%s12 + $0x1c8] sm:$0xff]
    %v1512 = vld [vmem:[%s12 + $0x1d0] sm:$0xff]
    %v1513 = vld [vmem:[%s12 + $0x1d8] sm:$0xff]
    %v1514 = vld [vmem:[%s12 + $0x1e0] sm:$0xff]
    %v1515 = vld [vmem:[%s12 + $0x1e8] sm:$0xff]
    %v1516 = vld [vmem:[%s12 + $0x1f0] sm:$0xff]
    %v1517 = vld [vmem:[%s12 + $0x1f8] sm:$0xff]
    %v1518 = vld [vmem:[%s12 + $0x200] sm:$0xff]
    %v1519 = vld [vmem:[%s12 + $0x208] sm:$0xff]
    %v1520 = vld [vmem:[%s12 + $0x210] sm:$0xff]
    %v1521 = vld [vmem:[%s12 + $0x218] sm:$0xff]
    %v1522 = vld [vmem:[%s12 + $0x220] sm:$0xff]
    %v1523 = vld [vmem:[%s12 + $0x228] sm:$0xff]
    %v1524 = vld [vmem:[%s12 + $0x230] sm:$0xff]
    %v1525 = vld [vmem:[%s12 + $0x238] sm:$0xff]
    %v1526 = vld [vmem:[%s12 + $0x240] sm:$0xff]
    %v1527 = vld [vmem:[%s12 + $0x248] sm:$0xff]
    %v1528 = vld [vmem:[%s12 + $0x250] sm:$0xff]
    %v1529 = vld [vmem:[%s12 + $0x258] sm:$0xff]
    %v1530 = vld [vmem:[%s12 + $0x260] sm:$0xff]
    %v1531 = vld [vmem:[%s12 + $0x268] sm:$0xff]
    %v1532 = vld [vmem:[%s12 + $0x270] sm:$0xff]
    %v1533 = vld [vmem:[%s12 + $0x278] sm:$0xff]
    %v1534 = vld [vmem:[%s12 + $0x280] sm:$0xff]
    %v1535 = vld [vmem:[%s12 + $0x288] sm:$0xff]
    %v1536 = vld [vmem:[%s12 + $0x290] sm:$0xff]
    %v1537 = vld [vmem:[%s12 + $0x298] sm:$0xff]
    %v1538 = vld [vmem:[%s12 + $0x2a0] sm:$0xff]
    %v1539 = vld [vmem:[%s12 + $0x2a8] sm:$0xff]
    %v1540 = vld [vmem:[%s12 + $0x2b0] sm:$0xff]
    %v1541 = vld [vmem:[%s12 + $0x2b8] sm:$0xff]
    %v1542 = vld [vmem:[%s12 + $0x2c0] sm:$0xff]
    %v1543 = vld [vmem:[%s12 + $0x2c8] sm:$0xff]
    %v1544 = vld [vmem:[%s12 + $0x2d0] sm:$0xff]
    %v1545 = vld [vmem:[%s12 + $0x2d8] sm:$0xff]
    %v1546 = vld [vmem:[%s12 + $0x2e0] sm:$0xff]
    %v1547 = vld [vmem:[%s12 + $0x2e8] sm:$0xff]
    %v1548 = vld [vmem:[%s12 + $0x2f0] sm:$0xff]
    %v1549 = vld [vmem:[%s12 + $0x2f8] sm:$0xff]
    %v1550 = vld [vmem:[%s12 + $0x300] sm:$0xff]
    %v1551 = vld [vmem:[%s12 + $0x308] sm:$0xff]
    %v1552 = vld [vmem:[%s12 + $0x310] sm:$0xff]
    %v1553 = vld [vmem:[%s12 + $0x318] sm:$0xff]
    %v1554 = vld [vmem:[%s12 + $0x320] sm:$0xff]
    %v1555 = vld [vmem:[%s12 + $0x328] sm:$0xff]
    %v1556 = vld [vmem:[%s12 + $0x330] sm:$0xff]
    %v1557 = vld [vmem:[%s12 + $0x338] sm:$0xff]
    %v1558 = vld [vmem:[%s12 + $0x340] sm:$0xff]
    %v1559 = vld [vmem:[%s12 + $0x348] sm:$0xff]
    %v1560 = vld [vmem:[%s12 + $0x350] sm:$0xff]
    %v1561 = vld [vmem:[%s12 + $0x358] sm:$0xff]
    %v1562 = vld [vmem:[%s12 + $0x360] sm:$0xff]
    %v1563 = vld [vmem:[%s12 + $0x368] sm:$0xff]
    %v1564 = vld [vmem:[%s12 + $0x370] sm:$0xff]
    %v1565 = vld [vmem:[%s12 + $0x378] sm:$0xff]
    %v1566 = vld [vmem:[%s12 + $0x380] sm:$0xff]
    %v1567 = vld [vmem:[%s12 + $0x388] sm:$0xff]
    %v1568 = vld [vmem:[%s12 + $0x390] sm:$0xff]
    %v1569 = vld [vmem:[%s12 + $0x398] sm:$0xff]
    %v1570 = vld [vmem:[%s12 + $0x3a0] sm:$0xff]
    %v1571 = vld [vmem:[%s12 + $0x3a8] sm:$0xff]
    %v1572 = vld [vmem:[%s12 + $0x3b0] sm:$0xff]
    %v1573 = vld [vmem:[%s12 + $0x3b8] sm:$0xff]
    %v1574 = vld [vmem:[%s12 + $0x3c0] sm:$0xff]
    %v1575 = vld [vmem:[%s12 + $0x3c8] sm:$0xff]
    %v1576 = vld [vmem:[%s12 + $0x3d0] sm:$0xff]
    %v1577 = vld [vmem:[%s12 + $0x3d8] sm:$0xff]
    %v1578 = vld [vmem:[%s12 + $0x3e0] sm:$0xff]
    %v1579 = vld [vmem:[%s12 + $0x3e8] sm:$0xff]
    %v1580 = vld [vmem:[%s12 + $0x3f0] sm:$0xff]
    %v1581 = vld [vmem:[%s12 + $0x3f8] sm:$0xff]
    %v1582 = vld [vmem:[%s13] sm:$0xf]
    %v1584 = vperm.slane %v1582, 0
    %v1585 = vperm.slane %v1582, 1
    %v1586 = vperm.slane %v1582, 2
    %v1587 = vperm.slane %v1582, 3
    %1592 = vmatpush.msra.mxu0 %v1514
    %1593 = vmatpush.msra.mxu0 %v1510
    %1594 = vmatpush.msra.mxu0 %v1506
    %1595 = vmatpush.msra.mxu0 %v1502
    %1596 = vmatpush.msra.mxu0 %v1498
    %1597 = vmatpush.msra.mxu0 %v1494
    %1598 = vmatpush.msra.mxu0 %v1490
    %1599 = vmatpush.msra.mxu0 %v1486
    %1600 = vmatpush.msra.mxu0 %v1482
    %1601 = vmatpush.msra.mxu0 %v1478
    %1602 = vmatpush.msra.mxu0 %v1474
    %1603 = vmatpush.msra.mxu0 %v1470
    %1604 = vmatpush.msra.mxu0 %v1466
    %1605 = vmatpush.msra.mxu0 %v1462
    %1606 = vmatpush.msra.mxu0 %v1458
    %1607 = vmatpush.msra.mxu0 %v1454
    %1608 = vmatmul.f32.gmra.mxu0 %v1452
    %v1609 = vpop.f32.mrf.mxu0
    %v1610 = vadd.f32 %v1584, %v1609
    %1611 = vdwg.mxu0
    %1612 = vmatpush.msra.mxu0 %v1578
    %1613 = vmatpush.msra.mxu0 %v1574
    %1614 = vmatpush.msra.mxu0 %v1570
    %1615 = vmatpush.msra.mxu0 %v1566
    %1616 = vmatpush.msra.mxu0 %v1562
    %1617 = vmatpush.msra.mxu0 %v1558
    %1618 = vmatpush.msra.mxu0 %v1554
    %1619 = vmatpush.msra.mxu0 %v1550
    %1620 = vmatpush.msra.mxu0 %v1546
    %1621 = vmatpush.msra.mxu0 %v1542
    %1622 = vmatpush.msra.mxu0 %v1538
    %1623 = vmatpush.msra.mxu0 %v1534
    %1624 = vmatpush.msra.mxu0 %v1530
    %1625 = vmatpush.msra.mxu0 %v1526
    %1626 = vmatpush.msra.mxu0 %v1522
    %1627 = vmatpush.msra.mxu0 %v1518
    %1628 = vmatmul.f32.gmra.mxu0 %v1453
    %v1629 = vpop.f32.mrf.mxu0
    %v1630 = vadd.f32 %v1610, %v1629
    %1631 = vdwg.mxu0
    %1632 = vmatpush.msra.mxu0 %v1515
    %1633 = vmatpush.msra.mxu0 %v1511
    %1634 = vmatpush.msra.mxu0 %v1507
    %1635 = vmatpush.msra.mxu0 %v1503
    %1636 = vmatpush.msra.mxu0 %v1499
    %1637 = vmatpush.msra.mxu0 %v1495
    %1638 = vmatpush.msra.mxu0 %v1491
    %1639 = vmatpush.msra.mxu0 %v1487
    %1640 = vmatpush.msra.mxu0 %v1483
    %1641 = vmatpush.msra.mxu0 %v1479
    %1642 = vmatpush.msra.mxu0 %v1475
    %1643 = vmatpush.msra.mxu0 %v1471
    %1644 = vmatpush.msra.mxu0 %v1467
    %1645 = vmatpush.msra.mxu0 %v1463
    %1646 = vmatpush.msra.mxu0 %v1459
    %1647 = vmatpush.msra.mxu0 %v1455
    %1648 = vmatmul.f32.gmra.mxu0 %v1452
    %v1649 = vpop.f32.mrf.mxu0
    %v1650 = vadd.f32 %v1585, %v1649
    %1651 = vdwg.mxu0
    %1652 = vmatpush.msra.mxu0 %v1579
    %1653 = vmatpush.msra.mxu0 %v1575
    %1654 = vmatpush.msra.mxu0 %v1571
    %1655 = vmatpush.msra.mxu0 %v1567
    %1656 = vmatpush.msra.mxu0 %v1563
    %1657 = vmatpush.msra.mxu0 %v1559
    %1658 = vmatpush.msra.mxu0 %v1555
    %1659 = vmatpush.msra.mxu0 %v1551
    %1660 = vmatpush.msra.mxu0 %v1547
    %1661 = vmatpush.msra.mxu0 %v1543
    %1662 = vmatpush.msra.mxu0 %v1539
    %1663 = vmatpush.msra.mxu0 %v1535
    %1664 = vmatpush.msra.mxu0 %v1531
    %1665 = vmatpush.msra.mxu0 %v1527
    %1666 = vmatpush.msra.mxu0 %v1523
    %1667 = vmatpush.msra.mxu0 %v1519
    %1668 = vmatmul.f32.gmra.mxu0 %v1453
    %v1669 = vpop.f32.mrf.mxu0
    %v1670 = vadd.f32 %v1650, %v1669
    %1671 = vdwg.mxu0
    %1672 = vmatpush.msra.mxu0 %v1516
    %1673 = vmatpush.msra.mxu0 %v1512
    %1674 = vmatpush.msra.mxu0 %v1508
    %1675 = vmatpush.msra.mxu0 %v1504
    %1676 = vmatpush.msra.mxu0 %v1500
    %1677 = vmatpush.msra.mxu0 %v1496
    %1678 = vmatpush.msra.mxu0 %v1492
    %1679 = vmatpush.msra.mxu0 %v1488
    %1680 = vmatpush.msra.mxu0 %v1484
    %1681 = vmatpush.msra.mxu0 %v1480
    %1682 = vmatpush.msra.mxu0 %v1476
    %1683 = vmatpush.msra.mxu0 %v1472
    %1684 = vmatpush.msra.mxu0 %v1468
    %1685 = vmatpush.msra.mxu0 %v1464
    %1686 = vmatpush.msra.mxu0 %v1460
    %1687 = vmatpush.msra.mxu0 %v1456
    %1688 = vmatmul.f32.gmra.mxu0 %v1452
    %v1689 = vpop.f32.mrf.mxu0
    %v1690 = vadd.f32 %v1586, %v1689
    %1691 = vdwg.mxu0
    %1692 = vmatpush.msra.mxu0 %v1580
    %1693 = vmatpush.msra.mxu0 %v1576
    %1694 = vmatpush.msra.mxu0 %v1572
    %1695 = vmatpush.msra.mxu0 %v1568
    %1696 = vmatpush.msra.mxu0 %v1564
    %1697 = vmatpush.msra.mxu0 %v1560
    %1698 = vmatpush.msra.mxu0 %v1556
    %1699 = vmatpush.msra.mxu0 %v1552
    %1700 = vmatpush.msra.mxu0 %v1548
    %1701 = vmatpush.msra.mxu0 %v1544
    %1702 = vmatpush.msra.mxu0 %v1540
    %1703 = vmatpush.msra.mxu0 %v1536
    %1704 = vmatpush.msra.mxu0 %v1532
    %1705 = vmatpush.msra.mxu0 %v1528
    %1706 = vmatpush.msra.mxu0 %v1524
    %1707 = vmatpush.msra.mxu0 %v1520
    %1708 = vmatmul.f32.gmra.mxu0 %v1453
    %v1709 = vpop.f32.mrf.mxu0
    %v1710 = vadd.f32 %v1690, %v1709
    %1711 = vdwg.mxu0
    %1712 = vmatpush.msra.mxu0 %v1517
    %1713 = vmatpush.msra.mxu0 %v1513
    %1714 = vmatpush.msra.mxu0 %v1509
    %1715 = vmatpush.msra.mxu0 %v1505
    %1716 = vmatpush.msra.mxu0 %v1501
    %1717 = vmatpush.msra.mxu0 %v1497
    %1718 = vmatpush.msra.mxu0 %v1493
    %1719 = vmatpush.msra.mxu0 %v1489
    %1720 = vmatpush.msra.mxu0 %v1485
    %1721 = vmatpush.msra.mxu0 %v1481
    %1722 = vmatpush.msra.mxu0 %v1477
    %1723 = vmatpush.msra.mxu0 %v1473
    %1724 = vmatpush.msra.mxu0 %v1469
    %1725 = vmatpush.msra.mxu0 %v1465
    %1726 = vmatpush.msra.mxu0 %v1461
    %1727 = vmatpush.msra.mxu0 %v1457
    %1728 = vmatmul.f32.gmra.mxu0 %v1452
    %v1729 = vpop.f32.mrf.mxu0
    %v1730 = vadd.f32 %v1587, %v1729
    %1731 = vdwg.mxu0
    %1732 = vmatpush.msra.mxu0 %v1581
    %1733 = vmatpush.msra.mxu0 %v1577
    %1734 = vmatpush.msra.mxu0 %v1573
    %1735 = vmatpush.msra.mxu0 %v1569
    %1736 = vmatpush.msra.mxu0 %v1565
    %1737 = vmatpush.msra.mxu0 %v1561
    %1738 = vmatpush.msra.mxu0 %v1557
    %1739 = vmatpush.msra.mxu0 %v1553
    %1740 = vmatpush.msra.mxu0 %v1549
    %1741 = vmatpush.msra.mxu0 %v1545
    %1742 = vmatpush.msra.mxu0 %v1541
    %1743 = vmatpush.msra.mxu0 %v1537
    %1744 = vmatpush.msra.mxu0 %v1533
    %1745 = vmatpush.msra.mxu0 %v1529
    %1746 = vmatpush.msra.mxu0 %v1525
    %1747 = vmatpush.msra.mxu0 %v1521
    %1748 = vmatmul.f32.gmra.mxu0 %v1453
    %v1749 = vpop.f32.mrf.mxu0
    %v1750 = vadd.f32 %v1730, %v1749
    %1751 = vdwg.mxu0
    %v1752 = vmax.f32 %v1630, 0.0
    %v1753 = vmax.f32 %v1670, 0.0
    %v1754 = vmax.f32 %v1710, 0.0
    %v1755 = vmax.f32 %v1750, 0.0
    %vm1756 = vcmask 254976
    %1757 = vst.msk [vmem:[#allocation2] sm:$0x3] %vm1756, %v1310
    %1758 = vst.msk [vmem:[#allocation4] sm:$0x3] %vm1756, %v1386
    %v1763 = vrot.slane %v1753, 6
    %v1764 = vrot.slane %v1754, 4
    %v1765 = vrot.slane %v1755, 2
    %vm1766 = vcmask 1041408
    %v1767 = vsel %vm1766, %v1752, %v1763
    %vm1768 = vcmask 1045508
    %v1769 = vsel %vm1768, %v1764, %v1765
    %vm1770 = vcmask 1043456
    %v1771 = vsel %vm1770, %v1767, %v1769
    %1773 = vst [vmem:[%s16] sm:$0xff] %v1771
    // Predicated region
    $region58: #{conv_vae_forward.8} parent=1 // pred_check
      _
    $region59: #{conv_vae_forward.8} parent=1 // pred_check_branch
      %1775 = sbr.rel (0) target = $region61
    $region60: #{conv_vae_forward.8} parent=1 // pred_region
      %1777 = vsyncadd [#allocation3], 0
      %s1779 = sshll.u32 [#allocation2], 4
      %s1780 = int_to_ptr.vmem [resolvable:$true] %s1779
      %s1781 = sshll.u32 %s14, 4
      %s1782 = int_to_ptr.hbm [resolvable:$true] %s1781
      %1784 = dma.vmem_to_hbm [thread:$0]  %s1780, 32, %s1782, [#allocation3]
    $region61: #{conv_vae_forward.8} parent=1 // pred_fallthru
      _
    // Predicated region
    $region62: #{conv_vae_forward.8} parent=1 // pred_check
      _
    $region63: #{conv_vae_forward.8} parent=1 // pred_check_branch
      %1786 = sbr.rel (0) target = $region65
    $region64: #{conv_vae_forward.8} parent=1 // pred_region
      %1788 = vsyncadd [#allocation5], 0
      %s1790 = sshll.u32 [#allocation4], 4
      %s1791 = int_to_ptr.vmem [resolvable:$true] %s1790
      %s1792 = sshll.u32 %s15, 4
      %s1793 = int_to_ptr.hbm [resolvable:$true] %s1792
      %1795 = dma.vmem_to_hbm [thread:$0]  %s1791, 32, %s1793, [#allocation5]
    $region65: #{conv_vae_forward.8} parent=1 // pred_fallthru
      _
    // Predicated region
    $region66: #{conv_vae_forward.8} parent=1 // pred_check
      _
    $region67: #{conv_vae_forward.8} parent=1 // pred_check_branch
      %1797 = sbr.rel (0) target = $region69
    $region68: #{conv_vae_forward.8} parent=1 // pred_region
      _
    $region69: #{conv_vae_forward.8} parent=1 // pred_fallthru
      _
    // Predicated region
    $region70: #{conv_vae_forward.8} parent=1 // pred_check
      _
    $region71: #{conv_vae_forward.8} parent=1 // pred_check_branch
      %1799 = sbr.rel (0) target = $region73
    $region72: #{conv_vae_forward.8} parent=1 // pred_region
      %1801 = dma.done [#allocation3], 32
    $region73: #{conv_vae_forward.8} parent=1 // pred_fallthru
      _
    // Predicated region
    $region74: #{conv_vae_forward.8} parent=1 // pred_check
      _
    $region75: #{conv_vae_forward.8} parent=1 // pred_check_branch
      %1803 = sbr.rel (0) target = $region77
    $region76: #{conv_vae_forward.8} parent=1 // pred_region
      %1805 = dma.done [#allocation5], 32
    $region77: #{conv_vae_forward.8} parent=1 // pred_fallthru
      _
    // Predicated region
    $region78: #{conv_vae_forward.8} parent=1 // pred_check
      _
    $region79: #{conv_vae_forward.8} parent=1 // pred_check_branch
      %1807 = sbr.rel (0) target = $region81
    $region80: #{conv_vae_forward.8} parent=1 // pred_region
      _
    $region81: #{conv_vae_forward.8} parent=1 // pred_fallthru
      _
    %1808 = vsyncpa [#allocation3], 1
    %1809 = vsyncpa [#allocation5], 1

// kernel: conv_vae_forward.10
$region0: #{conv_vae_forward.10}
  #allocation0 [shape = 'u32[]', space=smem, size = 0x4, offset = 0x4, fixed_abs, tag = 'smem constant byte address 0x4 - core index']
  #allocation1 [shape = 'u32[72,128]{1,0:T(1,128)}', space=vmem, size = 0x9000, scoped, tag = 'internal scratch']
  %s0 = inlined_call_operand.vmem [shape: f32[50,256], index: 0, kind: input, shape index: {}]
  %s1 = inlined_call_operand.vmem [shape: f32[256,128], index: 1, kind: input, shape index: {}]
  %s2 = inlined_call_operand.vmem [shape: f32[1,128], index: 2, kind: input, shape index: {}]
  %s3 = inlined_call_operand.vmem [shape: f32[50,128], index: 3, kind: output, shape index: {}]
  %s4 = sld [smem:[#allocation0]]
  $region22: #{conv_vae_forward.10} parent=0
    _
  %s6 = ssub.s32 1, %s4
  %s7 = scalar_select 0, %s6, %s4
  // Predicated region
  $region2: #{conv_vae_forward.10} parent=0 // pred_check
    _
  $region3: #{conv_vae_forward.10} parent=0 // pred_check_branch
    %9 = sbr.rel (0) target = $region5
  $region4: #{conv_vae_forward.10} parent=0 // pred_region
    _
  $region5: #{conv_vae_forward.10} parent=0 // pred_fallthru
    _
  // Predicated region
  $region6: #{conv_vae_forward.10} parent=0 // pred_check
    _
  $region7: #{conv_vae_forward.10} parent=0 // pred_check_branch
    %11 = sbr.rel (0) target = $region9
  $region8: #{conv_vae_forward.10} parent=0 // pred_region
    _
  $region9: #{conv_vae_forward.10} parent=0 // pred_fallthru
    _
  // Predicated region
  $region10: #{conv_vae_forward.10} parent=0 // pred_check
    _
  $region11: #{conv_vae_forward.10} parent=0 // pred_check_branch
    %13 = sbr.rel (0) target = $region13
  $region12: #{conv_vae_forward.10} parent=0 // pred_region
    _
  $region13: #{conv_vae_forward.10} parent=0 // pred_fallthru
    _
  %v14 = vld [vmem:[%s0] sm:$0xff]
  %v15 = vld [vmem:[%s0 + $0x8] sm:$0xff]
  %v16 = vld [vmem:[%s0 + $0x10] sm:$0xff]
  %v17 = vld [vmem:[%s0 + $0x18] sm:$0xff]
  %v18 = vld [vmem:[%s0 + $0x20] sm:$0xff]
  %v19 = vld [vmem:[%s0 + $0x28] sm:$0xff]
  %v20 = vld [vmem:[%s0 + $0x30] sm:$0xff]
  %v21 = vld [vmem:[%s0 + $0x38] sm:$0xff]
  %v22 = vld [vmem:[%s0 + $0x40] sm:$0xff]
  %v23 = vld [vmem:[%s0 + $0x48] sm:$0xff]
  %v24 = vld [vmem:[%s0 + $0x50] sm:$0xff]
  %v25 = vld [vmem:[%s0 + $0x58] sm:$0xff]
  %v26 = vld [vmem:[%s0 + $0x60] sm:$0x3]
  %v27 = vld [vmem:[%s0 + $0x68] sm:$0x3]
  %v28 = vld [vmem:[%s1] sm:$0xff]
  %v29 = vld [vmem:[%s1 + $0x8] sm:$0xff]
  %v30 = vld [vmem:[%s1 + $0x10] sm:$0xff]
  %v31 = vld [vmem:[%s1 + $0x18] sm:$0xff]
  %v32 = vld [vmem:[%s1 + $0x20] sm:$0xff]
  %v33 = vld [vmem:[%s1 + $0x28] sm:$0xff]
  %v34 = vld [vmem:[%s1 + $0x30] sm:$0xff]
  %v35 = vld [vmem:[%s1 + $0x38] sm:$0xff]
  %v36 = vld [vmem:[%s1 + $0x40] sm:$0xff]
  %v37 = vld [vmem:[%s1 + $0x48] sm:$0xff]
  %v38 = vld [vmem:[%s1 + $0x50] sm:$0xff]
  %v39 = vld [vmem:[%s1 + $0x58] sm:$0xff]
  %v40 = vld [vmem:[%s1 + $0x60] sm:$0xff]
  %v41 = vld [vmem:[%s1 + $0x68] sm:$0xff]
  %v42 = vld [vmem:[%s1 + $0x70] sm:$0xff]
  %v43 = vld [vmem:[%s1 + $0x78] sm:$0xff]
  %v44 = vld [vmem:[%s1 + $0x80] sm:$0xff]
  %v45 = vld [vmem:[%s1 + $0x88] sm:$0xff]
  %v46 = vld [vmem:[%s1 + $0x90] sm:$0xff]
  %v47 = vld [vmem:[%s1 + $0x98] sm:$0xff]
  %v48 = vld [vmem:[%s1 + $0xa0] sm:$0xff]
  %v49 = vld [vmem:[%s1 + $0xa8] sm:$0xff]
  %v50 = vld [vmem:[%s1 + $0xb0] sm:$0xff]
  %v51 = vld [vmem:[%s1 + $0xb8] sm:$0xff]
  %v52 = vld [vmem:[%s1 + $0xc0] sm:$0xff]
  %v53 = vld [vmem:[%s1 + $0xc8] sm:$0xff]
  %v54 = vld [vmem:[%s1 + $0xd0] sm:$0xff]
  %v55 = vld [vmem:[%s1 + $0xd8] sm:$0xff]
  %v56 = vld [vmem:[%s1 + $0xe0] sm:$0xff]
  %v57 = vld [vmem:[%s1 + $0xe8] sm:$0xff]
  %v58 = vld [vmem:[%s1 + $0xf0] sm:$0xff]
  %v59 = vld [vmem:[%s1 + $0xf8] sm:$0xff]
  %v60 = vld [vmem:[%s2] sm:$0x1]
  %v62 = vperm.slane %v60, 0
  %64 = vmatpush.msra.mxu0 %v43
  %65 = vmatpush.msra.mxu0 %v42
  %66 = vmatpush.msra.mxu0 %v41
  %67 = vmatpush.msra.mxu0 %v40
  %68 = vmatpush.msra.mxu0 %v39
  %69 = vmatpush.msra.mxu0 %v38
  %70 = vmatpush.msra.mxu0 %v37
  %71 = vmatpush.msra.mxu0 %v36
  %72 = vmatpush.msra.mxu0 %v35
  %73 = vmatpush.msra.mxu0 %v34
  %74 = vmatpush.msra.mxu0 %v33
  %75 = vmatpush.msra.mxu0 %v32
  %76 = vmatpush.msra.mxu0 %v31
  %77 = vmatpush.msra.mxu0 %v30
  %78 = vmatpush.msra.mxu0 %v29
  %79 = vmatpush.msra.mxu0 %v28
  %80 = vmatmul.f32.gmra.mxu0 %v14
  %v81 = vpop.f32.mrf.mxu0
  %v82 = vadd.f32 %v62, %v81
  %83 = vmatmul.f32.gmra.mxu0 %v16
  %v84 = vpop.f32.mrf.mxu0
  %v85 = vadd.f32 %v62, %v84
  %86 = vmatmul.f32.gmra.mxu0 %v18
  %v87 = vpop.f32.mrf.mxu0
  %v88 = vadd.f32 %v62, %v87
  %89 = vmatmul.f32.gmra.mxu0 %v20
  %v90 = vpop.f32.mrf.mxu0
  %v91 = vadd.f32 %v62, %v90
  %92 = vmatmul.f32.gmra.mxu0 %v22
  %v93 = vpop.f32.mrf.mxu0
  %v94 = vadd.f32 %v62, %v93
  %95 = vmatmul.f32.gmra.mxu0 %v24
  %v96 = vpop.f32.mrf.mxu0
  %v97 = vadd.f32 %v62, %v96
  %98 = vmatmul.f32.gmra.mxu0 %v26
  %v99 = vpop.f32.mrf.mxu0
  %v100 = vadd.f32 %v62, %v99
  %101 = vdwg.mxu0
  %102 = vmatpush.msra.mxu0 %v59
  %103 = vmatpush.msra.mxu0 %v58
  %104 = vmatpush.msra.mxu0 %v57
  %105 = vmatpush.msra.mxu0 %v56
  %106 = vmatpush.msra.mxu0 %v55
  %107 = vmatpush.msra.mxu0 %v54
  %108 = vmatpush.msra.mxu0 %v53
  %109 = vmatpush.msra.mxu0 %v52
  %110 = vmatpush.msra.mxu0 %v51
  %111 = vmatpush.msra.mxu0 %v50
  %112 = vmatpush.msra.mxu0 %v49
  %113 = vmatpush.msra.mxu0 %v48
  %114 = vmatpush.msra.mxu0 %v47
  %115 = vmatpush.msra.mxu0 %v46
  %116 = vmatpush.msra.mxu0 %v45
  %117 = vmatpush.msra.mxu0 %v44
  %118 = vmatmul.f32.gmra.mxu0 %v15
  %v119 = vpop.f32.mrf.mxu0
  %v120 = vadd.f32 %v82, %v119
  %121 = vmatmul.f32.gmra.mxu0 %v17
  %v122 = vpop.f32.mrf.mxu0
  %v123 = vadd.f32 %v85, %v122
  %124 = vmatmul.f32.gmra.mxu0 %v19
  %v125 = vpop.f32.mrf.mxu0
  %v126 = vadd.f32 %v88, %v125
  %127 = vmatmul.f32.gmra.mxu0 %v21
  %v128 = vpop.f32.mrf.mxu0
  %v129 = vadd.f32 %v91, %v128
  %130 = vmatmul.f32.gmra.mxu0 %v23
  %v131 = vpop.f32.mrf.mxu0
  %v132 = vadd.f32 %v94, %v131
  %133 = vmatmul.f32.gmra.mxu0 %v25
  %v134 = vpop.f32.mrf.mxu0
  %v135 = vadd.f32 %v97, %v134
  %136 = vmatmul.f32.gmra.mxu0 %v27
  %v137 = vpop.f32.mrf.mxu0
  %v138 = vadd.f32 %v100, %v137
  %139 = vdwg.mxu0
  %v140 = vmax.f32 %v120, 0.0
  %v141 = vmax.f32 %v123, 0.0
  %v142 = vmax.f32 %v126, 0.0
  %v143 = vmax.f32 %v129, 0.0
  %v144 = vmax.f32 %v132, 0.0
  %v145 = vmax.f32 %v135, 0.0
  %v146 = vmax.f32 %v138, 0.0
  %147 = vst [vmem:[%s3] sm:$0xff] %v140
  %148 = vst [vmem:[%s3 + $0x8] sm:$0xff] %v141
  %149 = vst [vmem:[%s3 + $0x10] sm:$0xff] %v142
  %150 = vst [vmem:[%s3 + $0x18] sm:$0xff] %v143
  %151 = vst [vmem:[%s3 + $0x20] sm:$0xff] %v144
  %152 = vst [vmem:[%s3 + $0x28] sm:$0xff] %v145
  %153 = vst [vmem:[%s3 + $0x30] sm:$0x3] %v146
  // Predicated region
  $region14: #{conv_vae_forward.10} parent=0 // pred_check
    _
  $region15: #{conv_vae_forward.10} parent=0 // pred_check_branch
    %155 = sbr.rel (0) target = $region17
  $region16: #{conv_vae_forward.10} parent=0 // pred_region
    _
  $region17: #{conv_vae_forward.10} parent=0 // pred_fallthru
    _
  // Predicated region
  $region18: #{conv_vae_forward.10} parent=0 // pred_check
    _
  $region19: #{conv_vae_forward.10} parent=0 // pred_check_branch
    %157 = sbr.rel (0) target = $region21
  $region20: #{conv_vae_forward.10} parent=0 // pred_region
    _
  $region21: #{conv_vae_forward.10} parent=0 // pred_fallthru
    _

// kernel: conv_vae_forward.11
$region0: #{conv_vae_forward.11}
  #allocation0 [shape = 'u32[]', space=smem, size = 0x4, offset = 0x4, fixed_abs, tag = 'smem constant byte address 0x4 - core index']
  #allocation1 [shape = 'u32[72,128]{1,0:T(1,128)}', space=vmem, size = 0x9000, scoped, tag = 'internal scratch']
  %s0 = inlined_call_operand.vmem [shape: f32[162,128], index: 0, kind: input, shape index: {}]
  %s1 = inlined_call_operand.vmem [shape: f32[128,16], index: 1, kind: input, shape index: {}]
  %s2 = inlined_call_operand.vmem [shape: f32[1,16], index: 2, kind: input, shape index: {}]
  %s3 = inlined_call_operand.vmem [shape: f32[162,16], index: 3, kind: output, shape index: {}]
  %s4 = sld [smem:[#allocation0]]
  $region22: #{conv_vae_forward.11} parent=0
    _
  %s6 = ssub.s32 1, %s4
  %s7 = scalar_select 0, %s6, %s4
  // Predicated region
  $region2: #{conv_vae_forward.11} parent=0 // pred_check
    _
  $region3: #{conv_vae_forward.11} parent=0 // pred_check_branch
    %9 = sbr.rel (0) target = $region5
  $region4: #{conv_vae_forward.11} parent=0 // pred_region
    _
  $region5: #{conv_vae_forward.11} parent=0 // pred_fallthru
    _
  // Predicated region
  $region6: #{conv_vae_forward.11} parent=0 // pred_check
    _
  $region7: #{conv_vae_forward.11} parent=0 // pred_check_branch
    %11 = sbr.rel (0) target = $region9
  $region8: #{conv_vae_forward.11} parent=0 // pred_region
    _
  $region9: #{conv_vae_forward.11} parent=0 // pred_fallthru
    _
  // Predicated region
  $region10: #{conv_vae_forward.11} parent=0 // pred_check
    _
  $region11: #{conv_vae_forward.11} parent=0 // pred_check_branch
    %13 = sbr.rel (0) target = $region13
  $region12: #{conv_vae_forward.11} parent=0 // pred_region
    _
  $region13: #{conv_vae_forward.11} parent=0 // pred_fallthru
    _
  %v14 = vld [vmem:[%s0] sm:$0xff]
  %v15 = vld [vmem:[%s0 + $0x8] sm:$0xff]
  %v16 = vld [vmem:[%s0 + $0x10] sm:$0xff]
  %v17 = vld [vmem:[%s0 + $0x18] sm:$0xff]
  %v18 = vld [vmem:[%s0 + $0x20] sm:$0xff]
  %v19 = vld [vmem:[%s0 + $0x28] sm:$0xff]
  %v20 = vld [vmem:[%s0 + $0x30] sm:$0xff]
  %v21 = vld [vmem:[%s0 + $0x38] sm:$0xff]
  %v22 = vld [vmem:[%s0 + $0x40] sm:$0xff]
  %v23 = vld [vmem:[%s0 + $0x48] sm:$0xff]
  %v24 = vld [vmem:[%s0 + $0x50] sm:$0xff]
  %v25 = vld [vmem:[%s0 + $0x58] sm:$0xff]
  %v26 = vld [vmem:[%s0 + $0x60] sm:$0xff]
  %v27 = vld [vmem:[%s0 + $0x68] sm:$0xff]
  %v28 = vld [vmem:[%s0 + $0x70] sm:$0xff]
  %v29 = vld [vmem:[%s0 + $0x78] sm:$0xff]
  %v30 = vld [vmem:[%s0 + $0x80] sm:$0xff]
  %v31 = vld [vmem:[%s0 + $0x88] sm:$0xff]
  %v32 = vld [vmem:[%s0 + $0x90] sm:$0xff]
  %v33 = vld [vmem:[%s0 + $0x98] sm:$0xff]
  %v34 = vld [vmem:[%s0 + $0xa0] sm:$0x3]
  %v35 = vld [vmem:[%s1] sm:$0xff]
  %v36 = vld [vmem:[%s1 + $0x8] sm:$0xff]
  %v37 = vld [vmem:[%s1 + $0x10] sm:$0xff]
  %v38 = vld [vmem:[%s1 + $0x18] sm:$0xff]
  %v39 = vld [vmem:[%s1 + $0x20] sm:$0xff]
  %v40 = vld [vmem:[%s1 + $0x28] sm:$0xff]
  %v41 = vld [vmem:[%s1 + $0x30] sm:$0xff]
  %v42 = vld [vmem:[%s1 + $0x38] sm:$0xff]
  %v43 = vld [vmem:[%s1 + $0x40] sm:$0xff]
  %v44 = vld [vmem:[%s1 + $0x48] sm:$0xff]
  %v45 = vld [vmem:[%s1 + $0x50] sm:$0xff]
  %v46 = vld [vmem:[%s1 + $0x58] sm:$0xff]
  %v47 = vld [vmem:[%s1 + $0x60] sm:$0xff]
  %v48 = vld [vmem:[%s1 + $0x68] sm:$0xff]
  %v49 = vld [vmem:[%s1 + $0x70] sm:$0xff]
  %v50 = vld [vmem:[%s1 + $0x78] sm:$0xff]
  %v51 = vld [vmem:[%s2] sm:$0x1]
  %v53 = vperm.slane %v51, 0
  %55 = vmatpush.msra.mxu0 %v50
  %56 = vmatpush.msra.mxu0 %v49
  %57 = vmatpush.msra.mxu0 %v48
  %58 = vmatpush.msra.mxu0 %v47
  %59 = vmatpush.msra.mxu0 %v46
  %60 = vmatpush.msra.mxu0 %v45
  %61 = vmatpush.msra.mxu0 %v44
  %62 = vmatpush.msra.mxu0 %v43
  %63 = vmatpush.msra.mxu0 %v42
  %64 = vmatpush.msra.mxu0 %v41
  %65 = vmatpush.msra.mxu0 %v40
  %66 = vmatpush.msra.mxu0 %v39
  %67 = vmatpush.msra.mxu0 %v38
  %68 = vmatpush.msra.mxu0 %v37
  %69 = vmatpush.msra.mxu0 %v36
  %70 = vmatpush.msra.mxu0 %v35
  %71 = vmatmul.f32.gmra.mxu0 %v14
  %v72 = vpop.f32.mrf.mxu0
  %v73 = vadd.f32 %v53, %v72
  %74 = vmatmul.f32.gmra.mxu0 %v15
  %v75 = vpop.f32.mrf.mxu0
  %v76 = vadd.f32 %v53, %v75
  %77 = vmatmul.f32.gmra.mxu0 %v16
  %v78 = vpop.f32.mrf.mxu0
  %v79 = vadd.f32 %v53, %v78
  %80 = vmatmul.f32.gmra.mxu0 %v17
  %v81 = vpop.f32.mrf.mxu0
  %v82 = vadd.f32 %v53, %v81
  %83 = vmatmul.f32.gmra.mxu0 %v18
  %v84 = vpop.f32.mrf.mxu0
  %v85 = vadd.f32 %v53, %v84
  %86 = vmatmul.f32.gmra.mxu0 %v19
  %v87 = vpop.f32.mrf.mxu0
  %v88 = vadd.f32 %v53, %v87
  %89 = vmatmul.f32.gmra.mxu0 %v20
  %v90 = vpop.f32.mrf.mxu0
  %v91 = vadd.f32 %v53, %v90
  %92 = vmatmul.f32.gmra.mxu0 %v21
  %v93 = vpop.f32.mrf.mxu0
  %v94 = vadd.f32 %v53, %v93
  %95 = vmatmul.f32.gmra.mxu0 %v22
  %v96 = vpop.f32.mrf.mxu0
  %v97 = vadd.f32 %v53, %v96
  %98 = vmatmul.f32.gmra.mxu0 %v23
  %v99 = vpop.f32.mrf.mxu0
  %v100 = vadd.f32 %v53, %v99
  %101 = vmatmul.f32.gmra.mxu0 %v24
  %v102 = vpop.f32.mrf.mxu0
  %v103 = vadd.f32 %v53, %v102
  %104 = vmatmul.f32.gmra.mxu0 %v25
  %v105 = vpop.f32.mrf.mxu0
  %v106 = vadd.f32 %v53, %v105
  %107 = vmatmul.f32.gmra.mxu0 %v26
  %v108 = vpop.f32.mrf.mxu0
  %v109 = vadd.f32 %v53, %v108
  %110 = vmatmul.f32.gmra.mxu0 %v27
  %v111 = vpop.f32.mrf.mxu0
  %v112 = vadd.f32 %v53, %v111
  %113 = vmatmul.f32.gmra.mxu0 %v28
  %v114 = vpop.f32.mrf.mxu0
  %v115 = vadd.f32 %v53, %v114
  %116 = vmatmul.f32.gmra.mxu0 %v29
  %v117 = vpop.f32.mrf.mxu0
  %v118 = vadd.f32 %v53, %v117
  %119 = vmatmul.f32.gmra.mxu0 %v30
  %v120 = vpop.f32.mrf.mxu0
  %v121 = vadd.f32 %v53, %v120
  %122 = vmatmul.f32.gmra.mxu0 %v31
  %v123 = vpop.f32.mrf.mxu0
  %v124 = vadd.f32 %v53, %v123
  %125 = vmatmul.f32.gmra.mxu0 %v32
  %v126 = vpop.f32.mrf.mxu0
  %v127 = vadd.f32 %v53, %v126
  %128 = vmatmul.f32.gmra.mxu0 %v33
  %v129 = vpop.f32.mrf.mxu0
  %v130 = vadd.f32 %v53, %v129
  %131 = vmatmul.f32.gmra.mxu0 %v34
  %v132 = vpop.f32.mrf.mxu0
  %v133 = vadd.f32 %v53, %v132
  %134 = vdwg.mxu0
  %v135 = vxor.u32 %v73, 2147483648
  %v136 = vxor.u32 %v76, 2147483648
  %v137 = vxor.u32 %v79, 2147483648
  %v138 = vxor.u32 %v82, 2147483648
  %v139 = vxor.u32 %v85, 2147483648
  %v140 = vxor.u32 %v88, 2147483648
  %v141 = vxor.u32 %v91, 2147483648
  %v142 = vxor.u32 %v94, 2147483648
  %v143 = vxor.u32 %v97, 2147483648
  %v144 = vxor.u32 %v100, 2147483648
  %v145 = vxor.u32 %v103, 2147483648
  %v146 = vxor.u32 %v106, 2147483648
  %v147 = vxor.u32 %v109, 2147483648
  %v148 = vxor.u32 %v112, 2147483648
  %v149 = vxor.u32 %v115, 2147483648
  %v150 = vxor.u32 %v118, 2147483648
  %v151 = vxor.u32 %v121, 2147483648
  %v152 = vxor.u32 %v124, 2147483648
  %v153 = vxor.u32 %v127, 2147483648
  %v154 = vxor.u32 %v130, 2147483648
  %v155 = vxor.u32 %v133, 2147483648
  %v156 = vmul.f32 %v135, 1.442695
  %v157 = vpow.pop %v156
  %v158 = vmul.f32 %v136, 1.442695
  %v159 = vpow.pop %v158
  %v160 = vmul.f32 %v137, 1.442695
  %v161 = vpow.pop %v160
  %v162 = vmul.f32 %v138, 1.442695
  %v163 = vpow.pop %v162
  %v164 = vmul.f32 %v139, 1.442695
  %v165 = vpow.pop %v164
  %v166 = vmul.f32 %v140, 1.442695
  %v167 = vpow.pop %v166
  %v168 = vmul.f32 %v141, 1.442695
  %v169 = vpow.pop %v168
  %v170 = vmul.f32 %v142, 1.442695
  %v171 = vpow.pop %v170
  %v172 = vmul.f32 %v143, 1.442695
  %v173 = vpow.pop %v172
  %v174 = vmul.f32 %v144, 1.442695
  %v175 = vpow.pop %v174
  %v176 = vmul.f32 %v145, 1.442695
  %v177 = vpow.pop %v176
  %v178 = vmul.f32 %v146, 1.442695
  %v179 = vpow.pop %v178
  %v180 = vmul.f32 %v147, 1.442695
  %v181 = vpow.pop %v180
  %v182 = vmul.f32 %v148, 1.442695
  %v183 = vpow.pop %v182
  %v184 = vmul.f32 %v149, 1.442695
  %v185 = vpow.pop %v184
  %v186 = vmul.f32 %v150, 1.442695
  %v187 = vpow.pop %v186
  %v188 = vmul.f32 %v151, 1.442695
  %v189 = vpow.pop %v188
  %v190 = vmul.f32 %v152, 1.442695
  %v191 = vpow.pop %v190
  %v192 = vmul.f32 %v153, 1.442695
  %v193 = vpow.pop %v192
  %v194 = vmul.f32 %v154, 1.442695
  %v195 = vpow.pop %v194
  %v196 = vmul.f32 %v155, 1.442695
  %v197 = vpow.pop %v196
  %v198 = vadd.f32 %v157, 1.0
  %v199 = vadd.f32 %v159, 1.0
  %v200 = vadd.f32 %v161, 1.0
  %v201 = vadd.f32 %v163, 1.0
  %v202 = vadd.f32 %v165, 1.0
  %v203 = vadd.f32 %v167, 1.0
  %v204 = vadd.f32 %v169, 1.0
  %v205 = vadd.f32 %v171, 1.0
  %v206 = vadd.f32 %v173, 1.0
  %v207 = vadd.f32 %v175, 1.0
  %v208 = vadd.f32 %v177, 1.0
  %v209 = vadd.f32 %v179, 1.0
  %v210 = vadd.f32 %v181, 1.0
  %v211 = vadd.f32 %v183, 1.0
  %v212 = vadd.f32 %v185, 1.0
  %v213 = vadd.f32 %v187, 1.0
  %v214 = vadd.f32 %v189, 1.0
  %v215 = vadd.f32 %v191, 1.0
  %v216 = vadd.f32 %v193, 1.0
  %v217 = vadd.f32 %v195, 1.0
  %v218 = vadd.f32 %v197, 1.0
  %v219 = vrcp.pop %v198
  %v220 = vmul.f32 %v198, %v219
  %v221 = vsub.f32 1.0, %v220
  %v222 = vmul.f32 %v219, %v221
  %v223 = vadd.f32 %v219, %v222
  %vm224 = vweird.f32 %v198
  %vm225 = vweird.f32 %v219
  %vm226 = vmor %vm224, %vm225
  %v227 = vsel %vm226, %v219, %v223
  %v228 = vand.u32 2147483647, %v198
  %vm229 = vcmp.eq.f32.partialorder %v228, 8.507059e+37
  %v230 = vand.u32 %v198, 2147483648
  %v231 = vor.u32 1.1754944e-38, %v230
  %v232 = vsel %vm229, %v231, %v227
  %v233 = vmul.f32 1.0, %v232
  %v234 = vrcp.pop %v199
  %v235 = vmul.f32 %v199, %v234
  %v236 = vsub.f32 1.0, %v235
  %v237 = vmul.f32 %v234, %v236
  %v238 = vadd.f32 %v234, %v237
  %vm239 = vweird.f32 %v199
  %vm240 = vweird.f32 %v234
  %vm241 = vmor %vm239, %vm240
  %v242 = vsel %vm241, %v234, %v238
  %v243 = vand.u32 2147483647, %v199
  %vm244 = vcmp.eq.f32.partialorder %v243, 8.507059e+37
  %v245 = vand.u32 %v199, 2147483648
  %v246 = vor.u32 1.1754944e-38, %v245
  %v247 = vsel %vm244, %v246, %v242
  %v248 = vmul.f32 1.0, %v247
  %v249 = vrcp.pop %v200
  %v250 = vmul.f32 %v200, %v249
  %v251 = vsub.f32 1.0, %v250
  %v252 = vmul.f32 %v249, %v251
  %v253 = vadd.f32 %v249, %v252
  %vm254 = vweird.f32 %v200
  %vm255 = vweird.f32 %v249
  %vm256 = vmor %vm254, %vm255
  %v257 = vsel %vm256, %v249, %v253
  %v258 = vand.u32 2147483647, %v200
  %vm259 = vcmp.eq.f32.partialorder %v258, 8.507059e+37
  %v260 = vand.u32 %v200, 2147483648
  %v261 = vor.u32 1.1754944e-38, %v260
  %v262 = vsel %vm259, %v261, %v257
  %v263 = vmul.f32 1.0, %v262
  %v264 = vrcp.pop %v201
  %v265 = vmul.f32 %v201, %v264
  %v266 = vsub.f32 1.0, %v265
  %v267 = vmul.f32 %v264, %v266
  %v268 = vadd.f32 %v264, %v267
  %vm269 = vweird.f32 %v201
  %vm270 = vweird.f32 %v264
  %vm271 = vmor %vm269, %vm270
  %v272 = vsel %vm271, %v264, %v268
  %v273 = vand.u32 2147483647, %v201
  %vm274 = vcmp.eq.f32.partialorder %v273, 8.507059e+37
  %v275 = vand.u32 %v201, 2147483648
  %v276 = vor.u32 1.1754944e-38, %v275
  %v277 = vsel %vm274, %v276, %v272
  %v278 = vmul.f32 1.0, %v277
  %v279 = vrcp.pop %v202
  %v280 = vmul.f32 %v202, %v279
  %v281 = vsub.f32 1.0, %v280
  %v282 = vmul.f32 %v279, %v281
  %v283 = vadd.f32 %v279, %v282
  %vm284 = vweird.f32 %v202
  %vm285 = vweird.f32 %v279
  %vm286 = vmor %vm284, %vm285
  %v287 = vsel %vm286, %v279, %v283
  %v288 = vand.u32 2147483647, %v202
  %vm289 = vcmp.eq.f32.partialorder %v288, 8.507059e+37
  %v290 = vand.u32 %v202, 2147483648
  %v291 = vor.u32 1.1754944e-38, %v290
  %v292 = vsel %vm289, %v291, %v287
  %v293 = vmul.f32 1.0, %v292
  %v294 = vrcp.pop %v203
  %v295 = vmul.f32 %v203, %v294
  %v296 = vsub.f32 1.0, %v295
  %v297 = vmul.f32 %v294, %v296
  %v298 = vadd.f32 %v294, %v297
  %vm299 = vweird.f32 %v203
  %vm300 = vweird.f32 %v294
  %vm301 = vmor %vm299, %vm300
  %v302 = vsel %vm301, %v294, %v298
  %v303 = vand.u32 2147483647, %v203
  %vm304 = vcmp.eq.f32.partialorder %v303, 8.507059e+37
  %v305 = vand.u32 %v203, 2147483648
  %v306 = vor.u32 1.1754944e-38, %v305
  %v307 = vsel %vm304, %v306, %v302
  %v308 = vmul.f32 1.0, %v307
  %v309 = vrcp.pop %v204
  %v310 = vmul.f32 %v204, %v309
  %v311 = vsub.f32 1.0, %v310
  %v312 = vmul.f32 %v309, %v311
  %v313 = vadd.f32 %v309, %v312
  %vm314 = vweird.f32 %v204
  %vm315 = vweird.f32 %v309
  %vm316 = vmor %vm314, %vm315
  %v317 = vsel %vm316, %v309, %v313
  %v318 = vand.u32 2147483647, %v204
  %vm319 = vcmp.eq.f32.partialorder %v318, 8.507059e+37
  %v320 = vand.u32 %v204, 2147483648
  %v321 = vor.u32 1.1754944e-38, %v320
  %v322 = vsel %vm319, %v321, %v317
  %v323 = vmul.f32 1.0, %v322
  %v324 = vrcp.pop %v205
  %v325 = vmul.f32 %v205, %v324
  %v326 = vsub.f32 1.0, %v325
  %v327 = vmul.f32 %v324, %v326
  %v328 = vadd.f32 %v324, %v327
  %vm329 = vweird.f32 %v205
  %vm330 = vweird.f32 %v324
  %vm331 = vmor %vm329, %vm330
  %v332 = vsel %vm331, %v324, %v328
  %v333 = vand.u32 2147483647, %v205
  %vm334 = vcmp.eq.f32.partialorder %v333, 8.507059e+37
  %v335 = vand.u32 %v205, 2147483648
  %v336 = vor.u32 1.1754944e-38, %v335
  %v337 = vsel %vm334, %v336, %v332
  %v338 = vmul.f32 1.0, %v337
  %v339 = vrcp.pop %v206
  %v340 = vmul.f32 %v206, %v339
  %v341 = vsub.f32 1.0, %v340
  %v342 = vmul.f32 %v339, %v341
  %v343 = vadd.f32 %v339, %v342
  %vm344 = vweird.f32 %v206
  %vm345 = vweird.f32 %v339
  %vm346 = vmor %vm344, %vm345
  %v347 = vsel %vm346, %v339, %v343
  %v348 = vand.u32 2147483647, %v206
  %vm349 = vcmp.eq.f32.partialorder %v348, 8.507059e+37
  %v350 = vand.u32 %v206, 2147483648
  %v351 = vor.u32 1.1754944e-38, %v350
  %v352 = vsel %vm349, %v351, %v347
  %v353 = vmul.f32 1.0, %v352
  %v354 = vrcp.pop %v207
  %v355 = vmul.f32 %v207, %v354
  %v356 = vsub.f32 1.0, %v355
  %v357 = vmul.f32 %v354, %v356
  %v358 = vadd.f32 %v354, %v357
  %vm359 = vweird.f32 %v207
  %vm360 = vweird.f32 %v354
  %vm361 = vmor %vm359, %vm360
  %v362 = vsel %vm361, %v354, %v358
  %v363 = vand.u32 2147483647, %v207
  %vm364 = vcmp.eq.f32.partialorder %v363, 8.507059e+37
  %v365 = vand.u32 %v207, 2147483648
  %v366 = vor.u32 1.1754944e-38, %v365
  %v367 = vsel %vm364, %v366, %v362
  %v368 = vmul.f32 1.0, %v367
  %v369 = vrcp.pop %v208
  %v370 = vmul.f32 %v208, %v369
  %v371 = vsub.f32 1.0, %v370
  %v372 = vmul.f32 %v369, %v371
  %v373 = vadd.f32 %v369, %v372
  %vm374 = vweird.f32 %v208
  %vm375 = vweird.f32 %v369
  %vm376 = vmor %vm374, %vm375
  %v377 = vsel %vm376, %v369, %v373
  %v378 = vand.u32 2147483647, %v208
  %vm379 = vcmp.eq.f32.partialorder %v378, 8.507059e+37
  %v380 = vand.u32 %v208, 2147483648
  %v381 = vor.u32 1.1754944e-38, %v380
  %v382 = vsel %vm379, %v381, %v377
  %v383 = vmul.f32 1.0, %v382
  %v384 = vrcp.pop %v209
  %v385 = vmul.f32 %v209, %v384
  %v386 = vsub.f32 1.0, %v385
  %v387 = vmul.f32 %v384, %v386
  %v388 = vadd.f32 %v384, %v387
  %vm389 = vweird.f32 %v209
  %vm390 = vweird.f32 %v384
  %vm391 = vmor %vm389, %vm390
  %v392 = vsel %vm391, %v384, %v388
  %v393 = vand.u32 2147483647, %v209
  %vm394 = vcmp.eq.f32.partialorder %v393, 8.507059e+37
  %v395 = vand.u32 %v209, 2147483648
  %v396 = vor.u32 1.1754944e-38, %v395
  %v397 = vsel %vm394, %v396, %v392
  %v398 = vmul.f32 1.0, %v397
  %v399 = vrcp.pop %v210
  %v400 = vmul.f32 %v210, %v399
  %v401 = vsub.f32 1.0, %v400
  %v402 = vmul.f32 %v399, %v401
  %v403 = vadd.f32 %v399, %v402
  %vm404 = vweird.f32 %v210
  %vm405 = vweird.f32 %v399
  %vm406 = vmor %vm404, %vm405
  %v407 = vsel %vm406, %v399, %v403
  %v408 = vand.u32 2147483647, %v210
  %vm409 = vcmp.eq.f32.partialorder %v408, 8.507059e+37
  %v410 = vand.u32 %v210, 2147483648
  %v411 = vor.u32 1.1754944e-38, %v410
  %v412 = vsel %vm409, %v411, %v407
  %v413 = vmul.f32 1.0, %v412
  %v414 = vrcp.pop %v211
  %v415 = vmul.f32 %v211, %v414
  %v416 = vsub.f32 1.0, %v415
  %v417 = vmul.f32 %v414, %v416
  %v418 = vadd.f32 %v414, %v417
  %vm419 = vweird.f32 %v211
  %vm420 = vweird.f32 %v414
  %vm421 = vmor %vm419, %vm420
  %v422 = vsel %vm421, %v414, %v418
  %v423 = vand.u32 2147483647, %v211
  %vm424 = vcmp.eq.f32.partialorder %v423, 8.507059e+37
  %v425 = vand.u32 %v211, 2147483648
  %v426 = vor.u32 1.1754944e-38, %v425
  %v427 = vsel %vm424, %v426, %v422
  %v428 = vmul.f32 1.0, %v427
  %v429 = vrcp.pop %v212
  %v430 = vmul.f32 %v212, %v429
  %v431 = vsub.f32 1.0, %v430
  %v432 = vmul.f32 %v429, %v431
  %v433 = vadd.f32 %v429, %v432
  %vm434 = vweird.f32 %v212
  %vm435 = vweird.f32 %v429
  %vm436 = vmor %vm434, %vm435
  %v437 = vsel %vm436, %v429, %v433
  %v438 = vand.u32 2147483647, %v212
  %vm439 = vcmp.eq.f32.partialorder %v438, 8.507059e+37
  %v440 = vand.u32 %v212, 2147483648
  %v441 = vor.u32 1.1754944e-38, %v440
  %v442 = vsel %vm439, %v441, %v437
  %v443 = vmul.f32 1.0, %v442
  %v444 = vrcp.pop %v213
  %v445 = vmul.f32 %v213, %v444
  %v446 = vsub.f32 1.0, %v445
  %v447 = vmul.f32 %v444, %v446
  %v448 = vadd.f32 %v444, %v447
  %vm449 = vweird.f32 %v213
  %vm450 = vweird.f32 %v444
  %vm451 = vmor %vm449, %vm450
  %v452 = vsel %vm451, %v444, %v448
  %v453 = vand.u32 2147483647, %v213
  %vm454 = vcmp.eq.f32.partialorder %v453, 8.507059e+37
  %v455 = vand.u32 %v213, 2147483648
  %v456 = vor.u32 1.1754944e-38, %v455
  %v457 = vsel %vm454, %v456, %v452
  %v458 = vmul.f32 1.0, %v457
  %v459 = vrcp.pop %v214
  %v460 = vmul.f32 %v214, %v459
  %v461 = vsub.f32 1.0, %v460
  %v462 = vmul.f32 %v459, %v461
  %v463 = vadd.f32 %v459, %v462
  %vm464 = vweird.f32 %v214
  %vm465 = vweird.f32 %v459
  %vm466 = vmor %vm464, %vm465
  %v467 = vsel %vm466, %v459, %v463
  %v468 = vand.u32 2147483647, %v214
  %vm469 = vcmp.eq.f32.partialorder %v468, 8.507059e+37
  %v470 = vand.u32 %v214, 2147483648
  %v471 = vor.u32 1.1754944e-38, %v470
  %v472 = vsel %vm469, %v471, %v467
  %v473 = vmul.f32 1.0, %v472
  %v474 = vrcp.pop %v215
  %v475 = vmul.f32 %v215, %v474
  %v476 = vsub.f32 1.0, %v475
  %v477 = vmul.f32 %v474, %v476
  %v478 = vadd.f32 %v474, %v477
  %vm479 = vweird.f32 %v215
  %vm480 = vweird.f32 %v474
  %vm481 = vmor %vm479, %vm480
  %v482 = vsel %vm481, %v474, %v478
  %v483 = vand.u32 2147483647, %v215
  %vm484 = vcmp.eq.f32.partialorder %v483, 8.507059e+37
  %v485 = vand.u32 %v215, 2147483648
  %v486 = vor.u32 1.1754944e-38, %v485
  %v487 = vsel %vm484, %v486, %v482
  %v488 = vmul.f32 1.0, %v487
  %v489 = vrcp.pop %v216
  %v490 = vmul.f32 %v216, %v489
  %v491 = vsub.f32 1.0, %v490
  %v492 = vmul.f32 %v489, %v491
  %v493 = vadd.f32 %v489, %v492
  %vm494 = vweird.f32 %v216
  %vm495 = vweird.f32 %v489
  %vm496 = vmor %vm494, %vm495
  %v497 = vsel %vm496, %v489, %v493
  %v498 = vand.u32 2147483647, %v216
  %vm499 = vcmp.eq.f32.partialorder %v498, 8.507059e+37
  %v500 = vand.u32 %v216, 2147483648
  %v501 = vor.u32 1.1754944e-38, %v500
  %v502 = vsel %vm499, %v501, %v497
  %v503 = vmul.f32 1.0, %v502
  %v504 = vrcp.pop %v217
  %v505 = vmul.f32 %v217, %v504
  %v506 = vsub.f32 1.0, %v505
  %v507 = vmul.f32 %v504, %v506
  %v508 = vadd.f32 %v504, %v507
  %vm509 = vweird.f32 %v217
  %vm510 = vweird.f32 %v504
  %vm511 = vmor %vm509, %vm510
  %v512 = vsel %vm511, %v504, %v508
  %v513 = vand.u32 2147483647, %v217
  %vm514 = vcmp.eq.f32.partialorder %v513, 8.507059e+37
  %v515 = vand.u32 %v217, 2147483648
  %v516 = vor.u32 1.1754944e-38, %v515
  %v517 = vsel %vm514, %v516, %v512
  %v518 = vmul.f32 1.0, %v517
  %v519 = vrcp.pop %v218
  %v520 = vmul.f32 %v218, %v519
  %v521 = vsub.f32 1.0, %v520
  %v522 = vmul.f32 %v519, %v521
  %v523 = vadd.f32 %v519, %v522
  %vm524 = vweird.f32 %v218
  %vm525 = vweird.f32 %v519
  %vm526 = vmor %vm524, %vm525
  %v527 = vsel %vm526, %v519, %v523
  %v528 = vand.u32 2147483647, %v218
  %vm529 = vcmp.eq.f32.partialorder %v528, 8.507059e+37
  %v530 = vand.u32 %v218, 2147483648
  %v531 = vor.u32 1.1754944e-38, %v530
  %v532 = vsel %vm529, %v531, %v527
  %v533 = vmul.f32 1.0, %v532
  %vm534 = vcmask 130048
  %535 = vst.msk [vmem:[%s3] sm:$0xff] %vm534, %v233
  %536 = vst.msk [vmem:[%s3 + $0x8] sm:$0xff] %vm534, %v248
  %537 = vst.msk [vmem:[%s3 + $0x10] sm:$0xff] %vm534, %v263
  %538 = vst.msk [vmem:[%s3 + $0x18] sm:$0xff] %vm534, %v278
  %539 = vst.msk [vmem:[%s3 + $0x20] sm:$0xff] %vm534, %v293
  %540 = vst.msk [vmem:[%s3 + $0x28] sm:$0xff] %vm534, %v308
  %541 = vst.msk [vmem:[%s3 + $0x30] sm:$0xff] %vm534, %v323
  %542 = vst.msk [vmem:[%s3 + $0x38] sm:$0xff] %vm534, %v338
  %543 = vst.msk [vmem:[%s3 + $0x40] sm:$0xff] %vm534, %v353
  %544 = vst.msk [vmem:[%s3 + $0x48] sm:$0xff] %vm534, %v368
  %545 = vst.msk [vmem:[%s3 + $0x50] sm:$0xff] %vm534, %v383
  %546 = vst.msk [vmem:[%s3 + $0x58] sm:$0xff] %vm534, %v398
  %547 = vst.msk [vmem:[%s3 + $0x60] sm:$0xff] %vm534, %v413
  %548 = vst.msk [vmem:[%s3 + $0x68] sm:$0xff] %vm534, %v428
  %549 = vst.msk [vmem:[%s3 + $0x70] sm:$0xff] %vm534, %v443
  %550 = vst.msk [vmem:[%s3 + $0x78] sm:$0xff] %vm534, %v458
  %551 = vst.msk [vmem:[%s3 + $0x80] sm:$0xff] %vm534, %v473
  %552 = vst.msk [vmem:[%s3 + $0x88] sm:$0xff] %vm534, %v488
  %553 = vst.msk [vmem:[%s3 + $0x90] sm:$0xff] %vm534, %v503
  %554 = vst.msk [vmem:[%s3 + $0x98] sm:$0xff] %vm534, %v518
  %vm555 = vcmask 123904
  %556 = vst.msk [vmem:[%s3 + $0xa0] sm:$0x3] %vm555, %v533
  // Predicated region
  $region14: #{conv_vae_forward.11} parent=0 // pred_check
    _
  $region15: #{conv_vae_forward.11} parent=0 // pred_check_branch
    %558 = sbr.rel (0) target = $region17
  $region16: #{conv_vae_forward.11} parent=0 // pred_region
    _
  $region17: #{conv_vae_forward.11} parent=0 // pred_fallthru
    _
  // Predicated region
  $region18: #{conv_vae_forward.11} parent=0 // pred_check
    _
  $region19: #{conv_vae_forward.11} parent=0 // pred_check_branch
    %560 = sbr.rel (0) target = $region21
  $region20: #{conv_vae_forward.11} parent=0 // pred_region
    _
  $region21: #{conv_vae_forward.11} parent=0 // pred_fallthru
    _

</llo_original>
